<compile_context>
chip_gen: v5e
topology: v5e:2x2
jax: 0.10.0
libtpu: 0.0.40
codegen_flags: <defaults>
</compile_context>

<pallas_src>
import functools

import jax
import jax.numpy as jnp
import numpy as np
from jax.experimental import pallas as pl
from jax.experimental.pallas import tpu as pltpu


def attention_kernel(x_ref, wq_ref, wkv_ref, wout_ref, bout_ref, o_ref, kv_ref,
                     *, heads, dim_head, use_bf16_exp):
    # x_ref:   (1, C, N)          bf16  channels-major tokens (full row of x)
    # wq_ref:  (hidden, C)        bf16  Q rows of to_qkv, softmax scale pre-folded
    # wkv_ref: (2*hidden, C)      bf16  K & V rows of to_qkv
    # wout_ref:(dim, hidden)      bf16  to_out weight
    # bout_ref:(dim, 1)           f32   to_out bias
    # o_ref:   (1, dim, TQ)       f32   channels-major output tile (lane-dense)
    # kv_ref:  (2, heads, d, N)   bf16  VMEM scratch; K/V persist across q tiles
    hidden = heads * dim_head
    n = x_ref.shape[-1]
    tq = o_ref.shape[-1]
    qi = pl.program_id(1)

    # ---- K/V projection, hoisted out of the query-tile axis: computed once per
    # batch row (qi == 0) and reused by every q tile (qi axis is "arbitrary").
    @pl.when(qi == 0)
    def _():
        x = x_ref[0]                                               # (C, N)
        kv = jnp.dot(wkv_ref[...], x,
                     preferred_element_type=jnp.float32)           # (2*hidden, N)
        kv_ref[...] = kv.astype(jnp.bfloat16).reshape(2, heads, dim_head, n)

    k = kv_ref[0]                                                  # (heads, d, N)
    v = kv_ref[1]                                                  # (heads, d, N)

    # ---- Q projection for this query tile: one canonical MXU matmul on the
    # channels-major tile (no wrapper-side transpose of x, no per-head loop),
    # then a small per-head XLU transpose to the token-major layout sim wants.
    q_start = pl.multiple_of(qi * tq, tq)
    xq = x_ref[0, :, pl.ds(q_start, tq)]                           # (C, TQ) bf16
    q_cm = jnp.dot(wq_ref[...], xq,
                   preferred_element_type=jnp.float32)             # (hidden, TQ) f32
    q_cm = q_cm.reshape(heads, dim_head, tq)
    q = jnp.transpose(q_cm, (0, 2, 1)).astype(jnp.bfloat16)        # (heads, TQ, d)

    # ---- Attention scores: one batched MXU matmul, f32 accumulation.
    sim = jnp.einsum('hid,hdj->hij', q, k,
                     preferred_element_type=jnp.float32)           # (heads, TQ, N)

    # ---- Softmax; statistics (max / sum) stay in f32.  On v6e/v7x the EUP has a
    # bf16 path, so the big exp runs in bf16 there; on v5e keep the f32 exp.
    sim = sim - jnp.max(sim, axis=-1, keepdims=True)
    if use_bf16_exp:
        p = jnp.exp(sim.astype(jnp.bfloat16))                      # bf16 exp
    else:
        p = jnp.exp(sim)                                           # f32 exp
    l = jnp.sum(p, axis=-1, dtype=jnp.float32)                     # (heads, TQ) f32
    p = p.astype(jnp.bfloat16)

    # ---- Deferred normalization: PV matmul on the unnormalized weights, then
    # scale the small (heads, d, TQ) result instead of the (heads, TQ, N) tensor.
    out = jnp.einsum('hdj,hij->hdi', v, p,
                     preferred_element_type=jnp.float32)           # (heads, d, TQ)
    inv_l = pl.reciprocal(l, approx=True)                          # (heads, TQ)
    out = out * inv_l[:, None, :]
    out = out.reshape(hidden, tq).astype(jnp.bfloat16)

    # ---- to_out 1x1 conv (+bias in f32); lane-dense (dim, TQ) store.
    o = jnp.dot(wout_ref[...], out, preferred_element_type=jnp.float32)
    o_ref[0] = o + bout_ref[...]


def _tpu_generation() -> int:
    try:
        kind = jax.devices()[0].device_kind.lower()
    except Exception:
        return 0
    for gen in (7, 6, 5, 4, 3, 2):
        if (f"v{gen}" in kind) or (f"tpu{gen}" in kind):
            return gen
    return 0


def _vmem_limit_bytes(C, N, heads, dim_head, TQ, dim, is_v7x):
    hidden = heads * dim_head
    est = 0
    est += 2 * (C * N * 2)                  # (1, C, N) input block, double-buffered
    est += 2 * hidden * N * 2               # K/V scratch (bf16)
    est += heads * TQ * N * (4 + 4 + 2)     # sim f32 + exp temp + p bf16
    est += 2 * (dim * TQ * 4)               # output block, double-buffered
    est += 4 * 1024 * 1024                  # weights, q / out temporaries, slack
    cap = (56 if is_v7x else 100) * 1024 * 1024
    return int(min(cap, max(32 * 1024 * 1024, int(est * 1.25))))


def attention_pallas(x_nchw, w_qkv, w_out, b_out, *, heads, dim_head):
    B, C, H, W = x_nchw.shape
    N = H * W
    hidden = heads * dim_head
    dim = C
    scale = float(dim_head) ** (-0.5)

    gen = _tpu_generation()
    is_v7x = gen >= 7
    use_bf16_exp = gen >= 6            # bf16 EUP path exists on v6e / v7x only

    # Query-tile size: lane-dense (multiple of 128).  TQ = 128 on v7x (64 MiB
    # VMEM part), 256 on v5e/v6e (128 MiB parts).
    tq_pref = 128 if is_v7x else 256
    if N % tq_pref == 0:
        TQ = tq_pref
    elif N % 128 == 0:
        TQ = 128
    else:
        TQ = N   # correct but masked (non-lane-dense) stores; perf cliff only
    num_q_tiles = N // TQ

    # Channels-major tokens: pure reshape of NCHW, no transpose, single HBM copy.
    x_cm = x_nchw.reshape(B, C, N).astype(jnp.bfloat16)

    # Conv weights (O, I, 1, 1) -> matmul weights; fold softmax scale into Q.
    w_qkv_mat = w_qkv.reshape(3 * hidden, C)
    wq = (w_qkv_mat[:hidden] * scale).astype(jnp.bfloat16)          # (hidden, C)
    wkv = w_qkv_mat[hidden:].astype(jnp.bfloat16)                   # (2*hidden, C)
    wout = w_out.reshape(dim, hidden).astype(jnp.bfloat16)          # (dim, hidden)
    bout = b_out.reshape(dim, 1).astype(jnp.float32)                # (dim, 1)

    kernel = functools.partial(attention_kernel, heads=heads, dim_head=dim_head,
                               use_bf16_exp=use_bf16_exp)

    out_cm = pl.pallas_call(
        kernel,
        out_shape=jax.ShapeDtypeStruct((B, dim, N), jnp.float32),
        grid_spec=pltpu.PrefetchScalarGridSpec(
            num_scalar_prefetch=0,
            grid=(B, num_q_tiles),
            in_specs=[
                pl.BlockSpec((1, C, N), lambda b, qi: (b, 0, 0)),       # x (full row)
                pl.BlockSpec((hidden, C), lambda b, qi: (0, 0)),        # wq (scaled)
                pl.BlockSpec((2 * hidden, C), lambda b, qi: (0, 0)),    # wkv
                pl.BlockSpec((dim, hidden), lambda b, qi: (0, 0)),      # wout
                pl.BlockSpec((dim, 1), lambda b, qi: (0, 0)),           # bout
            ],
            out_specs=pl.BlockSpec((1, dim, TQ), lambda b, qi: (b, 0, qi)),
            scratch_shapes=[
                pltpu.VMEM((2, heads, dim_head, N), jnp.bfloat16),      # K / V
            ],
        ),
        compiler_params=pltpu.CompilerParams(
            # qi must be "arbitrary": the K/V scratch persists across q tiles.
            dimension_semantics=("parallel", "arbitrary"),
            vmem_limit_bytes=_vmem_limit_bytes(C, N, heads, dim_head, TQ, dim,
                                               is_v7x),
        ),
    )(x_cm, wq, wkv, wout, bout)

    # Channels-major tokens (B, dim, N) -> NCHW is a pure reshape.
    return out_cm.reshape(B, dim, H, W)


def attention_reference(x_nchw, w_qkv, w_out, b_out, *, heads, dim_head):
    """Pure-JAX f32 reference replicating the PyTorch forward exactly."""
    B, C, H, W = x_nchw.shape
    N = H * W
    hidden = heads * dim_head
    scale = float(dim_head) ** (-0.5)

    x_tok = jnp.transpose(x_nchw, (0, 2, 3, 1)).reshape(B, N, C)        # (B,N,C)
    qkv = x_tok @ w_qkv.reshape(3 * hidden, C).T                        # (B,N,3*hidden)
    q, k, v = jnp.split(qkv, 3, axis=-1)

    def split_heads(t):  # (B,N,heads*d) -> (B,heads,N,d)
        return jnp.transpose(t.reshape(B, N, heads, dim_head), (0, 2, 1, 3))

    q, k, v = map(split_heads, (q, k, v))
    q = q * scale
    sim = jnp.einsum('bhid,bhjd->bhij', q, k)
    sim = sim - jnp.max(sim, axis=-1, keepdims=True)
    attn = jax.nn.softmax(sim, axis=-1)
    out = jnp.einsum('bhij,bhjd->bhid', attn, v)                        # (B,heads,N,d)
    out = jnp.transpose(out, (0, 2, 1, 3)).reshape(B, N, hidden)        # (h d) channels
    out = out @ w_out.reshape(C, hidden).T + b_out[None, None, :]       # (B,N,C)
    return jnp.transpose(out.reshape(B, H, W, C), (0, 3, 1, 2))


if __name__ == "__main__":
    B, dim, H, W = 2, 4, 16, 16
    heads, dim_head = 4, 32
    hidden = heads * dim_head

    key = jax.random.PRNGKey(0)
    kx, kqkv, kout_w, kout_b = jax.random.split(key, 4)

    x = jax.random.normal(kx, (B, dim, H, W), dtype=jnp.float32)
    # to_qkv (no bias), to_out (with bias), as 1x1 conv parameters.
    w_qkv = jax.random.normal(kqkv, (3 * hidden, dim, 1, 1), dtype=jnp.float32) * 0.1
    w_out = jax.random.normal(kout_w, (dim, hidden, 1, 1), dtype=jnp.float32) * 0.1
    b_out = jax.random.normal(kout_b, (dim,), dtype=jnp.float32) * 0.1

    out = attention_pallas(x, w_qkv, w_out, b_out, heads=heads, dim_head=dim_head)
    out = jax.block_until_ready(out)

    ref = attention_reference(x, w_qkv, w_out, b_out, heads=heads, dim_head=dim_head)
    # bf16 MXU operands (f32 accumulation, f32 softmax stats) -> relaxed tolerance.
    np.testing.assert_allclose(np.asarray(out), np.asarray(ref), rtol=2e-2, atol=2e-2)

    print("KERNEL_OK")
</pallas_src>

<mosaic_0001>
module attributes {stable_mosaic.version = 11 : i64} {
  func.func @attention_kernel(%arg0: i32, %arg1: i32, %arg2: memref<1x4x256xbf16, #tpu.memory_space<vmem>>, %arg3: memref<128x4xbf16, #tpu.memory_space<vmem>>, %arg4: memref<256x4xbf16, #tpu.memory_space<vmem>>, %arg5: memref<4x128xbf16, #tpu.memory_space<vmem>>, %arg6: memref<4x1xf32, #tpu.memory_space<vmem>>, %arg7: memref<1x4x256xf32, #tpu.memory_space<vmem>>, %arg8: memref<2x4x32x256xbf16, #tpu.memory_space<vmem>>) attributes {dimension_semantics = [#tpu.dimension_semantics<parallel>, #tpu.dimension_semantics<arbitrary>], iteration_bounds = array<i64: 2, 1>, scalar_prefetch = 0 : i64, scratch_operands = 1 : i64, tpu.core_type = #tpu.core_type<tc>, window_params = [{transform_indices = @transform_0, window_bounds = array<i64: 1, 4, 256>}, {pipeline_mode = #tpu.pipeline_mode<synchronous>, transform_indices = @transform_1, window_bounds = array<i64: 128, 4>}, {pipeline_mode = #tpu.pipeline_mode<synchronous>, transform_indices = @transform_2, window_bounds = array<i64: 256, 4>}, {pipeline_mode = #tpu.pipeline_mode<synchronous>, transform_indices = @transform_3, window_bounds = array<i64: 4, 128>}, {pipeline_mode = #tpu.pipeline_mode<synchronous>, transform_indices = @transform_4, window_bounds = array<i64: 4, 1>}, {transform_indices = @transform_5, window_bounds = array<i64: 1, 4, 256>}]} {
    %c0_i32 = arith.constant 0 : i32
    %0 = arith.cmpi eq, %arg1, %c0_i32 : i32
    %1 = arith.extui %0 : i1 to i32
    %c0_i32_0 = arith.constant 0 : i32
    %2 = arith.cmpi ne, %1, %c0_i32_0 : i32
    scf.if %2 {
      %c0_23 = arith.constant 0 : index
      %c0_24 = arith.constant 0 : index
      %c0_25 = arith.constant 0 : index
      %40 = vector.load %arg2[%c0_23, %c0_24, %c0_25] : memref<1x4x256xbf16, #tpu.memory_space<vmem>>, vector<1x4x256xbf16>
      %41 = vector.shape_cast %40 : vector<1x4x256xbf16> to vector<4x256xbf16>
      %c0_26 = arith.constant 0 : index
      %c0_27 = arith.constant 0 : index
      %42 = vector.load %arg4[%c0_26, %c0_27] : memref<256x4xbf16, #tpu.memory_space<vmem>>, vector<256x4xbf16>
      %cst_28 = arith.constant dense<0.000000e+00> : vector<256x256xf32>
      %43 = tpu.matmul %42, %41, %cst_28 {dimension_numbers = #tpu.dot_dimension_numbers<[1], [0], [0], [1], [0, 0, 1, 1], [], []>} : vector<256x4xbf16>, vector<4x256xbf16>, vector<256x256xf32> -> vector<256x256xf32>
      %44 = arith.truncf %43 : vector<256x256xf32> to vector<256x256xbf16>
      %45 = vector.shape_cast %44 : vector<256x256xbf16> to vector<2x4x32x256xbf16>
      %c0_29 = arith.constant 0 : index
      %c0_30 = arith.constant 0 : index
      %c0_31 = arith.constant 0 : index
      %c0_32 = arith.constant 0 : index
      %46 = vector.load %arg8[%c0_29, %c0_30, %c0_31, %c0_32] : memref<2x4x32x256xbf16, #tpu.memory_space<vmem>>, vector<2x4x32x256xbf16>
      tpu.vector_store %arg8[%c0_29, %c0_30, %c0_31, %c0_32], %45 {strides = array<i32>} : memref<2x4x32x256xbf16, #tpu.memory_space<vmem>>, vector<2x4x32x256xbf16>,
    } else {
    }
    %c0 = arith.constant 0 : index
    %c0_1 = arith.constant 0 : index
    %c0_2 = arith.constant 0 : index
    %c0_3 = arith.constant 0 : index
    %3 = vector.load %arg8[%c0, %c0_1, %c0_2, %c0_3] : memref<2x4x32x256xbf16, #tpu.memory_space<vmem>>, vector<1x4x32x256xbf16>
    %4 = vector.shape_cast %3 : vector<1x4x32x256xbf16> to vector<4x32x256xbf16>
    %c1 = arith.constant 1 : index
    %c0_4 = arith.constant 0 : index
    %c0_5 = arith.constant 0 : index
    %c0_6 = arith.constant 0 : index
    %5 = vector.load %arg8[%c1, %c0_4, %c0_5, %c0_6] : memref<2x4x32x256xbf16, #tpu.memory_space<vmem>>, vector<1x4x32x256xbf16>
    %6 = vector.shape_cast %5 : vector<1x4x32x256xbf16> to vector<4x32x256xbf16>
    %c256_i32 = arith.constant 256 : i32
    %7 = arith.muli %arg1, %c256_i32 : i32
    %8 = tpu.assume_multiple %7, 256 : i32
    %c0_7 = arith.constant 0 : index
    %c0_8 = arith.constant 0 : index
    %9 = arith.index_cast %8 : i32 to index
    %10 = vector.load %arg2[%c0_7, %c0_8, %9] : memref<1x4x256xbf16, #tpu.memory_space<vmem>>, vector<1x4x256xbf16>
    %11 = vector.shape_cast %10 : vector<1x4x256xbf16> to vector<4x256xbf16>
    %c0_9 = arith.constant 0 : index
    %c0_10 = arith.constant 0 : index
    %12 = vector.load %arg3[%c0_9, %c0_10] : memref<128x4xbf16, #tpu.memory_space<vmem>>, vector<128x4xbf16>
    %cst = arith.constant dense<0.000000e+00> : vector<128x256xf32>
    %13 = tpu.matmul %12, %11, %cst {dimension_numbers = #tpu.dot_dimension_numbers<[1], [0], [0], [1], [0, 0, 1, 1], [], []>} : vector<128x4xbf16>, vector<4x256xbf16>, vector<128x256xf32> -> vector<128x256xf32>
    %14 = vector.shape_cast %13 : vector<128x256xf32> to vector<4x32x256xf32>
    %15 = tpu.transpose %14, [0, 2, 1] : vector<4x32x256xf32> -> vector<4x256x32xf32>
    %16 = arith.truncf %15 : vector<4x256x32xf32> to vector<4x256x32xbf16>
    "tpu.trace_start"() <{level = 10 : i32, message = "hid,hdj->hij"}> : () -> ()
    %cst_11 = arith.constant dense<0.000000e+00> : vector<4x256x256xf32>
    %17 = tpu.matmul %16, %4, %cst_11 {dimension_numbers = #tpu.dot_dimension_numbers<[2], [1], [1], [2], [0, 0, 0, 1, 1, 2], [0], [0]>} : vector<4x256x32xbf16>, vector<4x32x256xbf16>, vector<4x256x256xf32> -> vector<4x256x256xf32>
    "tpu.trace_stop"() : () -> ()
    %cst_12 = arith.constant dense<0xFF800000> : vector<4x256xf32>
    %18 = vector.multi_reduction <maximumf>, %17, %cst_12 [2] : vector<4x256x256xf32> to vector<4x256xf32>
    %19 = vector.shape_cast %18 : vector<4x256xf32> to vector<4x256x1xf32>
    %20 = vector.broadcast %19 : vector<4x256x1xf32> to vector<4x256x256xf32>
    %21 = arith.subf %17, %20 : vector<4x256x256xf32>
    %22 = math.exp %21 : vector<4x256x256xf32>
    %cst_13 = arith.constant dense<0.000000e+00> : vector<4x256xf32>
    %23 = vector.multi_reduction <add>, %22, %cst_13 [2] : vector<4x256x256xf32> to vector<4x256xf32>
    %24 = arith.truncf %22 : vector<4x256x256xf32> to vector<4x256x256xbf16>
    "tpu.trace_start"() <{level = 10 : i32, message = "hdj,hij->hdi"}> : () -> ()
    %cst_14 = arith.constant dense<0.000000e+00> : vector<4x32x256xf32>
    %25 = tpu.matmul %6, %24, %cst_14 {dimension_numbers = #tpu.dot_dimension_numbers<[2], [2], [1], [1], [0, 0, 0, 1, 1, 1], [0], [0]>} : vector<4x32x256xbf16>, vector<4x256x256xbf16>, vector<4x32x256xf32> -> vector<4x32x256xf32>
    "tpu.trace_stop"() : () -> ()
    %26 = tpu.reciprocal %23 {approx = true} : vector<4x256xf32> -> vector<4x256xf32>
    %27 = vector.shape_cast %26 : vector<4x256xf32> to vector<4x1x256xf32>
    %28 = vector.broadcast %27 : vector<4x1x256xf32> to vector<4x32x256xf32>
    %29 = arith.mulf %25, %28 : vector<4x32x256xf32>
    %30 = vector.shape_cast %29 : vector<4x32x256xf32> to vector<128x256xf32>
    %31 = arith.truncf %30 : vector<128x256xf32> to vector<128x256xbf16>
    %c0_15 = arith.constant 0 : index
    %c0_16 = arith.constant 0 : index
    %32 = vector.load %arg5[%c0_15, %c0_16] : memref<4x128xbf16, #tpu.memory_space<vmem>>, vector<4x128xbf16>
    %cst_17 = arith.constant dense<0.000000e+00> : vector<4x256xf32>
    %33 = tpu.matmul %32, %31, %cst_17 {dimension_numbers = #tpu.dot_dimension_numbers<[1], [0], [0], [1], [0, 0, 1, 1], [], []>} : vector<4x128xbf16>, vector<128x256xbf16>, vector<4x256xf32> -> vector<4x256xf32>
    %c0_18 = arith.constant 0 : index
    %c0_19 = arith.constant 0 : index
    %34 = vector.load %arg6[%c0_18, %c0_19] : memref<4x1xf32, #tpu.memory_space<vmem>>, vector<4x1xf32>
    %35 = vector.broadcast %34 : vector<4x1xf32> to vector<4x256xf32>
    %36 = arith.addf %33, %35 : vector<4x256xf32>
    %c0_20 = arith.constant 0 : index
    %c0_21 = arith.constant 0 : index
    %c0_22 = arith.constant 0 : index
    %37 = vector.load %arg7[%c0_20, %c0_21, %c0_22] : memref<1x4x256xf32, #tpu.memory_space<vmem>>, vector<1x4x256xf32>
    %38 = vector.shape_cast %37 : vector<1x4x256xf32> to vector<4x256xf32>
    %39 = vector.shape_cast %36 : vector<4x256xf32> to vector<1x4x256xf32>
    tpu.vector_store %arg7[%c0_20, %c0_21, %c0_22], %39 {strides = array<i32>} : memref<1x4x256xf32, #tpu.memory_space<vmem>>, vector<1x4x256xf32>,
    return
  }
  func.func @transform_0(%arg0: i32, %arg1: i32) -> (i32, i32, i32) {
    %c0_i32 = arith.constant 0 : i32
    %c0_i32_0 = arith.constant 0 : i32
    %c0_i32_1 = arith.constant 0 : i32
    return %arg0, %c0_i32, %c0_i32_0 : i32, i32, i32
  }
  func.func @transform_1(%arg0: i32, %arg1: i32) -> (i32, i32) {
    %c0_i32 = arith.constant 0 : i32
    %c0_i32_0 = arith.constant 0 : i32
    %c0_i32_1 = arith.constant 0 : i32
    return %c0_i32, %c0_i32_0 : i32, i32
  }
  func.func @transform_2(%arg0: i32, %arg1: i32) -> (i32, i32) {
    %c0_i32 = arith.constant 0 : i32
    %c0_i32_0 = arith.constant 0 : i32
    %c0_i32_1 = arith.constant 0 : i32
    return %c0_i32, %c0_i32_0 : i32, i32
  }
  func.func @transform_3(%arg0: i32, %arg1: i32) -> (i32, i32) {
    %c0_i32 = arith.constant 0 : i32
    %c0_i32_0 = arith.constant 0 : i32
    %c0_i32_1 = arith.constant 0 : i32
    return %c0_i32, %c0_i32_0 : i32, i32
  }
  func.func @transform_4(%arg0: i32, %arg1: i32) -> (i32, i32) {
    %c0_i32 = arith.constant 0 : i32
    %c0_i32_0 = arith.constant 0 : i32
    %c0_i32_1 = arith.constant 0 : i32
    return %c0_i32, %c0_i32_0 : i32, i32
  }
  func.func @transform_5(%arg0: i32, %arg1: i32) -> (i32, i32, i32) {
    %c0_i32 = arith.constant 0 : i32
    %c0_i32_0 = arith.constant 0 : i32
    return %arg0, %c0_i32, %arg1 : i32, i32, i32
  }
}

</mosaic_0001>

<llo_original>
// kernel: tpu_custom_call.1
$region0: #{tpu_custom_call.1}
  #allocation0 [shape = 'u32[]', space=smem, size = 0x4, offset = 0x4, fixed_abs, tag = 'smem constant byte address 0x4 - core index']
  #allocation1 [shape = 'u32[72,128]{1,0:T(1,128)}', space=vmem, size = 0x9000, scoped, tag = 'internal scratch']
  #allocation2 [shape = 'bf16[2,4,32,256]{3,2,1,0:T(8,128)(2,1)}', space=vmem, size = 0x20000, scoped, tag = 'scratch operand']
  %s0 = inlined_call_operand.vmem [shape: bf16[2,4,256], index: 0, kind: input, shape index: {}]
  %s1 = inlined_call_operand.vmem [shape: bf16[128,4], index: 1, kind: input, shape index: {}]
  %s2 = inlined_call_operand.vmem [shape: bf16[256,4], index: 2, kind: input, shape index: {}]
  %s3 = inlined_call_operand.vmem [shape: bf16[4,128], index: 3, kind: input, shape index: {}]
  %s4 = inlined_call_operand.vmem [shape: f32[4,1], index: 4, kind: input, shape index: {}]
  %s5 = inlined_call_operand.hbm [shape: f32[2,4,256], index: 5, kind: output, shape index: {}]
  %s6 = sld [smem:[#allocation0]]
  $region57: #{tpu_custom_call.1} parent=0
    _
  %s8 = ssub.s32 1, %s6
  %s9 = scalar_select 0, %s8, %s6
  $region1: #{tpu_custom_call.1} parent=0
    #allocation3 [shape = 'u8[8192]{0}', space=vmem, size = 0x2000, scoped, tag = 'output window, operand 0']
    #allocation4 [shape = 's32[2]{0}', space=sflag, size = 0x8, scoped, tag = 'scoped memory for tpu_custom_call.1']
    %10 = vsyncpa [#allocation4], 0
    %s11 = scalar_lea.sflag [#allocation4], 1
    %12 = vsyncpa %s11, 0
    loop: start=0, step=1, limit=4
    $region2: #{tpu_custom_call.1} parent=1 // loop_pre_header
      _
    $region3: #{tpu_custom_call.1} parent=1 // loop_header
      %s14 = sphi 0, %s18
      %p15 = scmp.ge.s32.totalorder %s14, 4
      %s21 = sphi 0, %s33
      %s22 = sphi 0, %s29
      %s23 = sphi 0, %s21
      %s24 = sphi 0, %s22
      %s25 = sphi 0, %s23
      %s26 = sphi 0, %s24
      %s36 = sphi 0, %s38
      %s39 = sphi 0, %s36
      %s40 = sphi 0, %s39
      %s56 = sphi 0, %s40
      %s60 = sphi 0, %s60
      %s62 = sphi 0, %s60
      %s63 = sphi 0, %s62
      %s77 = sphi 0, %s63
      %s81 = sphi 0, %s81
      %s83 = sphi 0, %s81
      %s84 = sphi 0, %s83
      %s98 = sphi 0, %s84
      %s102 = sphi 0, %s102
      %s104 = sphi 0, %s102
      %s105 = sphi 0, %s104
      %s119 = sphi 0, %s105
      %s123 = sphi 0, %s123
      %s125 = sphi 0, %s123
      %s126 = sphi 0, %s125
      %s140 = sphi 0, %s126
      %s148 = sphi 0, %s150
      %s151 = sphi 0, %s148
      %s152 = sphi 0, %s151
      %s168 = sphi 0, %s152
    $region4: #{tpu_custom_call.1} parent=1 // loop_header_branch
      %17 = sbr.rel (%p15) target = $region8
    $region5: #{tpu_custom_call.1} parent=1 // loop_body
      %s19 = ssub.s32 %s14, 1
      %s20 = ssub.s32 %s14, 2
      %s27 = sadd.s32 1, %s22
      %p28 = scmp.ge.s32.totalorder %s27, 1
      %s29 = scalar_select %p28, 0, %s27
      %s30 = sadd.s32 1, %s21
      %s31 = scalar_select %p28, %s30, %s21
      %p32 = scmp.ge.s32.totalorder %s31, 2
      %s33 = scalar_select %p32, 0, %s31
      %s34 = ssub.s32 %s21, %s33
      %p35 = scmp.eq.s32.totalorder %s34, 0
      %s37 = sadd.s32 %s36, 1
      %s38 = scalar_select %p35, %s36, %s37
      %p41 = pneg %p35
      %p42 = scmp.eq.s32.totalorder %s14, 1
      %p43 = por %p41, %p42
      %p44 = scmp.ne.s32.totalorder %s36, %s39
      %p45 = scmp.eq.s32.totalorder %s14, 0
      %p46 = por %p44, %p45
      %p47 = scmp.ne.s32.totalorder %s36, %s39
      %p48 = scmp.eq.s32.totalorder %s19, 1
      %p49 = por %p47, %p48
      %p50 = scmp.ne.s32.totalorder %s39, %s40
      %p51 = scmp.eq.s32.totalorder %s19, 0
      %p52 = por %p50, %p51
      %p53 = scmp.ne.s32.totalorder %s39, %s40
      %p54 = scmp.eq.s32.totalorder %s20, 1
      %p55 = por %p53, %p54
      %p57 = scmp.ne.s32.totalorder %s40, %s56
      %p58 = scmp.eq.s32.totalorder %s20, 0
      %p59 = por %p57, %p58
      %s61 = sadd.s32 %s60, 1
      %p64 = scmp.eq.s32.totalorder %s14, 1
      %p65 = scmp.ne.s32.totalorder %s60, %s62
      %p66 = scmp.eq.s32.totalorder %s14, 0
      %p67 = por %p65, %p66
      %p68 = scmp.ne.s32.totalorder %s60, %s62
      %p69 = scmp.eq.s32.totalorder %s19, 1
      %p70 = por %p68, %p69
      %p71 = scmp.ne.s32.totalorder %s62, %s63
      %p72 = scmp.eq.s32.totalorder %s19, 0
      %p73 = por %p71, %p72
      %p74 = scmp.ne.s32.totalorder %s62, %s63
      %p75 = scmp.eq.s32.totalorder %s20, 1
      %p76 = por %p74, %p75
      %p78 = scmp.ne.s32.totalorder %s63, %s77
      %p79 = scmp.eq.s32.totalorder %s20, 0
      %p80 = por %p78, %p79
      %s82 = sadd.s32 %s81, 1
      %p85 = scmp.eq.s32.totalorder %s14, 1
      %p86 = scmp.ne.s32.totalorder %s81, %s83
      %p87 = scmp.eq.s32.totalorder %s14, 0
      %p88 = por %p86, %p87
      %p89 = scmp.ne.s32.totalorder %s81, %s83
      %p90 = scmp.eq.s32.totalorder %s19, 1
      %p91 = por %p89, %p90
      %p92 = scmp.ne.s32.totalorder %s83, %s84
      %p93 = scmp.eq.s32.totalorder %s19, 0
      %p94 = por %p92, %p93
      %p95 = scmp.ne.s32.totalorder %s83, %s84
      %p96 = scmp.eq.s32.totalorder %s20, 1
      %p97 = por %p95, %p96
      %p99 = scmp.ne.s32.totalorder %s84, %s98
      %p100 = scmp.eq.s32.totalorder %s20, 0
      %p101 = por %p99, %p100
      %s103 = sadd.s32 %s102, 1
      %p106 = scmp.eq.s32.totalorder %s14, 1
      %p107 = scmp.ne.s32.totalorder %s102, %s104
      %p108 = scmp.eq.s32.totalorder %s14, 0
      %p109 = por %p107, %p108
      %p110 = scmp.ne.s32.totalorder %s102, %s104
      %p111 = scmp.eq.s32.totalorder %s19, 1
      %p112 = por %p110, %p111
      %p113 = scmp.ne.s32.totalorder %s104, %s105
      %p114 = scmp.eq.s32.totalorder %s19, 0
      %p115 = por %p113, %p114
      %p116 = scmp.ne.s32.totalorder %s104, %s105
      %p117 = scmp.eq.s32.totalorder %s20, 1
      %p118 = por %p116, %p117
      %p120 = scmp.ne.s32.totalorder %s105, %s119
      %p121 = scmp.eq.s32.totalorder %s20, 0
      %p122 = por %p120, %p121
      %s124 = sadd.s32 %s123, 1
      %p127 = scmp.eq.s32.totalorder %s14, 1
      %p128 = scmp.ne.s32.totalorder %s123, %s125
      %p129 = scmp.eq.s32.totalorder %s14, 0
      %p130 = por %p128, %p129
      %p131 = scmp.ne.s32.totalorder %s123, %s125
      %p132 = scmp.eq.s32.totalorder %s19, 1
      %p133 = por %p131, %p132
      %p134 = scmp.ne.s32.totalorder %s125, %s126
      %p135 = scmp.eq.s32.totalorder %s19, 0
      %p136 = por %p134, %p135
      %p137 = scmp.ne.s32.totalorder %s125, %s126
      %p138 = scmp.eq.s32.totalorder %s20, 1
      %p139 = por %p137, %p138
      %p141 = scmp.ne.s32.totalorder %s126, %s140
      %p142 = scmp.eq.s32.totalorder %s20, 0
      %p143 = por %p141, %p142
      %s144 = ssub.s32 %s21, %s33
      %s145 = ssub.s32 %s22, %s29
      %s146 = sor.u32 %s144, %s145
      %p147 = scmp.eq.s32.totalorder %s146, 0
      %s149 = sadd.s32 %s148, 1
      %s150 = scalar_select %p147, %s148, %s149
      %p153 = pneg %p147
      %p154 = scmp.eq.s32.totalorder %s14, 1
      %p155 = por %p153, %p154
      %p156 = scmp.ne.s32.totalorder %s148, %s151
      %p157 = scmp.eq.s32.totalorder %s14, 0
      %p158 = por %p156, %p157
      %p159 = scmp.ne.s32.totalorder %s148, %s151
      %p160 = scmp.eq.s32.totalorder %s19, 1
      %p161 = por %p159, %p160
      %p162 = scmp.ne.s32.totalorder %s151, %s152
      %p163 = scmp.eq.s32.totalorder %s19, 0
      %p164 = por %p162, %p163
      %p165 = scmp.ne.s32.totalorder %s151, %s152
      %p166 = scmp.eq.s32.totalorder %s20, 1
      %p167 = por %p165, %p166
      %p169 = scmp.ne.s32.totalorder %s152, %s168
      %p170 = scmp.eq.s32.totalorder %s20, 0
      %p171 = por %p169, %p170
      %p172 = scmp.le.s32.totalorder 1, %s14
      %p173 = scmp.lt.s32.totalorder %s14, 3
      %p174 = pnand %p172, %p173
      %p175 = pneg %p174
      // Predicated region
      $region9: #{tpu_custom_call.1} parent=5 // pred_check
        _
      $region10: #{tpu_custom_call.1} parent=5 // pred_check_branch
        %177 = sbr.rel (%p174) target = $region12
      $region11: #{tpu_custom_call.1} parent=5 // pred_region
        %s178 = ssub.s32 %s14, 1
        // Predicated region
        $region13: #{tpu_custom_call.1} parent=11 // pred_check
          %p179 = pneg %p73
        $region14: #{tpu_custom_call.1} parent=11 // pred_check_branch
          %181 = sbr.rel (%p179) target = $region16
        $region15: #{tpu_custom_call.1} parent=11 // pred_region
          _
        $region16: #{tpu_custom_call.1} parent=11 // pred_fallthru
          _
        // Predicated region
        $region17: #{tpu_custom_call.1} parent=11 // pred_check
          %p182 = pneg %p94
        $region18: #{tpu_custom_call.1} parent=11 // pred_check_branch
          %184 = sbr.rel (%p182) target = $region20
        $region19: #{tpu_custom_call.1} parent=11 // pred_region
          _
        $region20: #{tpu_custom_call.1} parent=11 // pred_fallthru
          _
        // Predicated region
        $region21: #{tpu_custom_call.1} parent=11 // pred_check
          %p185 = pneg %p115
        $region22: #{tpu_custom_call.1} parent=11 // pred_check_branch
          %187 = sbr.rel (%p185) target = $region24
        $region23: #{tpu_custom_call.1} parent=11 // pred_region
          _
        $region24: #{tpu_custom_call.1} parent=11 // pred_fallthru
          _
        // Predicated region
        $region25: #{tpu_custom_call.1} parent=11 // pred_check
          %p188 = pneg %p136
        $region26: #{tpu_custom_call.1} parent=11 // pred_check_branch
          %190 = sbr.rel (%p188) target = $region28
        $region27: #{tpu_custom_call.1} parent=11 // pred_region
          _
        $region28: #{tpu_custom_call.1} parent=11 // pred_fallthru
          _
      $region12: #{tpu_custom_call.1} parent=5 // pred_fallthru
        _
      %p191 = scmp.lt.s32.totalorder %s14, 2
      // Predicated region
      $region29: #{tpu_custom_call.1} parent=5 // pred_check
        %p192 = pneg %p191
      $region30: #{tpu_custom_call.1} parent=5 // pred_check_branch
        %194 = sbr.rel (%p192) target = $region32
      $region31: #{tpu_custom_call.1} parent=5 // pred_region
        // Predicated region
        $region33: #{tpu_custom_call.1} parent=31 // pred_check
          %p195 = pneg %p46
        $region34: #{tpu_custom_call.1} parent=31 // pred_check_branch
          %197 = sbr.rel (%p195) target = $region36
        $region35: #{tpu_custom_call.1} parent=31 // pred_region
          %p198 = scmp.lt.s32.totalorder %s21, 1
          %s199 = scalar_select %p198, %s21, 1
          %s200 = smul.addr %s199, 2
          %s201 = smul.addr %s200, 2
          %s202 = scalar_lea.vmem %s0, %s201
        $region36: #{tpu_custom_call.1} parent=31 // pred_fallthru
          _
      $region32: #{tpu_custom_call.1} parent=5 // pred_fallthru
        _
      %p203 = scmp.le.s32.totalorder 1, %s14
      %p204 = scmp.lt.s32.totalorder %s14, 3
      %p205 = pnand %p203, %p204
      %p206 = pneg %p205
      // Predicated region
      $region37: #{tpu_custom_call.1} parent=5 // pred_check
        _
      $region38: #{tpu_custom_call.1} parent=5 // pred_check_branch
        %208 = sbr.rel (%p205) target = $region40
      $region39: #{tpu_custom_call.1} parent=5 // pred_region
        %s209 = ssub.s32 %s14, 1
        %p210 = scmp.lt.s32.totalorder %s23, 1
        %s211 = scalar_select %p210, %s23, 1
        %s212 = smul.addr %s211, 2
        %s213 = smul.addr %s212, 2
        %s214 = scalar_lea.vmem %s0, %s213
        %p215 = pneg %p52
        %p216 = pneg %p49
        %p217 = pneg %p73
        %p218 = pneg %p70
        %p219 = pneg %p94
        %p220 = pneg %p91
        %p221 = pneg %p115
        %p222 = pneg %p112
        %p223 = pneg %p136
        %p224 = pneg %p133
        %p225 = pneg %p164
        %p226 = pneg %p161
        %s227 = sand.u32 %s151, 1
        %s228 = scalar_lea.sflag [#allocation4], %s227
        %s229 = sand.u32 %s151, 1
        %s230 = smul.addr %s229, 8
        %s231 = scalar_lea.vmem [#allocation3], %s230
        %p232 = scmp.lt.s32.totalorder %s23, 1
        %s233 = scalar_select %p232, %s23, 1
        %s234 = smul.addr %s233, 2
        %s235 = smul.addr %s234, 2
        %s236 = scalar_lea.vmem %s0, %s235
        %s237 = smul.u32 2, %s24
        %p239 = scmp.eq.s32.totalorder %s24, 0
        // Predicated region
        $region41: #{tpu_custom_call.1} parent=39 // pred_check
          %p240 = pneg %p239
        $region42: #{tpu_custom_call.1} parent=39 // pred_check_branch
          %242 = sbr.rel (%p240) target = $region44
        $region43: #{tpu_custom_call.1} parent=39 // pred_region
          %v243 = vld [vmem:[%s236] sm:$0xf]
          %v244 = vld [vmem:[%s2] sm:$0xf]
          %v245 = vld [vmem:[%s2 + $0x4] sm:$0xf]
          %v246 = vld [vmem:[%s2 + $0x8] sm:$0xf]
          %v247 = vld [vmem:[%s2 + $0xc] sm:$0xf]
          %v248 = vld [vmem:[%s2 + $0x10] sm:$0xf]
          %v249 = vld [vmem:[%s2 + $0x14] sm:$0xf]
          %v250 = vld [vmem:[%s2 + $0x18] sm:$0xf]
          %v251 = vld [vmem:[%s2 + $0x1c] sm:$0xf]
          %v252 = vld [vmem:[%s2 + $0x20] sm:$0xf]
          %v253 = vld [vmem:[%s2 + $0x24] sm:$0xf]
          %v254 = vld [vmem:[%s2 + $0x28] sm:$0xf]
          %v255 = vld [vmem:[%s2 + $0x2c] sm:$0xf]
          %v256 = vld [vmem:[%s2 + $0x30] sm:$0xf]
          %v257 = vld [vmem:[%s2 + $0x34] sm:$0xf]
          %v258 = vld [vmem:[%s2 + $0x38] sm:$0xf]
          %v259 = vld [vmem:[%s2 + $0x3c] sm:$0xf]
          %v260 = vld [vmem:[%s2 + $0x40] sm:$0xf]
          %v261 = vld [vmem:[%s2 + $0x44] sm:$0xf]
          %v262 = vld [vmem:[%s2 + $0x48] sm:$0xf]
          %v263 = vld [vmem:[%s2 + $0x4c] sm:$0xf]
          %v264 = vld [vmem:[%s2 + $0x50] sm:$0xf]
          %v265 = vld [vmem:[%s2 + $0x54] sm:$0xf]
          %v266 = vld [vmem:[%s2 + $0x58] sm:$0xf]
          %v267 = vld [vmem:[%s2 + $0x5c] sm:$0xf]
          %v268 = vld [vmem:[%s2 + $0x60] sm:$0xf]
          %v269 = vld [vmem:[%s2 + $0x64] sm:$0xf]
          %v270 = vld [vmem:[%s2 + $0x68] sm:$0xf]
          %v271 = vld [vmem:[%s2 + $0x6c] sm:$0xf]
          %v272 = vld [vmem:[%s2 + $0x70] sm:$0xf]
          %v273 = vld [vmem:[%s2 + $0x74] sm:$0xf]
          %v274 = vld [vmem:[%s2 + $0x78] sm:$0xf]
          %v275 = vld [vmem:[%s2 + $0x7c] sm:$0xf]
          %v308 = vunpack.c.l.b16 %v244
          %v309 = vunpack.c.l.b16 %v245
          %v310 = vunpack.c.l.b16 %v246
          %v311 = vunpack.c.l.b16 %v247
          %v312 = vunpack.c.l.b16 %v248
          %v313 = vunpack.c.l.b16 %v249
          %v314 = vunpack.c.l.b16 %v250
          %v315 = vunpack.c.l.b16 %v251
          %v316 = vunpack.c.l.b16 %v252
          %v317 = vunpack.c.l.b16 %v253
          %v318 = vunpack.c.l.b16 %v254
          %v319 = vunpack.c.l.b16 %v255
          %v320 = vunpack.c.l.b16 %v256
          %v321 = vunpack.c.l.b16 %v257
          %v322 = vunpack.c.l.b16 %v258
          %v323 = vunpack.c.l.b16 %v259
          %v324 = vunpack.c.l.b16 %v260
          %v325 = vunpack.c.l.b16 %v261
          %v326 = vunpack.c.l.b16 %v262
          %v327 = vunpack.c.l.b16 %v263
          %v328 = vunpack.c.l.b16 %v264
          %v329 = vunpack.c.l.b16 %v265
          %v330 = vunpack.c.l.b16 %v266
          %v331 = vunpack.c.l.b16 %v267
          %v332 = vunpack.c.l.b16 %v268
          %v333 = vunpack.c.l.b16 %v269
          %v334 = vunpack.c.l.b16 %v270
          %v335 = vunpack.c.l.b16 %v271
          %v336 = vunpack.c.l.b16 %v272
          %v337 = vunpack.c.l.b16 %v273
          %v338 = vunpack.c.l.b16 %v274
          %v339 = vunpack.c.l.b16 %v275
          %v340 = vpack.c.b16 %v309, %v308
          %v341 = vpack.c.b16 %v311, %v310
          %v342 = vpack.c.b16 %v313, %v312
          %v343 = vpack.c.b16 %v315, %v314
          %v344 = vpack.c.b16 %v317, %v316
          %v345 = vpack.c.b16 %v319, %v318
          %v346 = vpack.c.b16 %v321, %v320
          %v347 = vpack.c.b16 %v323, %v322
          %v348 = vpack.c.b16 %v325, %v324
          %v349 = vpack.c.b16 %v327, %v326
          %v350 = vpack.c.b16 %v329, %v328
          %v351 = vpack.c.b16 %v331, %v330
          %v352 = vpack.c.b16 %v333, %v332
          %v353 = vpack.c.b16 %v335, %v334
          %v354 = vpack.c.b16 %v337, %v336
          %v355 = vpack.c.b16 %v339, %v338
          %357 = vst [vmem:[#allocation1] ss:$4 sm:$0xff] %v243
          %v358 = vld.sshfl [vmem:[#allocation1] sm:$0xff pattern:$0x73625140]
          %v359 = vld.sshfl [vmem:[#allocation1 + $0x8] sm:$0xff pattern:$0x73625140]
          %vm360 = vcmask 31744
          %v362 = vsel %vm360, %v340, 0
          %v365 = vsel %vm360, %v341, 0
          %v368 = vsel %vm360, %v342, 0
          %v371 = vsel %vm360, %v343, 0
          %v374 = vsel %vm360, %v344, 0
          %v377 = vsel %vm360, %v345, 0
          %v380 = vsel %vm360, %v346, 0
          %v383 = vsel %vm360, %v347, 0
          %v386 = vsel %vm360, %v348, 0
          %v389 = vsel %vm360, %v349, 0
          %v392 = vsel %vm360, %v350, 0
          %v395 = vsel %vm360, %v351, 0
          %v398 = vsel %vm360, %v352, 0
          %v401 = vsel %vm360, %v353, 0
          %v404 = vsel %vm360, %v354, 0
          %v407 = vsel %vm360, %v355, 0
          %vm409 = vcmask 1041408
          %v410 = vsel %vm409, %v358, 0
          %v412 = vsel %vm409, %v359, 0
          %414 = vmatpush.bf16.msra.mxu0 0
          %415 = vmatpush.bf16.msra.mxu0 0
          %416 = vmatpush.bf16.msra.mxu0 0
          %417 = vmatpush.bf16.msra.mxu0 0
          %418 = vmatpush.bf16.msra.mxu0 0
          %419 = vmatpush.bf16.msra.mxu0 0
          %420 = vmatpush.bf16.msra.mxu0 0
          %421 = vmatpush.bf16.msra.mxu0 %v410
          %422 = vmatmul.bf16.gmra.mxu0 %v362
          %v423 = vpop.f32.mrf.mxu0
          %v424 = vadd.f32 0.0, %v423
          %v425 = vpop.f32.mrf.mxu0
          %v426 = vadd.f32 0.0, %v425
          %427 = vmatmul.bf16.gmra.mxu0 %v365
          %v428 = vpop.f32.mrf.mxu0
          %v429 = vadd.f32 0.0, %v428
          %v430 = vpop.f32.mrf.mxu0
          %v431 = vadd.f32 0.0, %v430
          %432 = vmatmul.bf16.gmra.mxu0 %v368
          %v433 = vpop.f32.mrf.mxu0
          %v434 = vadd.f32 0.0, %v433
          %v435 = vpop.f32.mrf.mxu0
          %v436 = vadd.f32 0.0, %v435
          %437 = vmatmul.bf16.gmra.mxu0 %v371
          %v438 = vpop.f32.mrf.mxu0
          %v439 = vadd.f32 0.0, %v438
          %v440 = vpop.f32.mrf.mxu0
          %v441 = vadd.f32 0.0, %v440
          %442 = vmatmul.bf16.gmra.mxu0 %v374
          %v443 = vpop.f32.mrf.mxu0
          %v444 = vadd.f32 0.0, %v443
          %v445 = vpop.f32.mrf.mxu0
          %v446 = vadd.f32 0.0, %v445
          %447 = vmatmul.bf16.gmra.mxu0 %v377
          %v448 = vpop.f32.mrf.mxu0
          %v449 = vadd.f32 0.0, %v448
          %v450 = vpop.f32.mrf.mxu0
          %v451 = vadd.f32 0.0, %v450
          %452 = vmatmul.bf16.gmra.mxu0 %v380
          %v453 = vpop.f32.mrf.mxu0
          %v454 = vadd.f32 0.0, %v453
          %v455 = vpop.f32.mrf.mxu0
          %v456 = vadd.f32 0.0, %v455
          %457 = vmatmul.bf16.gmra.mxu0 %v383
          %v458 = vpop.f32.mrf.mxu0
          %v459 = vadd.f32 0.0, %v458
          %v460 = vpop.f32.mrf.mxu0
          %v461 = vadd.f32 0.0, %v460
          %462 = vmatmul.bf16.gmra.mxu0 %v386
          %v463 = vpop.f32.mrf.mxu0
          %v464 = vadd.f32 0.0, %v463
          %v465 = vpop.f32.mrf.mxu0
          %v466 = vadd.f32 0.0, %v465
          %467 = vmatmul.bf16.gmra.mxu0 %v389
          %v468 = vpop.f32.mrf.mxu0
          %v469 = vadd.f32 0.0, %v468
          %v470 = vpop.f32.mrf.mxu0
          %v471 = vadd.f32 0.0, %v470
          %472 = vmatmul.bf16.gmra.mxu0 %v392
          %v473 = vpop.f32.mrf.mxu0
          %v474 = vadd.f32 0.0, %v473
          %v475 = vpop.f32.mrf.mxu0
          %v476 = vadd.f32 0.0, %v475
          %477 = vmatmul.bf16.gmra.mxu0 %v395
          %v478 = vpop.f32.mrf.mxu0
          %v479 = vadd.f32 0.0, %v478
          %v480 = vpop.f32.mrf.mxu0
          %v481 = vadd.f32 0.0, %v480
          %482 = vmatmul.bf16.gmra.mxu0 %v398
          %v483 = vpop.f32.mrf.mxu0
          %v484 = vadd.f32 0.0, %v483
          %v485 = vpop.f32.mrf.mxu0
          %v486 = vadd.f32 0.0, %v485
          %487 = vmatmul.bf16.gmra.mxu0 %v401
          %v488 = vpop.f32.mrf.mxu0
          %v489 = vadd.f32 0.0, %v488
          %v490 = vpop.f32.mrf.mxu0
          %v491 = vadd.f32 0.0, %v490
          %492 = vmatmul.bf16.gmra.mxu0 %v404
          %v493 = vpop.f32.mrf.mxu0
          %v494 = vadd.f32 0.0, %v493
          %v495 = vpop.f32.mrf.mxu0
          %v496 = vadd.f32 0.0, %v495
          %497 = vmatmul.bf16.gmra.mxu0 %v407
          %v498 = vpop.f32.mrf.mxu0
          %v499 = vadd.f32 0.0, %v498
          %v500 = vpop.f32.mrf.mxu0
          %v501 = vadd.f32 0.0, %v500
          %502 = vdwg.mxu0
          %503 = vmatpush.bf16.msra.mxu0 0
          %504 = vmatpush.bf16.msra.mxu0 0
          %505 = vmatpush.bf16.msra.mxu0 0
          %506 = vmatpush.bf16.msra.mxu0 0
          %507 = vmatpush.bf16.msra.mxu0 0
          %508 = vmatpush.bf16.msra.mxu0 0
          %509 = vmatpush.bf16.msra.mxu0 0
          %510 = vmatpush.bf16.msra.mxu0 %v412
          %511 = vmatmul.bf16.gmra.mxu0 %v362
          %v512 = vpop.f32.mrf.mxu0
          %v513 = vadd.f32 0.0, %v512
          %v514 = vpop.f32.mrf.mxu0
          %v515 = vadd.f32 0.0, %v514
          %516 = vmatmul.bf16.gmra.mxu0 %v365
          %v517 = vpop.f32.mrf.mxu0
          %v518 = vadd.f32 0.0, %v517
          %v519 = vpop.f32.mrf.mxu0
          %v520 = vadd.f32 0.0, %v519
          %521 = vmatmul.bf16.gmra.mxu0 %v368
          %v522 = vpop.f32.mrf.mxu0
          %v523 = vadd.f32 0.0, %v522
          %v524 = vpop.f32.mrf.mxu0
          %v525 = vadd.f32 0.0, %v524
          %526 = vmatmul.bf16.gmra.mxu0 %v371
          %v527 = vpop.f32.mrf.mxu0
          %v528 = vadd.f32 0.0, %v527
          %v529 = vpop.f32.mrf.mxu0
          %v530 = vadd.f32 0.0, %v529
          %531 = vmatmul.bf16.gmra.mxu0 %v374
          %v532 = vpop.f32.mrf.mxu0
          %v533 = vadd.f32 0.0, %v532
          %v534 = vpop.f32.mrf.mxu0
          %v535 = vadd.f32 0.0, %v534
          %536 = vmatmul.bf16.gmra.mxu0 %v377
          %v537 = vpop.f32.mrf.mxu0
          %v538 = vadd.f32 0.0, %v537
          %v539 = vpop.f32.mrf.mxu0
          %v540 = vadd.f32 0.0, %v539
          %541 = vmatmul.bf16.gmra.mxu0 %v380
          %v542 = vpop.f32.mrf.mxu0
          %v543 = vadd.f32 0.0, %v542
          %v544 = vpop.f32.mrf.mxu0
          %v545 = vadd.f32 0.0, %v544
          %546 = vmatmul.bf16.gmra.mxu0 %v383
          %v547 = vpop.f32.mrf.mxu0
          %v548 = vadd.f32 0.0, %v547
          %v549 = vpop.f32.mrf.mxu0
          %v550 = vadd.f32 0.0, %v549
          %551 = vmatmul.bf16.gmra.mxu0 %v386
          %v552 = vpop.f32.mrf.mxu0
          %v553 = vadd.f32 0.0, %v552
          %v554 = vpop.f32.mrf.mxu0
          %v555 = vadd.f32 0.0, %v554
          %556 = vmatmul.bf16.gmra.mxu0 %v389
          %v557 = vpop.f32.mrf.mxu0
          %v558 = vadd.f32 0.0, %v557
          %v559 = vpop.f32.mrf.mxu0
          %v560 = vadd.f32 0.0, %v559
          %561 = vmatmul.bf16.gmra.mxu0 %v392
          %v562 = vpop.f32.mrf.mxu0
          %v563 = vadd.f32 0.0, %v562
          %v564 = vpop.f32.mrf.mxu0
          %v565 = vadd.f32 0.0, %v564
          %566 = vmatmul.bf16.gmra.mxu0 %v395
          %v567 = vpop.f32.mrf.mxu0
          %v568 = vadd.f32 0.0, %v567
          %v569 = vpop.f32.mrf.mxu0
          %v570 = vadd.f32 0.0, %v569
          %571 = vmatmul.bf16.gmra.mxu0 %v398
          %v572 = vpop.f32.mrf.mxu0
          %v573 = vadd.f32 0.0, %v572
          %v574 = vpop.f32.mrf.mxu0
          %v575 = vadd.f32 0.0, %v574
          %576 = vmatmul.bf16.gmra.mxu0 %v401
          %v577 = vpop.f32.mrf.mxu0
          %v578 = vadd.f32 0.0, %v577
          %v579 = vpop.f32.mrf.mxu0
          %v580 = vadd.f32 0.0, %v579
          %581 = vmatmul.bf16.gmra.mxu0 %v404
          %v582 = vpop.f32.mrf.mxu0
          %v583 = vadd.f32 0.0, %v582
          %v584 = vpop.f32.mrf.mxu0
          %v585 = vadd.f32 0.0, %v584
          %586 = vmatmul.bf16.gmra.mxu0 %v407
          %v587 = vpop.f32.mrf.mxu0
          %v588 = vadd.f32 0.0, %v587
          %v589 = vpop.f32.mrf.mxu0
          %v590 = vadd.f32 0.0, %v589
          %591 = vdwg.mxu0
          %v592 = vpack.c.bf16 %v513, %v424
          %v593 = vpack.c.bf16 %v515, %v426
          %v594 = vpack.c.bf16 %v518, %v429
          %v595 = vpack.c.bf16 %v520, %v431
          %v596 = vpack.c.bf16 %v523, %v434
          %v597 = vpack.c.bf16 %v525, %v436
          %v598 = vpack.c.bf16 %v528, %v439
          %v599 = vpack.c.bf16 %v530, %v441
          %v600 = vpack.c.bf16 %v533, %v444
          %v601 = vpack.c.bf16 %v535, %v446
          %v602 = vpack.c.bf16 %v538, %v449
          %v603 = vpack.c.bf16 %v540, %v451
          %v604 = vpack.c.bf16 %v543, %v454
          %v605 = vpack.c.bf16 %v545, %v456
          %v606 = vpack.c.bf16 %v548, %v459
          %v607 = vpack.c.bf16 %v550, %v461
          %v608 = vpack.c.bf16 %v553, %v464
          %v609 = vpack.c.bf16 %v555, %v466
          %v610 = vpack.c.bf16 %v558, %v469
          %v611 = vpack.c.bf16 %v560, %v471
          %v612 = vpack.c.bf16 %v563, %v474
          %v613 = vpack.c.bf16 %v565, %v476
          %v614 = vpack.c.bf16 %v568, %v479
          %v615 = vpack.c.bf16 %v570, %v481
          %v616 = vpack.c.bf16 %v573, %v484
          %v617 = vpack.c.bf16 %v575, %v486
          %v618 = vpack.c.bf16 %v578, %v489
          %v619 = vpack.c.bf16 %v580, %v491
          %v620 = vpack.c.bf16 %v583, %v494
          %v621 = vpack.c.bf16 %v585, %v496
          %v622 = vpack.c.bf16 %v588, %v499
          %v623 = vpack.c.bf16 %v590, %v501
          %624 = vst [vmem:[#allocation2] sm:$0xff] %v592
          %625 = vst [vmem:[#allocation2 + $0x8] sm:$0xff] %v593
          %626 = vst [vmem:[#allocation2 + $0x10] sm:$0xff] %v594
          %627 = vst [vmem:[#allocation2 + $0x18] sm:$0xff] %v595
          %628 = vst [vmem:[#allocation2 + $0x20] sm:$0xff] %v596
          %629 = vst [vmem:[#allocation2 + $0x28] sm:$0xff] %v597
          %630 = vst [vmem:[#allocation2 + $0x30] sm:$0xff] %v598
          %631 = vst [vmem:[#allocation2 + $0x38] sm:$0xff] %v599
          %632 = vst [vmem:[#allocation2 + $0x40] sm:$0xff] %v600
          %633 = vst [vmem:[#allocation2 + $0x48] sm:$0xff] %v601
          %634 = vst [vmem:[#allocation2 + $0x50] sm:$0xff] %v602
          %635 = vst [vmem:[#allocation2 + $0x58] sm:$0xff] %v603
          %636 = vst [vmem:[#allocation2 + $0x60] sm:$0xff] %v604
          %637 = vst [vmem:[#allocation2 + $0x68] sm:$0xff] %v605
          %638 = vst [vmem:[#allocation2 + $0x70] sm:$0xff] %v606
          %639 = vst [vmem:[#allocation2 + $0x78] sm:$0xff] %v607
          %640 = vst [vmem:[#allocation2 + $0x80] sm:$0xff] %v608
          %641 = vst [vmem:[#allocation2 + $0x88] sm:$0xff] %v609
          %642 = vst [vmem:[#allocation2 + $0x90] sm:$0xff] %v610
          %643 = vst [vmem:[#allocation2 + $0x98] sm:$0xff] %v611
          %644 = vst [vmem:[#allocation2 + $0xa0] sm:$0xff] %v612
          %645 = vst [vmem:[#allocation2 + $0xa8] sm:$0xff] %v613
          %646 = vst [vmem:[#allocation2 + $0xb0] sm:$0xff] %v614
          %647 = vst [vmem:[#allocation2 + $0xb8] sm:$0xff] %v615
          %648 = vst [vmem:[#allocation2 + $0xc0] sm:$0xff] %v616
          %649 = vst [vmem:[#allocation2 + $0xc8] sm:$0xff] %v617
          %650 = vst [vmem:[#allocation2 + $0xd0] sm:$0xff] %v618
          %651 = vst [vmem:[#allocation2 + $0xd8] sm:$0xff] %v619
          %652 = vst [vmem:[#allocation2 + $0xe0] sm:$0xff] %v620
          %653 = vst [vmem:[#allocation2 + $0xe8] sm:$0xff] %v621
          %654 = vst [vmem:[#allocation2 + $0xf0] sm:$0xff] %v622
          %655 = vst [vmem:[#allocation2 + $0xf8] sm:$0xff] %v623
        $region44: #{tpu_custom_call.1} parent=39 // pred_fallthru
          _
        %v656 = vld [vmem:[#allocation2] sm:$0xff]
        %v657 = vld [vmem:[#allocation2 + $0x8] sm:$0xff]
        %v658 = vld [vmem:[#allocation2 + $0x10] sm:$0xff]
        %v659 = vld [vmem:[#allocation2 + $0x18] sm:$0xff]
        %v660 = vld [vmem:[#allocation2 + $0x20] sm:$0xff]
        %v661 = vld [vmem:[#allocation2 + $0x28] sm:$0xff]
        %v662 = vld [vmem:[#allocation2 + $0x30] sm:$0xff]
        %v663 = vld [vmem:[#allocation2 + $0x38] sm:$0xff]
        %v664 = vld [vmem:[#allocation2 + $0x40] sm:$0xff]
        %v665 = vld [vmem:[#allocation2 + $0x48] sm:$0xff]
        %v666 = vld [vmem:[#allocation2 + $0x50] sm:$0xff]
        %v667 = vld [vmem:[#allocation2 + $0x58] sm:$0xff]
        %v668 = vld [vmem:[#allocation2 + $0x60] sm:$0xff]
        %v669 = vld [vmem:[#allocation2 + $0x68] sm:$0xff]
        %v670 = vld [vmem:[#allocation2 + $0x70] sm:$0xff]
        %v671 = vld [vmem:[#allocation2 + $0x78] sm:$0xff]
        %s672 = scalar_lea.vmem [#allocation2], 128
        %v673 = vld [vmem:[%s672] sm:$0xff]
        %v674 = vld [vmem:[%s672 + $0x8] sm:$0xff]
        %v675 = vld [vmem:[%s672 + $0x10] sm:$0xff]
        %v676 = vld [vmem:[%s672 + $0x18] sm:$0xff]
        %v677 = vld [vmem:[%s672 + $0x20] sm:$0xff]
        %v678 = vld [vmem:[%s672 + $0x28] sm:$0xff]
        %v679 = vld [vmem:[%s672 + $0x30] sm:$0xff]
        %v680 = vld [vmem:[%s672 + $0x38] sm:$0xff]
        %v681 = vld [vmem:[%s672 + $0x40] sm:$0xff]
        %v682 = vld [vmem:[%s672 + $0x48] sm:$0xff]
        %v683 = vld [vmem:[%s672 + $0x50] sm:$0xff]
        %v684 = vld [vmem:[%s672 + $0x58] sm:$0xff]
        %v685 = vld [vmem:[%s672 + $0x60] sm:$0xff]
        %v686 = vld [vmem:[%s672 + $0x68] sm:$0xff]
        %v687 = vld [vmem:[%s672 + $0x70] sm:$0xff]
        %v688 = vld [vmem:[%s672 + $0x78] sm:$0xff]
        %s689 = smul.u32 %s24, 256
        %s690 = sshra.s32 %s689, 7
        %s691 = sand.u32 %s689, 127
        %s692 = smul.addr %s690, 2
        %s693 = scalar_lea.vmem %s236, %s692
        %v694 = vld [vmem:[%s693] sm:$0xf]
        %v695 = vld [vmem:[%s1] sm:$0xf]
        %v696 = vld [vmem:[%s1 + $0x4] sm:$0xf]
        %v697 = vld [vmem:[%s1 + $0x8] sm:$0xf]
        %v698 = vld [vmem:[%s1 + $0xc] sm:$0xf]
        %v699 = vld [vmem:[%s1 + $0x10] sm:$0xf]
        %v700 = vld [vmem:[%s1 + $0x14] sm:$0xf]
        %v701 = vld [vmem:[%s1 + $0x18] sm:$0xf]
        %v702 = vld [vmem:[%s1 + $0x1c] sm:$0xf]
        %v703 = vld [vmem:[%s1 + $0x20] sm:$0xf]
        %v704 = vld [vmem:[%s1 + $0x24] sm:$0xf]
        %v705 = vld [vmem:[%s1 + $0x28] sm:$0xf]
        %v706 = vld [vmem:[%s1 + $0x2c] sm:$0xf]
        %v707 = vld [vmem:[%s1 + $0x30] sm:$0xf]
        %v708 = vld [vmem:[%s1 + $0x34] sm:$0xf]
        %v709 = vld [vmem:[%s1 + $0x38] sm:$0xf]
        %v710 = vld [vmem:[%s1 + $0x3c] sm:$0xf]
        %v727 = vunpack.c.l.b16 %v695
        %v728 = vunpack.c.l.b16 %v696
        %v729 = vunpack.c.l.b16 %v697
        %v730 = vunpack.c.l.b16 %v698
        %v731 = vunpack.c.l.b16 %v699
        %v732 = vunpack.c.l.b16 %v700
        %v733 = vunpack.c.l.b16 %v701
        %v734 = vunpack.c.l.b16 %v702
        %v735 = vunpack.c.l.b16 %v703
        %v736 = vunpack.c.l.b16 %v704
        %v737 = vunpack.c.l.b16 %v705
        %v738 = vunpack.c.l.b16 %v706
        %v739 = vunpack.c.l.b16 %v707
        %v740 = vunpack.c.l.b16 %v708
        %v741 = vunpack.c.l.b16 %v709
        %v742 = vunpack.c.l.b16 %v710
        %v743 = vpack.c.b16 %v728, %v727
        %v744 = vpack.c.b16 %v730, %v729
        %v745 = vpack.c.b16 %v732, %v731
        %v746 = vpack.c.b16 %v734, %v733
        %v747 = vpack.c.b16 %v736, %v735
        %v748 = vpack.c.b16 %v738, %v737
        %v749 = vpack.c.b16 %v740, %v739
        %v750 = vpack.c.b16 %v742, %v741
        %752 = vst [vmem:[#allocation1] ss:$4 sm:$0xff] %v694
        %v753 = vld.sshfl [vmem:[#allocation1] sm:$0xff pattern:$0x73625140]
        %v754 = vld.sshfl [vmem:[#allocation1 + $0x8] sm:$0xff pattern:$0x73625140]
        %vm755 = vcmask 31744
        %v757 = vsel %vm755, %v743, 0
        %v760 = vsel %vm755, %v744, 0
        %v763 = vsel %vm755, %v745, 0
        %v766 = vsel %vm755, %v746, 0
        %v769 = vsel %vm755, %v747, 0
        %v772 = vsel %vm755, %v748, 0
        %v775 = vsel %vm755, %v749, 0
        %v778 = vsel %vm755, %v750, 0
        %vm780 = vcmask 1041408
        %v781 = vsel %vm780, %v753, 0
        %v783 = vsel %vm780, %v754, 0
        %785 = vmatpush.bf16.msra.mxu0 0
        %786 = vmatpush.bf16.msra.mxu0 0
        %787 = vmatpush.bf16.msra.mxu0 0
        %788 = vmatpush.bf16.msra.mxu0 0
        %789 = vmatpush.bf16.msra.mxu0 0
        %790 = vmatpush.bf16.msra.mxu0 0
        %791 = vmatpush.bf16.msra.mxu0 0
        %792 = vmatpush.bf16.msra.mxu0 %v781
        %793 = vmatmul.bf16.gmra.mxu0 %v757
        %v794 = vpop.f32.mrf.mxu0
        %v795 = vadd.f32 0.0, %v794
        %v796 = vpop.f32.mrf.mxu0
        %v797 = vadd.f32 0.0, %v796
        %798 = vmatmul.bf16.gmra.mxu0 %v760
        %v799 = vpop.f32.mrf.mxu0
        %v800 = vadd.f32 0.0, %v799
        %v801 = vpop.f32.mrf.mxu0
        %v802 = vadd.f32 0.0, %v801
        %803 = vmatmul.bf16.gmra.mxu0 %v763
        %v804 = vpop.f32.mrf.mxu0
        %v805 = vadd.f32 0.0, %v804
        %v806 = vpop.f32.mrf.mxu0
        %v807 = vadd.f32 0.0, %v806
        %808 = vmatmul.bf16.gmra.mxu0 %v766
        %v809 = vpop.f32.mrf.mxu0
        %v810 = vadd.f32 0.0, %v809
        %v811 = vpop.f32.mrf.mxu0
        %v812 = vadd.f32 0.0, %v811
        %813 = vmatmul.bf16.gmra.mxu0 %v769
        %v814 = vpop.f32.mrf.mxu0
        %v815 = vadd.f32 0.0, %v814
        %v816 = vpop.f32.mrf.mxu0
        %v817 = vadd.f32 0.0, %v816
        %818 = vmatmul.bf16.gmra.mxu0 %v772
        %v819 = vpop.f32.mrf.mxu0
        %v820 = vadd.f32 0.0, %v819
        %v821 = vpop.f32.mrf.mxu0
        %v822 = vadd.f32 0.0, %v821
        %823 = vmatmul.bf16.gmra.mxu0 %v775
        %v824 = vpop.f32.mrf.mxu0
        %v825 = vadd.f32 0.0, %v824
        %v826 = vpop.f32.mrf.mxu0
        %v827 = vadd.f32 0.0, %v826
        %828 = vmatmul.bf16.gmra.mxu0 %v778
        %v829 = vpop.f32.mrf.mxu0
        %v830 = vadd.f32 0.0, %v829
        %v831 = vpop.f32.mrf.mxu0
        %v832 = vadd.f32 0.0, %v831
        %833 = vdwg.mxu0
        %834 = vmatpush.bf16.msra.mxu0 0
        %835 = vmatpush.bf16.msra.mxu0 0
        %836 = vmatpush.bf16.msra.mxu0 0
        %837 = vmatpush.bf16.msra.mxu0 0
        %838 = vmatpush.bf16.msra.mxu0 0
        %839 = vmatpush.bf16.msra.mxu0 0
        %840 = vmatpush.bf16.msra.mxu0 0
        %841 = vmatpush.bf16.msra.mxu0 %v783
        %842 = vmatmul.bf16.gmra.mxu0 %v757
        %v843 = vpop.f32.mrf.mxu0
        %v844 = vadd.f32 0.0, %v843
        %v845 = vpop.f32.mrf.mxu0
        %v846 = vadd.f32 0.0, %v845
        %847 = vmatmul.bf16.gmra.mxu0 %v760
        %v848 = vpop.f32.mrf.mxu0
        %v849 = vadd.f32 0.0, %v848
        %v850 = vpop.f32.mrf.mxu0
        %v851 = vadd.f32 0.0, %v850
        %852 = vmatmul.bf16.gmra.mxu0 %v763
        %v853 = vpop.f32.mrf.mxu0
        %v854 = vadd.f32 0.0, %v853
        %v855 = vpop.f32.mrf.mxu0
        %v856 = vadd.f32 0.0, %v855
        %857 = vmatmul.bf16.gmra.mxu0 %v766
        %v858 = vpop.f32.mrf.mxu0
        %v859 = vadd.f32 0.0, %v858
        %v860 = vpop.f32.mrf.mxu0
        %v861 = vadd.f32 0.0, %v860
        %862 = vmatmul.bf16.gmra.mxu0 %v769
        %v863 = vpop.f32.mrf.mxu0
        %v864 = vadd.f32 0.0, %v863
        %v865 = vpop.f32.mrf.mxu0
        %v866 = vadd.f32 0.0, %v865
        %867 = vmatmul.bf16.gmra.mxu0 %v772
        %v868 = vpop.f32.mrf.mxu0
        %v869 = vadd.f32 0.0, %v868
        %v870 = vpop.f32.mrf.mxu0
        %v871 = vadd.f32 0.0, %v870
        %872 = vmatmul.bf16.gmra.mxu0 %v775
        %v873 = vpop.f32.mrf.mxu0
        %v874 = vadd.f32 0.0, %v873
        %v875 = vpop.f32.mrf.mxu0
        %v876 = vadd.f32 0.0, %v875
        %877 = vmatmul.bf16.gmra.mxu0 %v778
        %v878 = vpop.f32.mrf.mxu0
        %v879 = vadd.f32 0.0, %v878
        %v880 = vpop.f32.mrf.mxu0
        %v881 = vadd.f32 0.0, %v880
        %882 = vdwg.mxu0
        %883 = vxpose.xlu0.b32.start [1/16] %v795, 128
        %884 = vxpose.xlu0.b32.cont [2/16] %v797, 128
        %885 = vxpose.xlu0.b32.cont [3/16] %v800, 128
        %886 = vxpose.xlu0.b32.cont [4/16] %v802, 128
        %887 = vxpose.xlu0.b32.cont [5/16] 0.0, 128
        %888 = vxpose.xlu0.b32.cont [6/16] 0.0, 128
        %889 = vxpose.xlu0.b32.cont [7/16] 0.0, 128
        %890 = vxpose.xlu0.b32.cont [8/16] 0.0, 128
        %891 = vxpose.xlu0.b32.cont [9/16] 0.0, 128
        %892 = vxpose.xlu0.b32.cont [10/16] 0.0, 128
        %893 = vxpose.xlu0.b32.cont [11/16] 0.0, 128
        %894 = vxpose.xlu0.b32.cont [12/16] 0.0, 128
        %895 = vxpose.xlu0.b32.cont [13/16] 0.0, 128
        %896 = vxpose.xlu0.b32.cont [14/16] 0.0, 128
        %897 = vxpose.xlu0.b32.cont [15/16] 0.0, 128
        %898 = vxpose.xlu0.b32.end [16/16] 0.0, 128
        %v899 = vpop.trf.xlu0
        %v900 = vpop.trf.xlu0
        %v901 = vpop.trf.xlu0
        %v902 = vpop.trf.xlu0
        %v903 = vpop.trf.xlu0
        %v904 = vpop.trf.xlu0
        %v905 = vpop.trf.xlu0
        %v906 = vpop.trf.xlu0
        %v907 = vpop.trf.xlu0
        %v908 = vpop.trf.xlu0
        %v909 = vpop.trf.xlu0
        %v910 = vpop.trf.xlu0
        %v911 = vpop.trf.xlu0
        %v912 = vpop.trf.xlu0
        %v913 = vpop.trf.xlu0
        %v914 = vpop.trf.xlu0
        %915 = vxpose.xlu0.b32.start [1/16] %v844, 128
        %916 = vxpose.xlu0.b32.cont [2/16] %v846, 128
        %917 = vxpose.xlu0.b32.cont [3/16] %v849, 128
        %918 = vxpose.xlu0.b32.cont [4/16] %v851, 128
        %919 = vxpose.xlu0.b32.cont [5/16] 0.0, 128
        %920 = vxpose.xlu0.b32.cont [6/16] 0.0, 128
        %921 = vxpose.xlu0.b32.cont [7/16] 0.0, 128
        %922 = vxpose.xlu0.b32.cont [8/16] 0.0, 128
        %923 = vxpose.xlu0.b32.cont [9/16] 0.0, 128
        %924 = vxpose.xlu0.b32.cont [10/16] 0.0, 128
        %925 = vxpose.xlu0.b32.cont [11/16] 0.0, 128
        %926 = vxpose.xlu0.b32.cont [12/16] 0.0, 128
        %927 = vxpose.xlu0.b32.cont [13/16] 0.0, 128
        %928 = vxpose.xlu0.b32.cont [14/16] 0.0, 128
        %929 = vxpose.xlu0.b32.cont [15/16] 0.0, 128
        %930 = vxpose.xlu0.b32.end [16/16] 0.0, 128
        %v931 = vpop.trf.xlu0
        %v932 = vpop.trf.xlu0
        %v933 = vpop.trf.xlu0
        %v934 = vpop.trf.xlu0
        %v935 = vpop.trf.xlu0
        %v936 = vpop.trf.xlu0
        %v937 = vpop.trf.xlu0
        %v938 = vpop.trf.xlu0
        %v939 = vpop.trf.xlu0
        %v940 = vpop.trf.xlu0
        %v941 = vpop.trf.xlu0
        %v942 = vpop.trf.xlu0
        %v943 = vpop.trf.xlu0
        %v944 = vpop.trf.xlu0
        %v945 = vpop.trf.xlu0
        %v946 = vpop.trf.xlu0
        %947 = vxpose.xlu0.b32.start [1/16] %v805, 128
        %948 = vxpose.xlu0.b32.cont [2/16] %v807, 128
        %949 = vxpose.xlu0.b32.cont [3/16] %v810, 128
        %950 = vxpose.xlu0.b32.cont [4/16] %v812, 128
        %951 = vxpose.xlu0.b32.cont [5/16] 0.0, 128
        %952 = vxpose.xlu0.b32.cont [6/16] 0.0, 128
        %953 = vxpose.xlu0.b32.cont [7/16] 0.0, 128
        %954 = vxpose.xlu0.b32.cont [8/16] 0.0, 128
        %955 = vxpose.xlu0.b32.cont [9/16] 0.0, 128
        %956 = vxpose.xlu0.b32.cont [10/16] 0.0, 128
        %957 = vxpose.xlu0.b32.cont [11/16] 0.0, 128
        %958 = vxpose.xlu0.b32.cont [12/16] 0.0, 128
        %959 = vxpose.xlu0.b32.cont [13/16] 0.0, 128
        %960 = vxpose.xlu0.b32.cont [14/16] 0.0, 128
        %961 = vxpose.xlu0.b32.cont [15/16] 0.0, 128
        %962 = vxpose.xlu0.b32.end [16/16] 0.0, 128
        %v963 = vpop.trf.xlu0
        %v964 = vpop.trf.xlu0
        %v965 = vpop.trf.xlu0
        %v966 = vpop.trf.xlu0
        %v967 = vpop.trf.xlu0
        %v968 = vpop.trf.xlu0
        %v969 = vpop.trf.xlu0
        %v970 = vpop.trf.xlu0
        %v971 = vpop.trf.xlu0
        %v972 = vpop.trf.xlu0
        %v973 = vpop.trf.xlu0
        %v974 = vpop.trf.xlu0
        %v975 = vpop.trf.xlu0
        %v976 = vpop.trf.xlu0
        %v977 = vpop.trf.xlu0
        %v978 = vpop.trf.xlu0
        %979 = vxpose.xlu0.b32.start [1/16] %v854, 128
        %980 = vxpose.xlu0.b32.cont [2/16] %v856, 128
        %981 = vxpose.xlu0.b32.cont [3/16] %v859, 128
        %982 = vxpose.xlu0.b32.cont [4/16] %v861, 128
        %983 = vxpose.xlu0.b32.cont [5/16] 0.0, 128
        %984 = vxpose.xlu0.b32.cont [6/16] 0.0, 128
        %985 = vxpose.xlu0.b32.cont [7/16] 0.0, 128
        %986 = vxpose.xlu0.b32.cont [8/16] 0.0, 128
        %987 = vxpose.xlu0.b32.cont [9/16] 0.0, 128
        %988 = vxpose.xlu0.b32.cont [10/16] 0.0, 128
        %989 = vxpose.xlu0.b32.cont [11/16] 0.0, 128
        %990 = vxpose.xlu0.b32.cont [12/16] 0.0, 128
        %991 = vxpose.xlu0.b32.cont [13/16] 0.0, 128
        %992 = vxpose.xlu0.b32.cont [14/16] 0.0, 128
        %993 = vxpose.xlu0.b32.cont [15/16] 0.0, 128
        %994 = vxpose.xlu0.b32.end [16/16] 0.0, 128
        %v995 = vpop.trf.xlu0
        %v996 = vpop.trf.xlu0
        %v997 = vpop.trf.xlu0
        %v998 = vpop.trf.xlu0
        %v999 = vpop.trf.xlu0
        %v1000 = vpop.trf.xlu0
        %v1001 = vpop.trf.xlu0
        %v1002 = vpop.trf.xlu0
        %v1003 = vpop.trf.xlu0
        %v1004 = vpop.trf.xlu0
        %v1005 = vpop.trf.xlu0
        %v1006 = vpop.trf.xlu0
        %v1007 = vpop.trf.xlu0
        %v1008 = vpop.trf.xlu0
        %v1009 = vpop.trf.xlu0
        %v1010 = vpop.trf.xlu0
        %1011 = vxpose.xlu0.b32.start [1/16] %v815, 128
        %1012 = vxpose.xlu0.b32.cont [2/16] %v817, 128
        %1013 = vxpose.xlu0.b32.cont [3/16] %v820, 128
        %1014 = vxpose.xlu0.b32.cont [4/16] %v822, 128
        %1015 = vxpose.xlu0.b32.cont [5/16] 0.0, 128
        %1016 = vxpose.xlu0.b32.cont [6/16] 0.0, 128
        %1017 = vxpose.xlu0.b32.cont [7/16] 0.0, 128
        %1018 = vxpose.xlu0.b32.cont [8/16] 0.0, 128
        %1019 = vxpose.xlu0.b32.cont [9/16] 0.0, 128
        %1020 = vxpose.xlu0.b32.cont [10/16] 0.0, 128
        %1021 = vxpose.xlu0.b32.cont [11/16] 0.0, 128
        %1022 = vxpose.xlu0.b32.cont [12/16] 0.0, 128
        %1023 = vxpose.xlu0.b32.cont [13/16] 0.0, 128
        %1024 = vxpose.xlu0.b32.cont [14/16] 0.0, 128
        %1025 = vxpose.xlu0.b32.cont [15/16] 0.0, 128
        %1026 = vxpose.xlu0.b32.end [16/16] 0.0, 128
        %v1027 = vpop.trf.xlu0
        %v1028 = vpop.trf.xlu0
        %v1029 = vpop.trf.xlu0
        %v1030 = vpop.trf.xlu0
        %v1031 = vpop.trf.xlu0
        %v1032 = vpop.trf.xlu0
        %v1033 = vpop.trf.xlu0
        %v1034 = vpop.trf.xlu0
        %v1035 = vpop.trf.xlu0
        %v1036 = vpop.trf.xlu0
        %v1037 = vpop.trf.xlu0
        %v1038 = vpop.trf.xlu0
        %v1039 = vpop.trf.xlu0
        %v1040 = vpop.trf.xlu0
        %v1041 = vpop.trf.xlu0
        %v1042 = vpop.trf.xlu0
        %1043 = vxpose.xlu0.b32.start [1/16] %v864, 128
        %1044 = vxpose.xlu0.b32.cont [2/16] %v866, 128
        %1045 = vxpose.xlu0.b32.cont [3/16] %v869, 128
        %1046 = vxpose.xlu0.b32.cont [4/16] %v871, 128
        %1047 = vxpose.xlu0.b32.cont [5/16] 0.0, 128
        %1048 = vxpose.xlu0.b32.cont [6/16] 0.0, 128
        %1049 = vxpose.xlu0.b32.cont [7/16] 0.0, 128
        %1050 = vxpose.xlu0.b32.cont [8/16] 0.0, 128
        %1051 = vxpose.xlu0.b32.cont [9/16] 0.0, 128
        %1052 = vxpose.xlu0.b32.cont [10/16] 0.0, 128
        %1053 = vxpose.xlu0.b32.cont [11/16] 0.0, 128
        %1054 = vxpose.xlu0.b32.cont [12/16] 0.0, 128
        %1055 = vxpose.xlu0.b32.cont [13/16] 0.0, 128
        %1056 = vxpose.xlu0.b32.cont [14/16] 0.0, 128
        %1057 = vxpose.xlu0.b32.cont [15/16] 0.0, 128
        %1058 = vxpose.xlu0.b32.end [16/16] 0.0, 128
        %v1059 = vpop.trf.xlu0
        %v1060 = vpop.trf.xlu0
        %v1061 = vpop.trf.xlu0
        %v1062 = vpop.trf.xlu0
        %v1063 = vpop.trf.xlu0
        %v1064 = vpop.trf.xlu0
        %v1065 = vpop.trf.xlu0
        %v1066 = vpop.trf.xlu0
        %v1067 = vpop.trf.xlu0
        %v1068 = vpop.trf.xlu0
        %v1069 = vpop.trf.xlu0
        %v1070 = vpop.trf.xlu0
        %v1071 = vpop.trf.xlu0
        %v1072 = vpop.trf.xlu0
        %v1073 = vpop.trf.xlu0
        %v1074 = vpop.trf.xlu0
        %1075 = vxpose.xlu0.b32.start [1/16] %v825, 128
        %1076 = vxpose.xlu0.b32.cont [2/16] %v827, 128
        %1077 = vxpose.xlu0.b32.cont [3/16] %v830, 128
        %1078 = vxpose.xlu0.b32.cont [4/16] %v832, 128
        %1079 = vxpose.xlu0.b32.cont [5/16] 0.0, 128
        %1080 = vxpose.xlu0.b32.cont [6/16] 0.0, 128
        %1081 = vxpose.xlu0.b32.cont [7/16] 0.0, 128
        %1082 = vxpose.xlu0.b32.cont [8/16] 0.0, 128
        %1083 = vxpose.xlu0.b32.cont [9/16] 0.0, 128
        %1084 = vxpose.xlu0.b32.cont [10/16] 0.0, 128
        %1085 = vxpose.xlu0.b32.cont [11/16] 0.0, 128
        %1086 = vxpose.xlu0.b32.cont [12/16] 0.0, 128
        %1087 = vxpose.xlu0.b32.cont [13/16] 0.0, 128
        %1088 = vxpose.xlu0.b32.cont [14/16] 0.0, 128
        %1089 = vxpose.xlu0.b32.cont [15/16] 0.0, 128
        %1090 = vxpose.xlu0.b32.end [16/16] 0.0, 128
        %v1091 = vpop.trf.xlu0
        %v1092 = vpop.trf.xlu0
        %v1093 = vpop.trf.xlu0
        %v1094 = vpop.trf.xlu0
        %v1095 = vpop.trf.xlu0
        %v1096 = vpop.trf.xlu0
        %v1097 = vpop.trf.xlu0
        %v1098 = vpop.trf.xlu0
        %v1099 = vpop.trf.xlu0
        %v1100 = vpop.trf.xlu0
        %v1101 = vpop.trf.xlu0
        %v1102 = vpop.trf.xlu0
        %v1103 = vpop.trf.xlu0
        %v1104 = vpop.trf.xlu0
        %v1105 = vpop.trf.xlu0
        %v1106 = vpop.trf.xlu0
        %1107 = vxpose.xlu0.b32.start [1/16] %v874, 128
        %1108 = vxpose.xlu0.b32.cont [2/16] %v876, 128
        %1109 = vxpose.xlu0.b32.cont [3/16] %v879, 128
        %1110 = vxpose.xlu0.b32.cont [4/16] %v881, 128
        %1111 = vxpose.xlu0.b32.cont [5/16] 0.0, 128
        %1112 = vxpose.xlu0.b32.cont [6/16] 0.0, 128
        %1113 = vxpose.xlu0.b32.cont [7/16] 0.0, 128
        %1114 = vxpose.xlu0.b32.cont [8/16] 0.0, 128
        %1115 = vxpose.xlu0.b32.cont [9/16] 0.0, 128
        %1116 = vxpose.xlu0.b32.cont [10/16] 0.0, 128
        %1117 = vxpose.xlu0.b32.cont [11/16] 0.0, 128
        %1118 = vxpose.xlu0.b32.cont [12/16] 0.0, 128
        %1119 = vxpose.xlu0.b32.cont [13/16] 0.0, 128
        %1120 = vxpose.xlu0.b32.cont [14/16] 0.0, 128
        %1121 = vxpose.xlu0.b32.cont [15/16] 0.0, 128
        %1122 = vxpose.xlu0.b32.end [16/16] 0.0, 128
        %v1123 = vpop.trf.xlu0
        %v1124 = vpop.trf.xlu0
        %v1125 = vpop.trf.xlu0
        %v1126 = vpop.trf.xlu0
        %v1127 = vpop.trf.xlu0
        %v1128 = vpop.trf.xlu0
        %v1129 = vpop.trf.xlu0
        %v1130 = vpop.trf.xlu0
        %v1131 = vpop.trf.xlu0
        %v1132 = vpop.trf.xlu0
        %v1133 = vpop.trf.xlu0
        %v1134 = vpop.trf.xlu0
        %v1135 = vpop.trf.xlu0
        %v1136 = vpop.trf.xlu0
        %v1137 = vpop.trf.xlu0
        %v1138 = vpop.trf.xlu0
        %v1139 = vpack.c.bf16 %v899, %v899
        %v1140 = vpack.c.bf16 %v900, %v900
        %v1141 = vpack.c.bf16 %v901, %v901
        %v1142 = vpack.c.bf16 %v902, %v902
        %v1143 = vpack.c.bf16 %v903, %v903
        %v1144 = vpack.c.bf16 %v904, %v904
        %v1145 = vpack.c.bf16 %v905, %v905
        %v1146 = vpack.c.bf16 %v906, %v906
        %v1147 = vpack.c.bf16 %v907, %v907
        %v1148 = vpack.c.bf16 %v908, %v908
        %v1149 = vpack.c.bf16 %v909, %v909
        %v1150 = vpack.c.bf16 %v910, %v910
        %v1151 = vpack.c.bf16 %v911, %v911
        %v1152 = vpack.c.bf16 %v912, %v912
        %v1153 = vpack.c.bf16 %v913, %v913
        %v1154 = vpack.c.bf16 %v914, %v914
        %v1155 = vpack.c.bf16 %v931, %v931
        %v1156 = vpack.c.bf16 %v932, %v932
        %v1157 = vpack.c.bf16 %v933, %v933
        %v1158 = vpack.c.bf16 %v934, %v934
        %v1159 = vpack.c.bf16 %v935, %v935
        %v1160 = vpack.c.bf16 %v936, %v936
        %v1161 = vpack.c.bf16 %v937, %v937
        %v1162 = vpack.c.bf16 %v938, %v938
        %v1163 = vpack.c.bf16 %v939, %v939
        %v1164 = vpack.c.bf16 %v940, %v940
        %v1165 = vpack.c.bf16 %v941, %v941
        %v1166 = vpack.c.bf16 %v942, %v942
        %v1167 = vpack.c.bf16 %v943, %v943
        %v1168 = vpack.c.bf16 %v944, %v944
        %v1169 = vpack.c.bf16 %v945, %v945
        %v1170 = vpack.c.bf16 %v946, %v946
        %v1171 = vpack.c.bf16 %v963, %v963
        %v1172 = vpack.c.bf16 %v964, %v964
        %v1173 = vpack.c.bf16 %v965, %v965
        %v1174 = vpack.c.bf16 %v966, %v966
        %v1175 = vpack.c.bf16 %v967, %v967
        %v1176 = vpack.c.bf16 %v968, %v968
        %v1177 = vpack.c.bf16 %v969, %v969
        %v1178 = vpack.c.bf16 %v970, %v970
        %v1179 = vpack.c.bf16 %v971, %v971
        %v1180 = vpack.c.bf16 %v972, %v972
        %v1181 = vpack.c.bf16 %v973, %v973
        %v1182 = vpack.c.bf16 %v974, %v974
        %v1183 = vpack.c.bf16 %v975, %v975
        %v1184 = vpack.c.bf16 %v976, %v976
        %v1185 = vpack.c.bf16 %v977, %v977
        %v1186 = vpack.c.bf16 %v978, %v978
        %v1187 = vpack.c.bf16 %v995, %v995
        %v1188 = vpack.c.bf16 %v996, %v996
        %v1189 = vpack.c.bf16 %v997, %v997
        %v1190 = vpack.c.bf16 %v998, %v998
        %v1191 = vpack.c.bf16 %v999, %v999
        %v1192 = vpack.c.bf16 %v1000, %v1000
        %v1193 = vpack.c.bf16 %v1001, %v1001
        %v1194 = vpack.c.bf16 %v1002, %v1002
        %v1195 = vpack.c.bf16 %v1003, %v1003
        %v1196 = vpack.c.bf16 %v1004, %v1004
        %v1197 = vpack.c.bf16 %v1005, %v1005
        %v1198 = vpack.c.bf16 %v1006, %v1006
        %v1199 = vpack.c.bf16 %v1007, %v1007
        %v1200 = vpack.c.bf16 %v1008, %v1008
        %v1201 = vpack.c.bf16 %v1009, %v1009
        %v1202 = vpack.c.bf16 %v1010, %v1010
        %v1203 = vpack.c.bf16 %v1027, %v1027
        %v1204 = vpack.c.bf16 %v1028, %v1028
        %v1205 = vpack.c.bf16 %v1029, %v1029
        %v1206 = vpack.c.bf16 %v1030, %v1030
        %v1207 = vpack.c.bf16 %v1031, %v1031
        %v1208 = vpack.c.bf16 %v1032, %v1032
        %v1209 = vpack.c.bf16 %v1033, %v1033
        %v1210 = vpack.c.bf16 %v1034, %v1034
        %v1211 = vpack.c.bf16 %v1035, %v1035
        %v1212 = vpack.c.bf16 %v1036, %v1036
        %v1213 = vpack.c.bf16 %v1037, %v1037
        %v1214 = vpack.c.bf16 %v1038, %v1038
        %v1215 = vpack.c.bf16 %v1039, %v1039
        %v1216 = vpack.c.bf16 %v1040, %v1040
        %v1217 = vpack.c.bf16 %v1041, %v1041
        %v1218 = vpack.c.bf16 %v1042, %v1042
        %v1219 = vpack.c.bf16 %v1059, %v1059
        %v1220 = vpack.c.bf16 %v1060, %v1060
        %v1221 = vpack.c.bf16 %v1061, %v1061
        %v1222 = vpack.c.bf16 %v1062, %v1062
        %v1223 = vpack.c.bf16 %v1063, %v1063
        %v1224 = vpack.c.bf16 %v1064, %v1064
        %v1225 = vpack.c.bf16 %v1065, %v1065
        %v1226 = vpack.c.bf16 %v1066, %v1066
        %v1227 = vpack.c.bf16 %v1067, %v1067
        %v1228 = vpack.c.bf16 %v1068, %v1068
        %v1229 = vpack.c.bf16 %v1069, %v1069
        %v1230 = vpack.c.bf16 %v1070, %v1070
        %v1231 = vpack.c.bf16 %v1071, %v1071
        %v1232 = vpack.c.bf16 %v1072, %v1072
        %v1233 = vpack.c.bf16 %v1073, %v1073
        %v1234 = vpack.c.bf16 %v1074, %v1074
        %v1235 = vpack.c.bf16 %v1091, %v1091
        %v1236 = vpack.c.bf16 %v1092, %v1092
        %v1237 = vpack.c.bf16 %v1093, %v1093
        %v1238 = vpack.c.bf16 %v1094, %v1094
        %v1239 = vpack.c.bf16 %v1095, %v1095
        %v1240 = vpack.c.bf16 %v1096, %v1096
        %v1241 = vpack.c.bf16 %v1097, %v1097
        %v1242 = vpack.c.bf16 %v1098, %v1098
        %v1243 = vpack.c.bf16 %v1099, %v1099
        %v1244 = vpack.c.bf16 %v1100, %v1100
        %v1245 = vpack.c.bf16 %v1101, %v1101
        %v1246 = vpack.c.bf16 %v1102, %v1102
        %v1247 = vpack.c.bf16 %v1103, %v1103
        %v1248 = vpack.c.bf16 %v1104, %v1104
        %v1249 = vpack.c.bf16 %v1105, %v1105
        %v1250 = vpack.c.bf16 %v1106, %v1106
        %v1251 = vpack.c.bf16 %v1123, %v1123
        %v1252 = vpack.c.bf16 %v1124, %v1124
        %v1253 = vpack.c.bf16 %v1125, %v1125
        %v1254 = vpack.c.bf16 %v1126, %v1126
        %v1255 = vpack.c.bf16 %v1127, %v1127
        %v1256 = vpack.c.bf16 %v1128, %v1128
        %v1257 = vpack.c.bf16 %v1129, %v1129
        %v1258 = vpack.c.bf16 %v1130, %v1130
        %v1259 = vpack.c.bf16 %v1131, %v1131
        %v1260 = vpack.c.bf16 %v1132, %v1132
        %v1261 = vpack.c.bf16 %v1133, %v1133
        %v1262 = vpack.c.bf16 %v1134, %v1134
        %v1263 = vpack.c.bf16 %v1135, %v1135
        %v1264 = vpack.c.bf16 %v1136, %v1136
        %v1265 = vpack.c.bf16 %v1137, %v1137
        %v1266 = vpack.c.bf16 %v1138, %v1138
        %v1299 = vunpack.c.l.b16 %v1139
        %v1300 = vunpack.c.l.b16 %v1140
        %v1301 = vunpack.c.l.b16 %v1141
        %v1302 = vunpack.c.l.b16 %v1142
        %v1303 = vunpack.c.l.b16 %v1143
        %v1304 = vunpack.c.l.b16 %v1144
        %v1305 = vunpack.c.l.b16 %v1145
        %v1306 = vunpack.c.l.b16 %v1146
        %v1307 = vunpack.c.l.b16 %v1147
        %v1308 = vunpack.c.l.b16 %v1148
        %v1309 = vunpack.c.l.b16 %v1149
        %v1310 = vunpack.c.l.b16 %v1150
        %v1311 = vunpack.c.l.b16 %v1151
        %v1312 = vunpack.c.l.b16 %v1152
        %v1313 = vunpack.c.l.b16 %v1153
        %v1314 = vunpack.c.l.b16 %v1154
        %v1315 = vunpack.c.l.b16 %v1155
        %v1316 = vunpack.c.l.b16 %v1156
        %v1317 = vunpack.c.l.b16 %v1157
        %v1318 = vunpack.c.l.b16 %v1158
        %v1319 = vunpack.c.l.b16 %v1159
        %v1320 = vunpack.c.l.b16 %v1160
        %v1321 = vunpack.c.l.b16 %v1161
        %v1322 = vunpack.c.l.b16 %v1162
        %v1323 = vunpack.c.l.b16 %v1163
        %v1324 = vunpack.c.l.b16 %v1164
        %v1325 = vunpack.c.l.b16 %v1165
        %v1326 = vunpack.c.l.b16 %v1166
        %v1327 = vunpack.c.l.b16 %v1167
        %v1328 = vunpack.c.l.b16 %v1168
        %v1329 = vunpack.c.l.b16 %v1169
        %v1330 = vunpack.c.l.b16 %v1170
        %v1331 = vpack.c.b16 %v1300, %v1299
        %v1332 = vpack.c.b16 %v1302, %v1301
        %v1333 = vpack.c.b16 %v1304, %v1303
        %v1334 = vpack.c.b16 %v1306, %v1305
        %v1335 = vpack.c.b16 %v1308, %v1307
        %v1336 = vpack.c.b16 %v1310, %v1309
        %v1337 = vpack.c.b16 %v1312, %v1311
        %v1338 = vpack.c.b16 %v1314, %v1313
        %v1339 = vpack.c.b16 %v1316, %v1315
        %v1340 = vpack.c.b16 %v1318, %v1317
        %v1341 = vpack.c.b16 %v1320, %v1319
        %v1342 = vpack.c.b16 %v1322, %v1321
        %v1343 = vpack.c.b16 %v1324, %v1323
        %v1344 = vpack.c.b16 %v1326, %v1325
        %v1345 = vpack.c.b16 %v1328, %v1327
        %v1346 = vpack.c.b16 %v1330, %v1329
        %v1351 = vunpack.c.l.b16 %v656
        %v1352 = vunpack.c.h.b16 %v656
        %v1353 = vunpack.c.l.b16 %v657
        %v1354 = vunpack.c.h.b16 %v657
        %v1355 = vunpack.c.l.b16 %v658
        %v1356 = vunpack.c.h.b16 %v658
        %v1357 = vunpack.c.l.b16 %v659
        %v1358 = vunpack.c.h.b16 %v659
        %v1359 = vpack.c.b16 %v1353, %v1351
        %v1360 = vpack.c.b16 %v1354, %v1352
        %v1361 = vpack.c.b16 %v1357, %v1355
        %v1362 = vpack.c.b16 %v1358, %v1356
        %vm1367 = vcmask 261120
        %v1369 = vsel %vm1367, %v1331, 0
        %v1372 = vsel %vm1367, %v1332, 0
        %v1375 = vsel %vm1367, %v1333, 0
        %v1378 = vsel %vm1367, %v1334, 0
        %v1381 = vsel %vm1367, %v1335, 0
        %v1384 = vsel %vm1367, %v1336, 0
        %v1387 = vsel %vm1367, %v1337, 0
        %v1390 = vsel %vm1367, %v1338, 0
        %v1393 = vsel %vm1367, %v1339, 0
        %v1396 = vsel %vm1367, %v1340, 0
        %v1399 = vsel %vm1367, %v1341, 0
        %v1402 = vsel %vm1367, %v1342, 0
        %v1405 = vsel %vm1367, %v1343, 0
        %v1408 = vsel %vm1367, %v1344, 0
        %v1411 = vsel %vm1367, %v1345, 0
        %v1414 = vsel %vm1367, %v1346, 0
        %1416 = vmatpush.bf16.msra.mxu0 0
        %1417 = vmatpush.bf16.msra.mxu0 0
        %1418 = vmatpush.bf16.msra.mxu0 0
        %1419 = vmatpush.bf16.msra.mxu0 0
        %1420 = vmatpush.bf16.msra.mxu0 0
        %1421 = vmatpush.bf16.msra.mxu0 0
        %1422 = vmatpush.bf16.msra.mxu0 %v1361
        %1423 = vmatpush.bf16.msra.mxu0 %v1359
        %1424 = vmatmul.bf16.gmra.mxu0 %v1369
        %v1425 = vpop.f32.mrf.mxu0
        %v1426 = vadd.f32 0.0, %v1425
        %v1427 = vpop.f32.mrf.mxu0
        %v1428 = vadd.f32 0.0, %v1427
        %1429 = vmatmul.bf16.gmra.mxu0 %v1372
        %v1430 = vpop.f32.mrf.mxu0
        %v1431 = vadd.f32 0.0, %v1430
        %v1432 = vpop.f32.mrf.mxu0
        %v1433 = vadd.f32 0.0, %v1432
        %1434 = vmatmul.bf16.gmra.mxu0 %v1375
        %v1435 = vpop.f32.mrf.mxu0
        %v1436 = vadd.f32 0.0, %v1435
        %v1437 = vpop.f32.mrf.mxu0
        %v1438 = vadd.f32 0.0, %v1437
        %1439 = vmatmul.bf16.gmra.mxu0 %v1378
        %v1440 = vpop.f32.mrf.mxu0
        %v1441 = vadd.f32 0.0, %v1440
        %v1442 = vpop.f32.mrf.mxu0
        %v1443 = vadd.f32 0.0, %v1442
        %1444 = vmatmul.bf16.gmra.mxu0 %v1381
        %v1445 = vpop.f32.mrf.mxu0
        %v1446 = vadd.f32 0.0, %v1445
        %v1447 = vpop.f32.mrf.mxu0
        %v1448 = vadd.f32 0.0, %v1447
        %1449 = vmatmul.bf16.gmra.mxu0 %v1384
        %v1450 = vpop.f32.mrf.mxu0
        %v1451 = vadd.f32 0.0, %v1450
        %v1452 = vpop.f32.mrf.mxu0
        %v1453 = vadd.f32 0.0, %v1452
        %1454 = vmatmul.bf16.gmra.mxu0 %v1387
        %v1455 = vpop.f32.mrf.mxu0
        %v1456 = vadd.f32 0.0, %v1455
        %v1457 = vpop.f32.mrf.mxu0
        %v1458 = vadd.f32 0.0, %v1457
        %1459 = vmatmul.bf16.gmra.mxu0 %v1390
        %v1460 = vpop.f32.mrf.mxu0
        %v1461 = vadd.f32 0.0, %v1460
        %v1462 = vpop.f32.mrf.mxu0
        %v1463 = vadd.f32 0.0, %v1462
        %1464 = vmatmul.bf16.gmra.mxu0 %v1393
        %v1465 = vpop.f32.mrf.mxu0
        %v1466 = vadd.f32 0.0, %v1465
        %v1467 = vpop.f32.mrf.mxu0
        %v1468 = vadd.f32 0.0, %v1467
        %1469 = vmatmul.bf16.gmra.mxu0 %v1396
        %v1470 = vpop.f32.mrf.mxu0
        %v1471 = vadd.f32 0.0, %v1470
        %v1472 = vpop.f32.mrf.mxu0
        %v1473 = vadd.f32 0.0, %v1472
        %1474 = vmatmul.bf16.gmra.mxu0 %v1399
        %v1475 = vpop.f32.mrf.mxu0
        %v1476 = vadd.f32 0.0, %v1475
        %v1477 = vpop.f32.mrf.mxu0
        %v1478 = vadd.f32 0.0, %v1477
        %1479 = vmatmul.bf16.gmra.mxu0 %v1402
        %v1480 = vpop.f32.mrf.mxu0
        %v1481 = vadd.f32 0.0, %v1480
        %v1482 = vpop.f32.mrf.mxu0
        %v1483 = vadd.f32 0.0, %v1482
        %1484 = vmatmul.bf16.gmra.mxu0 %v1405
        %v1485 = vpop.f32.mrf.mxu0
        %v1486 = vadd.f32 0.0, %v1485
        %v1487 = vpop.f32.mrf.mxu0
        %v1488 = vadd.f32 0.0, %v1487
        %1489 = vmatmul.bf16.gmra.mxu0 %v1408
        %v1490 = vpop.f32.mrf.mxu0
        %v1491 = vadd.f32 0.0, %v1490
        %v1492 = vpop.f32.mrf.mxu0
        %v1493 = vadd.f32 0.0, %v1492
        %1494 = vmatmul.bf16.gmra.mxu0 %v1411
        %v1495 = vpop.f32.mrf.mxu0
        %v1496 = vadd.f32 0.0, %v1495
        %v1497 = vpop.f32.mrf.mxu0
        %v1498 = vadd.f32 0.0, %v1497
        %1499 = vmatmul.bf16.gmra.mxu0 %v1414
        %v1500 = vpop.f32.mrf.mxu0
        %v1501 = vadd.f32 0.0, %v1500
        %v1502 = vpop.f32.mrf.mxu0
        %v1503 = vadd.f32 0.0, %v1502
        %1504 = vdwg.mxu0
        %1505 = vmatpush.bf16.msra.mxu0 0
        %1506 = vmatpush.bf16.msra.mxu0 0
        %1507 = vmatpush.bf16.msra.mxu0 0
        %1508 = vmatpush.bf16.msra.mxu0 0
        %1509 = vmatpush.bf16.msra.mxu0 0
        %1510 = vmatpush.bf16.msra.mxu0 0
        %1511 = vmatpush.bf16.msra.mxu0 %v1362
        %1512 = vmatpush.bf16.msra.mxu0 %v1360
        %1513 = vmatmul.bf16.gmra.mxu0 %v1369
        %v1514 = vpop.f32.mrf.mxu0
        %v1515 = vadd.f32 0.0, %v1514
        %v1516 = vpop.f32.mrf.mxu0
        %v1517 = vadd.f32 0.0, %v1516
        %1518 = vmatmul.bf16.gmra.mxu0 %v1372
        %v1519 = vpop.f32.mrf.mxu0
        %v1520 = vadd.f32 0.0, %v1519
        %v1521 = vpop.f32.mrf.mxu0
        %v1522 = vadd.f32 0.0, %v1521
        %1523 = vmatmul.bf16.gmra.mxu0 %v1375
        %v1524 = vpop.f32.mrf.mxu0
        %v1525 = vadd.f32 0.0, %v1524
        %v1526 = vpop.f32.mrf.mxu0
        %v1527 = vadd.f32 0.0, %v1526
        %1528 = vmatmul.bf16.gmra.mxu0 %v1378
        %v1529 = vpop.f32.mrf.mxu0
        %v1530 = vadd.f32 0.0, %v1529
        %v1531 = vpop.f32.mrf.mxu0
        %v1532 = vadd.f32 0.0, %v1531
        %1533 = vmatmul.bf16.gmra.mxu0 %v1381
        %v1534 = vpop.f32.mrf.mxu0
        %v1535 = vadd.f32 0.0, %v1534
        %v1536 = vpop.f32.mrf.mxu0
        %v1537 = vadd.f32 0.0, %v1536
        %1538 = vmatmul.bf16.gmra.mxu0 %v1384
        %v1539 = vpop.f32.mrf.mxu0
        %v1540 = vadd.f32 0.0, %v1539
        %v1541 = vpop.f32.mrf.mxu0
        %v1542 = vadd.f32 0.0, %v1541
        %1543 = vmatmul.bf16.gmra.mxu0 %v1387
        %v1544 = vpop.f32.mrf.mxu0
        %v1545 = vadd.f32 0.0, %v1544
        %v1546 = vpop.f32.mrf.mxu0
        %v1547 = vadd.f32 0.0, %v1546
        %1548 = vmatmul.bf16.gmra.mxu0 %v1390
        %v1549 = vpop.f32.mrf.mxu0
        %v1550 = vadd.f32 0.0, %v1549
        %v1551 = vpop.f32.mrf.mxu0
        %v1552 = vadd.f32 0.0, %v1551
        %1553 = vmatmul.bf16.gmra.mxu0 %v1393
        %v1554 = vpop.f32.mrf.mxu0
        %v1555 = vadd.f32 0.0, %v1554
        %v1556 = vpop.f32.mrf.mxu0
        %v1557 = vadd.f32 0.0, %v1556
        %1558 = vmatmul.bf16.gmra.mxu0 %v1396
        %v1559 = vpop.f32.mrf.mxu0
        %v1560 = vadd.f32 0.0, %v1559
        %v1561 = vpop.f32.mrf.mxu0
        %v1562 = vadd.f32 0.0, %v1561
        %1563 = vmatmul.bf16.gmra.mxu0 %v1399
        %v1564 = vpop.f32.mrf.mxu0
        %v1565 = vadd.f32 0.0, %v1564
        %v1566 = vpop.f32.mrf.mxu0
        %v1567 = vadd.f32 0.0, %v1566
        %1568 = vmatmul.bf16.gmra.mxu0 %v1402
        %v1569 = vpop.f32.mrf.mxu0
        %v1570 = vadd.f32 0.0, %v1569
        %v1571 = vpop.f32.mrf.mxu0
        %v1572 = vadd.f32 0.0, %v1571
        %1573 = vmatmul.bf16.gmra.mxu0 %v1405
        %v1574 = vpop.f32.mrf.mxu0
        %v1575 = vadd.f32 0.0, %v1574
        %v1576 = vpop.f32.mrf.mxu0
        %v1577 = vadd.f32 0.0, %v1576
        %1578 = vmatmul.bf16.gmra.mxu0 %v1408
        %v1579 = vpop.f32.mrf.mxu0
        %v1580 = vadd.f32 0.0, %v1579
        %v1581 = vpop.f32.mrf.mxu0
        %v1582 = vadd.f32 0.0, %v1581
        %1583 = vmatmul.bf16.gmra.mxu0 %v1411
        %v1584 = vpop.f32.mrf.mxu0
        %v1585 = vadd.f32 0.0, %v1584
        %v1586 = vpop.f32.mrf.mxu0
        %v1587 = vadd.f32 0.0, %v1586
        %1588 = vmatmul.bf16.gmra.mxu0 %v1414
        %v1589 = vpop.f32.mrf.mxu0
        %v1590 = vadd.f32 0.0, %v1589
        %v1591 = vpop.f32.mrf.mxu0
        %v1592 = vadd.f32 0.0, %v1591
        %1593 = vdwg.mxu0
        %v1626 = vunpack.c.l.b16 %v1171
        %v1627 = vunpack.c.l.b16 %v1172
        %v1628 = vunpack.c.l.b16 %v1173
        %v1629 = vunpack.c.l.b16 %v1174
        %v1630 = vunpack.c.l.b16 %v1175
        %v1631 = vunpack.c.l.b16 %v1176
        %v1632 = vunpack.c.l.b16 %v1177
        %v1633 = vunpack.c.l.b16 %v1178
        %v1634 = vunpack.c.l.b16 %v1179
        %v1635 = vunpack.c.l.b16 %v1180
        %v1636 = vunpack.c.l.b16 %v1181
        %v1637 = vunpack.c.l.b16 %v1182
        %v1638 = vunpack.c.l.b16 %v1183
        %v1639 = vunpack.c.l.b16 %v1184
        %v1640 = vunpack.c.l.b16 %v1185
        %v1641 = vunpack.c.l.b16 %v1186
        %v1642 = vunpack.c.l.b16 %v1187
        %v1643 = vunpack.c.l.b16 %v1188
        %v1644 = vunpack.c.l.b16 %v1189
        %v1645 = vunpack.c.l.b16 %v1190
        %v1646 = vunpack.c.l.b16 %v1191
        %v1647 = vunpack.c.l.b16 %v1192
        %v1648 = vunpack.c.l.b16 %v1193
        %v1649 = vunpack.c.l.b16 %v1194
        %v1650 = vunpack.c.l.b16 %v1195
        %v1651 = vunpack.c.l.b16 %v1196
        %v1652 = vunpack.c.l.b16 %v1197
        %v1653 = vunpack.c.l.b16 %v1198
        %v1654 = vunpack.c.l.b16 %v1199
        %v1655 = vunpack.c.l.b16 %v1200
        %v1656 = vunpack.c.l.b16 %v1201
        %v1657 = vunpack.c.l.b16 %v1202
        %v1658 = vpack.c.b16 %v1627, %v1626
        %v1659 = vpack.c.b16 %v1629, %v1628
        %v1660 = vpack.c.b16 %v1631, %v1630
        %v1661 = vpack.c.b16 %v1633, %v1632
        %v1662 = vpack.c.b16 %v1635, %v1634
        %v1663 = vpack.c.b16 %v1637, %v1636
        %v1664 = vpack.c.b16 %v1639, %v1638
        %v1665 = vpack.c.b16 %v1641, %v1640
        %v1666 = vpack.c.b16 %v1643, %v1642
        %v1667 = vpack.c.b16 %v1645, %v1644
        %v1668 = vpack.c.b16 %v1647, %v1646
        %v1669 = vpack.c.b16 %v1649, %v1648
        %v1670 = vpack.c.b16 %v1651, %v1650
        %v1671 = vpack.c.b16 %v1653, %v1652
        %v1672 = vpack.c.b16 %v1655, %v1654
        %v1673 = vpack.c.b16 %v1657, %v1656
        %v1678 = vunpack.c.l.b16 %v660
        %v1679 = vunpack.c.h.b16 %v660
        %v1680 = vunpack.c.l.b16 %v661
        %v1681 = vunpack.c.h.b16 %v661
        %v1682 = vunpack.c.l.b16 %v662
        %v1683 = vunpack.c.h.b16 %v662
        %v1684 = vunpack.c.l.b16 %v663
        %v1685 = vunpack.c.h.b16 %v663
        %v1686 = vpack.c.b16 %v1680, %v1678
        %v1687 = vpack.c.b16 %v1681, %v1679
        %v1688 = vpack.c.b16 %v1684, %v1682
        %v1689 = vpack.c.b16 %v1685, %v1683
        %v1695 = vsel %vm1367, %v1658, 0
        %v1698 = vsel %vm1367, %v1659, 0
        %v1701 = vsel %vm1367, %v1660, 0
        %v1704 = vsel %vm1367, %v1661, 0
        %v1707 = vsel %vm1367, %v1662, 0
        %v1710 = vsel %vm1367, %v1663, 0
        %v1713 = vsel %vm1367, %v1664, 0
        %v1716 = vsel %vm1367, %v1665, 0
        %v1719 = vsel %vm1367, %v1666, 0
        %v1722 = vsel %vm1367, %v1667, 0
        %v1725 = vsel %vm1367, %v1668, 0
        %v1728 = vsel %vm1367, %v1669, 0
        %v1731 = vsel %vm1367, %v1670, 0
        %v1734 = vsel %vm1367, %v1671, 0
        %v1737 = vsel %vm1367, %v1672, 0
        %v1740 = vsel %vm1367, %v1673, 0
        %1742 = vmatpush.bf16.msra.mxu0 0
        %1743 = vmatpush.bf16.msra.mxu0 0
        %1744 = vmatpush.bf16.msra.mxu0 0
        %1745 = vmatpush.bf16.msra.mxu0 0
        %1746 = vmatpush.bf16.msra.mxu0 0
        %1747 = vmatpush.bf16.msra.mxu0 0
        %1748 = vmatpush.bf16.msra.mxu0 %v1688
        %1749 = vmatpush.bf16.msra.mxu0 %v1686
        %1750 = vmatmul.bf16.gmra.mxu0 %v1695
        %v1751 = vpop.f32.mrf.mxu0
        %v1752 = vadd.f32 0.0, %v1751
        %v1753 = vpop.f32.mrf.mxu0
        %v1754 = vadd.f32 0.0, %v1753
        %1755 = vmatmul.bf16.gmra.mxu0 %v1698
        %v1756 = vpop.f32.mrf.mxu0
        %v1757 = vadd.f32 0.0, %v1756
        %v1758 = vpop.f32.mrf.mxu0
        %v1759 = vadd.f32 0.0, %v1758
        %1760 = vmatmul.bf16.gmra.mxu0 %v1701
        %v1761 = vpop.f32.mrf.mxu0
        %v1762 = vadd.f32 0.0, %v1761
        %v1763 = vpop.f32.mrf.mxu0
        %v1764 = vadd.f32 0.0, %v1763
        %1765 = vmatmul.bf16.gmra.mxu0 %v1704
        %v1766 = vpop.f32.mrf.mxu0
        %v1767 = vadd.f32 0.0, %v1766
        %v1768 = vpop.f32.mrf.mxu0
        %v1769 = vadd.f32 0.0, %v1768
        %1770 = vmatmul.bf16.gmra.mxu0 %v1707
        %v1771 = vpop.f32.mrf.mxu0
        %v1772 = vadd.f32 0.0, %v1771
        %v1773 = vpop.f32.mrf.mxu0
        %v1774 = vadd.f32 0.0, %v1773
        %1775 = vmatmul.bf16.gmra.mxu0 %v1710
        %v1776 = vpop.f32.mrf.mxu0
        %v1777 = vadd.f32 0.0, %v1776
        %v1778 = vpop.f32.mrf.mxu0
        %v1779 = vadd.f32 0.0, %v1778
        %1780 = vmatmul.bf16.gmra.mxu0 %v1713
        %v1781 = vpop.f32.mrf.mxu0
        %v1782 = vadd.f32 0.0, %v1781
        %v1783 = vpop.f32.mrf.mxu0
        %v1784 = vadd.f32 0.0, %v1783
        %1785 = vmatmul.bf16.gmra.mxu0 %v1716
        %v1786 = vpop.f32.mrf.mxu0
        %v1787 = vadd.f32 0.0, %v1786
        %v1788 = vpop.f32.mrf.mxu0
        %v1789 = vadd.f32 0.0, %v1788
        %1790 = vmatmul.bf16.gmra.mxu0 %v1719
        %v1791 = vpop.f32.mrf.mxu0
        %v1792 = vadd.f32 0.0, %v1791
        %v1793 = vpop.f32.mrf.mxu0
        %v1794 = vadd.f32 0.0, %v1793
        %1795 = vmatmul.bf16.gmra.mxu0 %v1722
        %v1796 = vpop.f32.mrf.mxu0
        %v1797 = vadd.f32 0.0, %v1796
        %v1798 = vpop.f32.mrf.mxu0
        %v1799 = vadd.f32 0.0, %v1798
        %1800 = vmatmul.bf16.gmra.mxu0 %v1725
        %v1801 = vpop.f32.mrf.mxu0
        %v1802 = vadd.f32 0.0, %v1801
        %v1803 = vpop.f32.mrf.mxu0
        %v1804 = vadd.f32 0.0, %v1803
        %1805 = vmatmul.bf16.gmra.mxu0 %v1728
        %v1806 = vpop.f32.mrf.mxu0
        %v1807 = vadd.f32 0.0, %v1806
        %v1808 = vpop.f32.mrf.mxu0
        %v1809 = vadd.f32 0.0, %v1808
        %1810 = vmatmul.bf16.gmra.mxu0 %v1731
        %v1811 = vpop.f32.mrf.mxu0
        %v1812 = vadd.f32 0.0, %v1811
        %v1813 = vpop.f32.mrf.mxu0
        %v1814 = vadd.f32 0.0, %v1813
        %1815 = vmatmul.bf16.gmra.mxu0 %v1734
        %v1816 = vpop.f32.mrf.mxu0
        %v1817 = vadd.f32 0.0, %v1816
        %v1818 = vpop.f32.mrf.mxu0
        %v1819 = vadd.f32 0.0, %v1818
        %1820 = vmatmul.bf16.gmra.mxu0 %v1737
        %v1821 = vpop.f32.mrf.mxu0
        %v1822 = vadd.f32 0.0, %v1821
        %v1823 = vpop.f32.mrf.mxu0
        %v1824 = vadd.f32 0.0, %v1823
        %1825 = vmatmul.bf16.gmra.mxu0 %v1740
        %v1826 = vpop.f32.mrf.mxu0
        %v1827 = vadd.f32 0.0, %v1826
        %v1828 = vpop.f32.mrf.mxu0
        %v1829 = vadd.f32 0.0, %v1828
        %1830 = vdwg.mxu0
        %1831 = vmatpush.bf16.msra.mxu0 0
        %1832 = vmatpush.bf16.msra.mxu0 0
        %1833 = vmatpush.bf16.msra.mxu0 0
        %1834 = vmatpush.bf16.msra.mxu0 0
        %1835 = vmatpush.bf16.msra.mxu0 0
        %1836 = vmatpush.bf16.msra.mxu0 0
        %1837 = vmatpush.bf16.msra.mxu0 %v1689
        %1838 = vmatpush.bf16.msra.mxu0 %v1687
        %1839 = vmatmul.bf16.gmra.mxu0 %v1695
        %v1840 = vpop.f32.mrf.mxu0
        %v1841 = vadd.f32 0.0, %v1840
        %v1842 = vpop.f32.mrf.mxu0
        %v1843 = vadd.f32 0.0, %v1842
        %1844 = vmatmul.bf16.gmra.mxu0 %v1698
        %v1845 = vpop.f32.mrf.mxu0
        %v1846 = vadd.f32 0.0, %v1845
        %v1847 = vpop.f32.mrf.mxu0
        %v1848 = vadd.f32 0.0, %v1847
        %1849 = vmatmul.bf16.gmra.mxu0 %v1701
        %v1850 = vpop.f32.mrf.mxu0
        %v1851 = vadd.f32 0.0, %v1850
        %v1852 = vpop.f32.mrf.mxu0
        %v1853 = vadd.f32 0.0, %v1852
        %1854 = vmatmul.bf16.gmra.mxu0 %v1704
        %v1855 = vpop.f32.mrf.mxu0
        %v1856 = vadd.f32 0.0, %v1855
        %v1857 = vpop.f32.mrf.mxu0
        %v1858 = vadd.f32 0.0, %v1857
        %1859 = vmatmul.bf16.gmra.mxu0 %v1707
        %v1860 = vpop.f32.mrf.mxu0
        %v1861 = vadd.f32 0.0, %v1860
        %v1862 = vpop.f32.mrf.mxu0
        %v1863 = vadd.f32 0.0, %v1862
        %1864 = vmatmul.bf16.gmra.mxu0 %v1710
        %v1865 = vpop.f32.mrf.mxu0
        %v1866 = vadd.f32 0.0, %v1865
        %v1867 = vpop.f32.mrf.mxu0
        %v1868 = vadd.f32 0.0, %v1867
        %1869 = vmatmul.bf16.gmra.mxu0 %v1713
        %v1870 = vpop.f32.mrf.mxu0
        %v1871 = vadd.f32 0.0, %v1870
        %v1872 = vpop.f32.mrf.mxu0
        %v1873 = vadd.f32 0.0, %v1872
        %1874 = vmatmul.bf16.gmra.mxu0 %v1716
        %v1875 = vpop.f32.mrf.mxu0
        %v1876 = vadd.f32 0.0, %v1875
        %v1877 = vpop.f32.mrf.mxu0
        %v1878 = vadd.f32 0.0, %v1877
        %1879 = vmatmul.bf16.gmra.mxu0 %v1719
        %v1880 = vpop.f32.mrf.mxu0
        %v1881 = vadd.f32 0.0, %v1880
        %v1882 = vpop.f32.mrf.mxu0
        %v1883 = vadd.f32 0.0, %v1882
        %1884 = vmatmul.bf16.gmra.mxu0 %v1722
        %v1885 = vpop.f32.mrf.mxu0
        %v1886 = vadd.f32 0.0, %v1885
        %v1887 = vpop.f32.mrf.mxu0
        %v1888 = vadd.f32 0.0, %v1887
        %1889 = vmatmul.bf16.gmra.mxu0 %v1725
        %v1890 = vpop.f32.mrf.mxu0
        %v1891 = vadd.f32 0.0, %v1890
        %v1892 = vpop.f32.mrf.mxu0
        %v1893 = vadd.f32 0.0, %v1892
        %1894 = vmatmul.bf16.gmra.mxu0 %v1728
        %v1895 = vpop.f32.mrf.mxu0
        %v1896 = vadd.f32 0.0, %v1895
        %v1897 = vpop.f32.mrf.mxu0
        %v1898 = vadd.f32 0.0, %v1897
        %1899 = vmatmul.bf16.gmra.mxu0 %v1731
        %v1900 = vpop.f32.mrf.mxu0
        %v1901 = vadd.f32 0.0, %v1900
        %v1902 = vpop.f32.mrf.mxu0
        %v1903 = vadd.f32 0.0, %v1902
        %1904 = vmatmul.bf16.gmra.mxu0 %v1734
        %v1905 = vpop.f32.mrf.mxu0
        %v1906 = vadd.f32 0.0, %v1905
        %v1907 = vpop.f32.mrf.mxu0
        %v1908 = vadd.f32 0.0, %v1907
        %1909 = vmatmul.bf16.gmra.mxu0 %v1737
        %v1910 = vpop.f32.mrf.mxu0
        %v1911 = vadd.f32 0.0, %v1910
        %v1912 = vpop.f32.mrf.mxu0
        %v1913 = vadd.f32 0.0, %v1912
        %1914 = vmatmul.bf16.gmra.mxu0 %v1740
        %v1915 = vpop.f32.mrf.mxu0
        %v1916 = vadd.f32 0.0, %v1915
        %v1917 = vpop.f32.mrf.mxu0
        %v1918 = vadd.f32 0.0, %v1917
        %1919 = vdwg.mxu0
        %v1952 = vunpack.c.l.b16 %v1203
        %v1953 = vunpack.c.l.b16 %v1204
        %v1954 = vunpack.c.l.b16 %v1205
        %v1955 = vunpack.c.l.b16 %v1206
        %v1956 = vunpack.c.l.b16 %v1207
        %v1957 = vunpack.c.l.b16 %v1208
        %v1958 = vunpack.c.l.b16 %v1209
        %v1959 = vunpack.c.l.b16 %v1210
        %v1960 = vunpack.c.l.b16 %v1211
        %v1961 = vunpack.c.l.b16 %v1212
        %v1962 = vunpack.c.l.b16 %v1213
        %v1963 = vunpack.c.l.b16 %v1214
        %v1964 = vunpack.c.l.b16 %v1215
        %v1965 = vunpack.c.l.b16 %v1216
        %v1966 = vunpack.c.l.b16 %v1217
        %v1967 = vunpack.c.l.b16 %v1218
        %v1968 = vunpack.c.l.b16 %v1219
        %v1969 = vunpack.c.l.b16 %v1220
        %v1970 = vunpack.c.l.b16 %v1221
        %v1971 = vunpack.c.l.b16 %v1222
        %v1972 = vunpack.c.l.b16 %v1223
        %v1973 = vunpack.c.l.b16 %v1224
        %v1974 = vunpack.c.l.b16 %v1225
        %v1975 = vunpack.c.l.b16 %v1226
        %v1976 = vunpack.c.l.b16 %v1227
        %v1977 = vunpack.c.l.b16 %v1228
        %v1978 = vunpack.c.l.b16 %v1229
        %v1979 = vunpack.c.l.b16 %v1230
        %v1980 = vunpack.c.l.b16 %v1231
        %v1981 = vunpack.c.l.b16 %v1232
        %v1982 = vunpack.c.l.b16 %v1233
        %v1983 = vunpack.c.l.b16 %v1234
        %v1984 = vpack.c.b16 %v1953, %v1952
        %v1985 = vpack.c.b16 %v1955, %v1954
        %v1986 = vpack.c.b16 %v1957, %v1956
        %v1987 = vpack.c.b16 %v1959, %v1958
        %v1988 = vpack.c.b16 %v1961, %v1960
        %v1989 = vpack.c.b16 %v1963, %v1962
        %v1990 = vpack.c.b16 %v1965, %v1964
        %v1991 = vpack.c.b16 %v1967, %v1966
        %v1992 = vpack.c.b16 %v1969, %v1968
        %v1993 = vpack.c.b16 %v1971, %v1970
        %v1994 = vpack.c.b16 %v1973, %v1972
        %v1995 = vpack.c.b16 %v1975, %v1974
        %v1996 = vpack.c.b16 %v1977, %v1976
        %v1997 = vpack.c.b16 %v1979, %v1978
        %v1998 = vpack.c.b16 %v1981, %v1980
        %v1999 = vpack.c.b16 %v1983, %v1982
        %v2004 = vunpack.c.l.b16 %v664
        %v2005 = vunpack.c.h.b16 %v664
        %v2006 = vunpack.c.l.b16 %v665
        %v2007 = vunpack.c.h.b16 %v665
        %v2008 = vunpack.c.l.b16 %v666
        %v2009 = vunpack.c.h.b16 %v666
        %v2010 = vunpack.c.l.b16 %v667
        %v2011 = vunpack.c.h.b16 %v667
        %v2012 = vpack.c.b16 %v2006, %v2004
        %v2013 = vpack.c.b16 %v2007, %v2005
        %v2014 = vpack.c.b16 %v2010, %v2008
        %v2015 = vpack.c.b16 %v2011, %v2009
        %v2021 = vsel %vm1367, %v1984, 0
        %v2024 = vsel %vm1367, %v1985, 0
        %v2027 = vsel %vm1367, %v1986, 0
        %v2030 = vsel %vm1367, %v1987, 0
        %v2033 = vsel %vm1367, %v1988, 0
        %v2036 = vsel %vm1367, %v1989, 0
        %v2039 = vsel %vm1367, %v1990, 0
        %v2042 = vsel %vm1367, %v1991, 0
        %v2045 = vsel %vm1367, %v1992, 0
        %v2048 = vsel %vm1367, %v1993, 0
        %v2051 = vsel %vm1367, %v1994, 0
        %v2054 = vsel %vm1367, %v1995, 0
        %v2057 = vsel %vm1367, %v1996, 0
        %v2060 = vsel %vm1367, %v1997, 0
        %v2063 = vsel %vm1367, %v1998, 0
        %v2066 = vsel %vm1367, %v1999, 0
        %2068 = vmatpush.bf16.msra.mxu0 0
        %2069 = vmatpush.bf16.msra.mxu0 0
        %2070 = vmatpush.bf16.msra.mxu0 0
        %2071 = vmatpush.bf16.msra.mxu0 0
        %2072 = vmatpush.bf16.msra.mxu0 0
        %2073 = vmatpush.bf16.msra.mxu0 0
        %2074 = vmatpush.bf16.msra.mxu0 %v2014
        %2075 = vmatpush.bf16.msra.mxu0 %v2012
        %2076 = vmatmul.bf16.gmra.mxu0 %v2021
        %v2077 = vpop.f32.mrf.mxu0
        %v2078 = vadd.f32 0.0, %v2077
        %v2079 = vpop.f32.mrf.mxu0
        %v2080 = vadd.f32 0.0, %v2079
        %2081 = vmatmul.bf16.gmra.mxu0 %v2024
        %v2082 = vpop.f32.mrf.mxu0
        %v2083 = vadd.f32 0.0, %v2082
        %v2084 = vpop.f32.mrf.mxu0
        %v2085 = vadd.f32 0.0, %v2084
        %2086 = vmatmul.bf16.gmra.mxu0 %v2027
        %v2087 = vpop.f32.mrf.mxu0
        %v2088 = vadd.f32 0.0, %v2087
        %v2089 = vpop.f32.mrf.mxu0
        %v2090 = vadd.f32 0.0, %v2089
        %2091 = vmatmul.bf16.gmra.mxu0 %v2030
        %v2092 = vpop.f32.mrf.mxu0
        %v2093 = vadd.f32 0.0, %v2092
        %v2094 = vpop.f32.mrf.mxu0
        %v2095 = vadd.f32 0.0, %v2094
        %2096 = vmatmul.bf16.gmra.mxu0 %v2033
        %v2097 = vpop.f32.mrf.mxu0
        %v2098 = vadd.f32 0.0, %v2097
        %v2099 = vpop.f32.mrf.mxu0
        %v2100 = vadd.f32 0.0, %v2099
        %2101 = vmatmul.bf16.gmra.mxu0 %v2036
        %v2102 = vpop.f32.mrf.mxu0
        %v2103 = vadd.f32 0.0, %v2102
        %v2104 = vpop.f32.mrf.mxu0
        %v2105 = vadd.f32 0.0, %v2104
        %2106 = vmatmul.bf16.gmra.mxu0 %v2039
        %v2107 = vpop.f32.mrf.mxu0
        %v2108 = vadd.f32 0.0, %v2107
        %v2109 = vpop.f32.mrf.mxu0
        %v2110 = vadd.f32 0.0, %v2109
        %2111 = vmatmul.bf16.gmra.mxu0 %v2042
        %v2112 = vpop.f32.mrf.mxu0
        %v2113 = vadd.f32 0.0, %v2112
        %v2114 = vpop.f32.mrf.mxu0
        %v2115 = vadd.f32 0.0, %v2114
        %2116 = vmatmul.bf16.gmra.mxu0 %v2045
        %v2117 = vpop.f32.mrf.mxu0
        %v2118 = vadd.f32 0.0, %v2117
        %v2119 = vpop.f32.mrf.mxu0
        %v2120 = vadd.f32 0.0, %v2119
        %2121 = vmatmul.bf16.gmra.mxu0 %v2048
        %v2122 = vpop.f32.mrf.mxu0
        %v2123 = vadd.f32 0.0, %v2122
        %v2124 = vpop.f32.mrf.mxu0
        %v2125 = vadd.f32 0.0, %v2124
        %2126 = vmatmul.bf16.gmra.mxu0 %v2051
        %v2127 = vpop.f32.mrf.mxu0
        %v2128 = vadd.f32 0.0, %v2127
        %v2129 = vpop.f32.mrf.mxu0
        %v2130 = vadd.f32 0.0, %v2129
        %2131 = vmatmul.bf16.gmra.mxu0 %v2054
        %v2132 = vpop.f32.mrf.mxu0
        %v2133 = vadd.f32 0.0, %v2132
        %v2134 = vpop.f32.mrf.mxu0
        %v2135 = vadd.f32 0.0, %v2134
        %2136 = vmatmul.bf16.gmra.mxu0 %v2057
        %v2137 = vpop.f32.mrf.mxu0
        %v2138 = vadd.f32 0.0, %v2137
        %v2139 = vpop.f32.mrf.mxu0
        %v2140 = vadd.f32 0.0, %v2139
        %2141 = vmatmul.bf16.gmra.mxu0 %v2060
        %v2142 = vpop.f32.mrf.mxu0
        %v2143 = vadd.f32 0.0, %v2142
        %v2144 = vpop.f32.mrf.mxu0
        %v2145 = vadd.f32 0.0, %v2144
        %2146 = vmatmul.bf16.gmra.mxu0 %v2063
        %v2147 = vpop.f32.mrf.mxu0
        %v2148 = vadd.f32 0.0, %v2147
        %v2149 = vpop.f32.mrf.mxu0
        %v2150 = vadd.f32 0.0, %v2149
        %2151 = vmatmul.bf16.gmra.mxu0 %v2066
        %v2152 = vpop.f32.mrf.mxu0
        %v2153 = vadd.f32 0.0, %v2152
        %v2154 = vpop.f32.mrf.mxu0
        %v2155 = vadd.f32 0.0, %v2154
        %2156 = vdwg.mxu0
        %2157 = vmatpush.bf16.msra.mxu0 0
        %2158 = vmatpush.bf16.msra.mxu0 0
        %2159 = vmatpush.bf16.msra.mxu0 0
        %2160 = vmatpush.bf16.msra.mxu0 0
        %2161 = vmatpush.bf16.msra.mxu0 0
        %2162 = vmatpush.bf16.msra.mxu0 0
        %2163 = vmatpush.bf16.msra.mxu0 %v2015
        %2164 = vmatpush.bf16.msra.mxu0 %v2013
        %2165 = vmatmul.bf16.gmra.mxu0 %v2021
        %v2166 = vpop.f32.mrf.mxu0
        %v2167 = vadd.f32 0.0, %v2166
        %v2168 = vpop.f32.mrf.mxu0
        %v2169 = vadd.f32 0.0, %v2168
        %2170 = vmatmul.bf16.gmra.mxu0 %v2024
        %v2171 = vpop.f32.mrf.mxu0
        %v2172 = vadd.f32 0.0, %v2171
        %v2173 = vpop.f32.mrf.mxu0
        %v2174 = vadd.f32 0.0, %v2173
        %2175 = vmatmul.bf16.gmra.mxu0 %v2027
        %v2176 = vpop.f32.mrf.mxu0
        %v2177 = vadd.f32 0.0, %v2176
        %v2178 = vpop.f32.mrf.mxu0
        %v2179 = vadd.f32 0.0, %v2178
        %2180 = vmatmul.bf16.gmra.mxu0 %v2030
        %v2181 = vpop.f32.mrf.mxu0
        %v2182 = vadd.f32 0.0, %v2181
        %v2183 = vpop.f32.mrf.mxu0
        %v2184 = vadd.f32 0.0, %v2183
        %2185 = vmatmul.bf16.gmra.mxu0 %v2033
        %v2186 = vpop.f32.mrf.mxu0
        %v2187 = vadd.f32 0.0, %v2186
        %v2188 = vpop.f32.mrf.mxu0
        %v2189 = vadd.f32 0.0, %v2188
        %2190 = vmatmul.bf16.gmra.mxu0 %v2036
        %v2191 = vpop.f32.mrf.mxu0
        %v2192 = vadd.f32 0.0, %v2191
        %v2193 = vpop.f32.mrf.mxu0
        %v2194 = vadd.f32 0.0, %v2193
        %2195 = vmatmul.bf16.gmra.mxu0 %v2039
        %v2196 = vpop.f32.mrf.mxu0
        %v2197 = vadd.f32 0.0, %v2196
        %v2198 = vpop.f32.mrf.mxu0
        %v2199 = vadd.f32 0.0, %v2198
        %2200 = vmatmul.bf16.gmra.mxu0 %v2042
        %v2201 = vpop.f32.mrf.mxu0
        %v2202 = vadd.f32 0.0, %v2201
        %v2203 = vpop.f32.mrf.mxu0
        %v2204 = vadd.f32 0.0, %v2203
        %2205 = vmatmul.bf16.gmra.mxu0 %v2045
        %v2206 = vpop.f32.mrf.mxu0
        %v2207 = vadd.f32 0.0, %v2206
        %v2208 = vpop.f32.mrf.mxu0
        %v2209 = vadd.f32 0.0, %v2208
        %2210 = vmatmul.bf16.gmra.mxu0 %v2048
        %v2211 = vpop.f32.mrf.mxu0
        %v2212 = vadd.f32 0.0, %v2211
        %v2213 = vpop.f32.mrf.mxu0
        %v2214 = vadd.f32 0.0, %v2213
        %2215 = vmatmul.bf16.gmra.mxu0 %v2051
        %v2216 = vpop.f32.mrf.mxu0
        %v2217 = vadd.f32 0.0, %v2216
        %v2218 = vpop.f32.mrf.mxu0
        %v2219 = vadd.f32 0.0, %v2218
        %2220 = vmatmul.bf16.gmra.mxu0 %v2054
        %v2221 = vpop.f32.mrf.mxu0
        %v2222 = vadd.f32 0.0, %v2221
        %v2223 = vpop.f32.mrf.mxu0
        %v2224 = vadd.f32 0.0, %v2223
        %2225 = vmatmul.bf16.gmra.mxu0 %v2057
        %v2226 = vpop.f32.mrf.mxu0
        %v2227 = vadd.f32 0.0, %v2226
        %v2228 = vpop.f32.mrf.mxu0
        %v2229 = vadd.f32 0.0, %v2228
        %2230 = vmatmul.bf16.gmra.mxu0 %v2060
        %v2231 = vpop.f32.mrf.mxu0
        %v2232 = vadd.f32 0.0, %v2231
        %v2233 = vpop.f32.mrf.mxu0
        %v2234 = vadd.f32 0.0, %v2233
        %2235 = vmatmul.bf16.gmra.mxu0 %v2063
        %v2236 = vpop.f32.mrf.mxu0
        %v2237 = vadd.f32 0.0, %v2236
        %v2238 = vpop.f32.mrf.mxu0
        %v2239 = vadd.f32 0.0, %v2238
        %2240 = vmatmul.bf16.gmra.mxu0 %v2066
        %v2241 = vpop.f32.mrf.mxu0
        %v2242 = vadd.f32 0.0, %v2241
        %v2243 = vpop.f32.mrf.mxu0
        %v2244 = vadd.f32 0.0, %v2243
        %2245 = vdwg.mxu0
        %v2278 = vunpack.c.l.b16 %v1235
        %v2279 = vunpack.c.l.b16 %v1236
        %v2280 = vunpack.c.l.b16 %v1237
        %v2281 = vunpack.c.l.b16 %v1238
        %v2282 = vunpack.c.l.b16 %v1239
        %v2283 = vunpack.c.l.b16 %v1240
        %v2284 = vunpack.c.l.b16 %v1241
        %v2285 = vunpack.c.l.b16 %v1242
        %v2286 = vunpack.c.l.b16 %v1243
        %v2287 = vunpack.c.l.b16 %v1244
        %v2288 = vunpack.c.l.b16 %v1245
        %v2289 = vunpack.c.l.b16 %v1246
        %v2290 = vunpack.c.l.b16 %v1247
        %v2291 = vunpack.c.l.b16 %v1248
        %v2292 = vunpack.c.l.b16 %v1249
        %v2293 = vunpack.c.l.b16 %v1250
        %v2294 = vunpack.c.l.b16 %v1251
        %v2295 = vunpack.c.l.b16 %v1252
        %v2296 = vunpack.c.l.b16 %v1253
        %v2297 = vunpack.c.l.b16 %v1254
        %v2298 = vunpack.c.l.b16 %v1255
        %v2299 = vunpack.c.l.b16 %v1256
        %v2300 = vunpack.c.l.b16 %v1257
        %v2301 = vunpack.c.l.b16 %v1258
        %v2302 = vunpack.c.l.b16 %v1259
        %v2303 = vunpack.c.l.b16 %v1260
        %v2304 = vunpack.c.l.b16 %v1261
        %v2305 = vunpack.c.l.b16 %v1262
        %v2306 = vunpack.c.l.b16 %v1263
        %v2307 = vunpack.c.l.b16 %v1264
        %v2308 = vunpack.c.l.b16 %v1265
        %v2309 = vunpack.c.l.b16 %v1266
        %v2310 = vpack.c.b16 %v2279, %v2278
        %v2311 = vpack.c.b16 %v2281, %v2280
        %v2312 = vpack.c.b16 %v2283, %v2282
        %v2313 = vpack.c.b16 %v2285, %v2284
        %v2314 = vpack.c.b16 %v2287, %v2286
        %v2315 = vpack.c.b16 %v2289, %v2288
        %v2316 = vpack.c.b16 %v2291, %v2290
        %v2317 = vpack.c.b16 %v2293, %v2292
        %v2318 = vpack.c.b16 %v2295, %v2294
        %v2319 = vpack.c.b16 %v2297, %v2296
        %v2320 = vpack.c.b16 %v2299, %v2298
        %v2321 = vpack.c.b16 %v2301, %v2300
        %v2322 = vpack.c.b16 %v2303, %v2302
        %v2323 = vpack.c.b16 %v2305, %v2304
        %v2324 = vpack.c.b16 %v2307, %v2306
        %v2325 = vpack.c.b16 %v2309, %v2308
        %v2330 = vunpack.c.l.b16 %v668
        %v2331 = vunpack.c.h.b16 %v668
        %v2332 = vunpack.c.l.b16 %v669
        %v2333 = vunpack.c.h.b16 %v669
        %v2334 = vunpack.c.l.b16 %v670
        %v2335 = vunpack.c.h.b16 %v670
        %v2336 = vunpack.c.l.b16 %v671
        %v2337 = vunpack.c.h.b16 %v671
        %v2338 = vpack.c.b16 %v2332, %v2330
        %v2339 = vpack.c.b16 %v2333, %v2331
        %v2340 = vpack.c.b16 %v2336, %v2334
        %v2341 = vpack.c.b16 %v2337, %v2335
        %v2347 = vsel %vm1367, %v2310, 0
        %v2350 = vsel %vm1367, %v2311, 0
        %v2353 = vsel %vm1367, %v2312, 0
        %v2356 = vsel %vm1367, %v2313, 0
        %v2359 = vsel %vm1367, %v2314, 0
        %v2362 = vsel %vm1367, %v2315, 0
        %v2365 = vsel %vm1367, %v2316, 0
        %v2368 = vsel %vm1367, %v2317, 0
        %v2371 = vsel %vm1367, %v2318, 0
        %v2374 = vsel %vm1367, %v2319, 0
        %v2377 = vsel %vm1367, %v2320, 0
        %v2380 = vsel %vm1367, %v2321, 0
        %v2383 = vsel %vm1367, %v2322, 0
        %v2386 = vsel %vm1367, %v2323, 0
        %v2389 = vsel %vm1367, %v2324, 0
        %v2392 = vsel %vm1367, %v2325, 0
        %2394 = vmatpush.bf16.msra.mxu0 0
        %2395 = vmatpush.bf16.msra.mxu0 0
        %2396 = vmatpush.bf16.msra.mxu0 0
        %2397 = vmatpush.bf16.msra.mxu0 0
        %2398 = vmatpush.bf16.msra.mxu0 0
        %2399 = vmatpush.bf16.msra.mxu0 0
        %2400 = vmatpush.bf16.msra.mxu0 %v2340
        %2401 = vmatpush.bf16.msra.mxu0 %v2338
        %2402 = vmatmul.bf16.gmra.mxu0 %v2347
        %v2403 = vpop.f32.mrf.mxu0
        %v2404 = vadd.f32 0.0, %v2403
        %v2405 = vpop.f32.mrf.mxu0
        %v2406 = vadd.f32 0.0, %v2405
        %2407 = vmatmul.bf16.gmra.mxu0 %v2350
        %v2408 = vpop.f32.mrf.mxu0
        %v2409 = vadd.f32 0.0, %v2408
        %v2410 = vpop.f32.mrf.mxu0
        %v2411 = vadd.f32 0.0, %v2410
        %2412 = vmatmul.bf16.gmra.mxu0 %v2353
        %v2413 = vpop.f32.mrf.mxu0
        %v2414 = vadd.f32 0.0, %v2413
        %v2415 = vpop.f32.mrf.mxu0
        %v2416 = vadd.f32 0.0, %v2415
        %2417 = vmatmul.bf16.gmra.mxu0 %v2356
        %v2418 = vpop.f32.mrf.mxu0
        %v2419 = vadd.f32 0.0, %v2418
        %v2420 = vpop.f32.mrf.mxu0
        %v2421 = vadd.f32 0.0, %v2420
        %2422 = vmatmul.bf16.gmra.mxu0 %v2359
        %v2423 = vpop.f32.mrf.mxu0
        %v2424 = vadd.f32 0.0, %v2423
        %v2425 = vpop.f32.mrf.mxu0
        %v2426 = vadd.f32 0.0, %v2425
        %2427 = vmatmul.bf16.gmra.mxu0 %v2362
        %v2428 = vpop.f32.mrf.mxu0
        %v2429 = vadd.f32 0.0, %v2428
        %v2430 = vpop.f32.mrf.mxu0
        %v2431 = vadd.f32 0.0, %v2430
        %2432 = vmatmul.bf16.gmra.mxu0 %v2365
        %v2433 = vpop.f32.mrf.mxu0
        %v2434 = vadd.f32 0.0, %v2433
        %v2435 = vpop.f32.mrf.mxu0
        %v2436 = vadd.f32 0.0, %v2435
        %2437 = vmatmul.bf16.gmra.mxu0 %v2368
        %v2438 = vpop.f32.mrf.mxu0
        %v2439 = vadd.f32 0.0, %v2438
        %v2440 = vpop.f32.mrf.mxu0
        %v2441 = vadd.f32 0.0, %v2440
        %2442 = vmatmul.bf16.gmra.mxu0 %v2371
        %v2443 = vpop.f32.mrf.mxu0
        %v2444 = vadd.f32 0.0, %v2443
        %v2445 = vpop.f32.mrf.mxu0
        %v2446 = vadd.f32 0.0, %v2445
        %2447 = vmatmul.bf16.gmra.mxu0 %v2374
        %v2448 = vpop.f32.mrf.mxu0
        %v2449 = vadd.f32 0.0, %v2448
        %v2450 = vpop.f32.mrf.mxu0
        %v2451 = vadd.f32 0.0, %v2450
        %2452 = vmatmul.bf16.gmra.mxu0 %v2377
        %v2453 = vpop.f32.mrf.mxu0
        %v2454 = vadd.f32 0.0, %v2453
        %v2455 = vpop.f32.mrf.mxu0
        %v2456 = vadd.f32 0.0, %v2455
        %2457 = vmatmul.bf16.gmra.mxu0 %v2380
        %v2458 = vpop.f32.mrf.mxu0
        %v2459 = vadd.f32 0.0, %v2458
        %v2460 = vpop.f32.mrf.mxu0
        %v2461 = vadd.f32 0.0, %v2460
        %2462 = vmatmul.bf16.gmra.mxu0 %v2383
        %v2463 = vpop.f32.mrf.mxu0
        %v2464 = vadd.f32 0.0, %v2463
        %v2465 = vpop.f32.mrf.mxu0
        %v2466 = vadd.f32 0.0, %v2465
        %2467 = vmatmul.bf16.gmra.mxu0 %v2386
        %v2468 = vpop.f32.mrf.mxu0
        %v2469 = vadd.f32 0.0, %v2468
        %v2470 = vpop.f32.mrf.mxu0
        %v2471 = vadd.f32 0.0, %v2470
        %2472 = vmatmul.bf16.gmra.mxu0 %v2389
        %v2473 = vpop.f32.mrf.mxu0
        %v2474 = vadd.f32 0.0, %v2473
        %v2475 = vpop.f32.mrf.mxu0
        %v2476 = vadd.f32 0.0, %v2475
        %2477 = vmatmul.bf16.gmra.mxu0 %v2392
        %v2478 = vpop.f32.mrf.mxu0
        %v2479 = vadd.f32 0.0, %v2478
        %v2480 = vpop.f32.mrf.mxu0
        %v2481 = vadd.f32 0.0, %v2480
        %2482 = vdwg.mxu0
        %2483 = vmatpush.bf16.msra.mxu0 0
        %2484 = vmatpush.bf16.msra.mxu0 0
        %2485 = vmatpush.bf16.msra.mxu0 0
        %2486 = vmatpush.bf16.msra.mxu0 0
        %2487 = vmatpush.bf16.msra.mxu0 0
        %2488 = vmatpush.bf16.msra.mxu0 0
        %2489 = vmatpush.bf16.msra.mxu0 %v2341
        %2490 = vmatpush.bf16.msra.mxu0 %v2339
        %2491 = vmatmul.bf16.gmra.mxu0 %v2347
        %v2492 = vpop.f32.mrf.mxu0
        %v2493 = vadd.f32 0.0, %v2492
        %v2494 = vpop.f32.mrf.mxu0
        %v2495 = vadd.f32 0.0, %v2494
        %2496 = vmatmul.bf16.gmra.mxu0 %v2350
        %v2497 = vpop.f32.mrf.mxu0
        %v2498 = vadd.f32 0.0, %v2497
        %v2499 = vpop.f32.mrf.mxu0
        %v2500 = vadd.f32 0.0, %v2499
        %2501 = vmatmul.bf16.gmra.mxu0 %v2353
        %v2502 = vpop.f32.mrf.mxu0
        %v2503 = vadd.f32 0.0, %v2502
        %v2504 = vpop.f32.mrf.mxu0
        %v2505 = vadd.f32 0.0, %v2504
        %2506 = vmatmul.bf16.gmra.mxu0 %v2356
        %v2507 = vpop.f32.mrf.mxu0
        %v2508 = vadd.f32 0.0, %v2507
        %v2509 = vpop.f32.mrf.mxu0
        %v2510 = vadd.f32 0.0, %v2509
        %2511 = vmatmul.bf16.gmra.mxu0 %v2359
        %v2512 = vpop.f32.mrf.mxu0
        %v2513 = vadd.f32 0.0, %v2512
        %v2514 = vpop.f32.mrf.mxu0
        %v2515 = vadd.f32 0.0, %v2514
        %2516 = vmatmul.bf16.gmra.mxu0 %v2362
        %v2517 = vpop.f32.mrf.mxu0
        %v2518 = vadd.f32 0.0, %v2517
        %v2519 = vpop.f32.mrf.mxu0
        %v2520 = vadd.f32 0.0, %v2519
        %2521 = vmatmul.bf16.gmra.mxu0 %v2365
        %v2522 = vpop.f32.mrf.mxu0
        %v2523 = vadd.f32 0.0, %v2522
        %v2524 = vpop.f32.mrf.mxu0
        %v2525 = vadd.f32 0.0, %v2524
        %2526 = vmatmul.bf16.gmra.mxu0 %v2368
        %v2527 = vpop.f32.mrf.mxu0
        %v2528 = vadd.f32 0.0, %v2527
        %v2529 = vpop.f32.mrf.mxu0
        %v2530 = vadd.f32 0.0, %v2529
        %2531 = vmatmul.bf16.gmra.mxu0 %v2371
        %v2532 = vpop.f32.mrf.mxu0
        %v2533 = vadd.f32 0.0, %v2532
        %v2534 = vpop.f32.mrf.mxu0
        %v2535 = vadd.f32 0.0, %v2534
        %2536 = vmatmul.bf16.gmra.mxu0 %v2374
        %v2537 = vpop.f32.mrf.mxu0
        %v2538 = vadd.f32 0.0, %v2537
        %v2539 = vpop.f32.mrf.mxu0
        %v2540 = vadd.f32 0.0, %v2539
        %2541 = vmatmul.bf16.gmra.mxu0 %v2377
        %v2542 = vpop.f32.mrf.mxu0
        %v2543 = vadd.f32 0.0, %v2542
        %v2544 = vpop.f32.mrf.mxu0
        %v2545 = vadd.f32 0.0, %v2544
        %2546 = vmatmul.bf16.gmra.mxu0 %v2380
        %v2547 = vpop.f32.mrf.mxu0
        %v2548 = vadd.f32 0.0, %v2547
        %v2549 = vpop.f32.mrf.mxu0
        %v2550 = vadd.f32 0.0, %v2549
        %2551 = vmatmul.bf16.gmra.mxu0 %v2383
        %v2552 = vpop.f32.mrf.mxu0
        %v2553 = vadd.f32 0.0, %v2552
        %v2554 = vpop.f32.mrf.mxu0
        %v2555 = vadd.f32 0.0, %v2554
        %2556 = vmatmul.bf16.gmra.mxu0 %v2386
        %v2557 = vpop.f32.mrf.mxu0
        %v2558 = vadd.f32 0.0, %v2557
        %v2559 = vpop.f32.mrf.mxu0
        %v2560 = vadd.f32 0.0, %v2559
        %2561 = vmatmul.bf16.gmra.mxu0 %v2389
        %v2562 = vpop.f32.mrf.mxu0
        %v2563 = vadd.f32 0.0, %v2562
        %v2564 = vpop.f32.mrf.mxu0
        %v2565 = vadd.f32 0.0, %v2564
        %2566 = vmatmul.bf16.gmra.mxu0 %v2392
        %v2567 = vpop.f32.mrf.mxu0
        %v2568 = vadd.f32 0.0, %v2567
        %v2569 = vpop.f32.mrf.mxu0
        %v2570 = vadd.f32 0.0, %v2569
        %2571 = vdwg.mxu0
        %v2572 = vmax.f32 %v1426, %v1515
        %2573 = vmax.xlane.f32.xlu0 %v2572
        %v2574 = vpop.xlane.xlu0 %2573
        %v2575 = vmax.f32 %v1428, %v1517
        %2576 = vmax.xlane.f32.xlu0 %v2575
        %v2577 = vpop.xlane.xlu0 %2576
        %v2578 = vmax.f32 %v1431, %v1520
        %2579 = vmax.xlane.f32.xlu0 %v2578
        %v2580 = vpop.xlane.xlu0 %2579
        %v2581 = vmax.f32 %v1433, %v1522
        %2582 = vmax.xlane.f32.xlu0 %v2581
        %v2583 = vpop.xlane.xlu0 %2582
        %v2584 = vmax.f32 %v1436, %v1525
        %2585 = vmax.xlane.f32.xlu0 %v2584
        %v2586 = vpop.xlane.xlu0 %2585
        %v2587 = vmax.f32 %v1438, %v1527
        %2588 = vmax.xlane.f32.xlu0 %v2587
        %v2589 = vpop.xlane.xlu0 %2588
        %v2590 = vmax.f32 %v1441, %v1530
        %2591 = vmax.xlane.f32.xlu0 %v2590
        %v2592 = vpop.xlane.xlu0 %2591
        %v2593 = vmax.f32 %v1443, %v1532
        %2594 = vmax.xlane.f32.xlu0 %v2593
        %v2595 = vpop.xlane.xlu0 %2594
        %v2596 = vmax.f32 %v1446, %v1535
        %2597 = vmax.xlane.f32.xlu0 %v2596
        %v2598 = vpop.xlane.xlu0 %2597
        %v2599 = vmax.f32 %v1448, %v1537
        %2600 = vmax.xlane.f32.xlu0 %v2599
        %v2601 = vpop.xlane.xlu0 %2600
        %v2602 = vmax.f32 %v1451, %v1540
        %2603 = vmax.xlane.f32.xlu0 %v2602
        %v2604 = vpop.xlane.xlu0 %2603
        %v2605 = vmax.f32 %v1453, %v1542
        %2606 = vmax.xlane.f32.xlu0 %v2605
        %v2607 = vpop.xlane.xlu0 %2606
        %v2608 = vmax.f32 %v1456, %v1545
        %2609 = vmax.xlane.f32.xlu0 %v2608
        %v2610 = vpop.xlane.xlu0 %2609
        %v2611 = vmax.f32 %v1458, %v1547
        %2612 = vmax.xlane.f32.xlu0 %v2611
        %v2613 = vpop.xlane.xlu0 %2612
        %v2614 = vmax.f32 %v1461, %v1550
        %2615 = vmax.xlane.f32.xlu0 %v2614
        %v2616 = vpop.xlane.xlu0 %2615
        %v2617 = vmax.f32 %v1463, %v1552
        %2618 = vmax.xlane.f32.xlu0 %v2617
        %v2619 = vpop.xlane.xlu0 %2618
        %v2620 = vmax.f32 %v1466, %v1555
        %2621 = vmax.xlane.f32.xlu0 %v2620
        %v2622 = vpop.xlane.xlu0 %2621
        %v2623 = vmax.f32 %v1468, %v1557
        %2624 = vmax.xlane.f32.xlu0 %v2623
        %v2625 = vpop.xlane.xlu0 %2624
        %v2626 = vmax.f32 %v1471, %v1560
        %2627 = vmax.xlane.f32.xlu0 %v2626
        %v2628 = vpop.xlane.xlu0 %2627
        %v2629 = vmax.f32 %v1473, %v1562
        %2630 = vmax.xlane.f32.xlu0 %v2629
        %v2631 = vpop.xlane.xlu0 %2630
        %v2632 = vmax.f32 %v1476, %v1565
        %2633 = vmax.xlane.f32.xlu0 %v2632
        %v2634 = vpop.xlane.xlu0 %2633
        %v2635 = vmax.f32 %v1478, %v1567
        %2636 = vmax.xlane.f32.xlu0 %v2635
        %v2637 = vpop.xlane.xlu0 %2636
        %v2638 = vmax.f32 %v1481, %v1570
        %2639 = vmax.xlane.f32.xlu0 %v2638
        %v2640 = vpop.xlane.xlu0 %2639
        %v2641 = vmax.f32 %v1483, %v1572
        %2642 = vmax.xlane.f32.xlu0 %v2641
        %v2643 = vpop.xlane.xlu0 %2642
        %v2644 = vmax.f32 %v1486, %v1575
        %2645 = vmax.xlane.f32.xlu0 %v2644
        %v2646 = vpop.xlane.xlu0 %2645
        %v2647 = vmax.f32 %v1488, %v1577
        %2648 = vmax.xlane.f32.xlu0 %v2647
        %v2649 = vpop.xlane.xlu0 %2648
        %v2650 = vmax.f32 %v1491, %v1580
        %2651 = vmax.xlane.f32.xlu0 %v2650
        %v2652 = vpop.xlane.xlu0 %2651
        %v2653 = vmax.f32 %v1493, %v1582
        %2654 = vmax.xlane.f32.xlu0 %v2653
        %v2655 = vpop.xlane.xlu0 %2654
        %v2656 = vmax.f32 %v1496, %v1585
        %2657 = vmax.xlane.f32.xlu0 %v2656
        %v2658 = vpop.xlane.xlu0 %2657
        %v2659 = vmax.f32 %v1498, %v1587
        %2660 = vmax.xlane.f32.xlu0 %v2659
        %v2661 = vpop.xlane.xlu0 %2660
        %v2662 = vmax.f32 %v1501, %v1590
        %2663 = vmax.xlane.f32.xlu0 %v2662
        %v2664 = vpop.xlane.xlu0 %2663
        %v2665 = vmax.f32 %v1503, %v1592
        %2666 = vmax.xlane.f32.xlu0 %v2665
        %v2667 = vpop.xlane.xlu0 %2666
        %v2668 = vmax.f32 %v1752, %v1841
        %2669 = vmax.xlane.f32.xlu0 %v2668
        %v2670 = vpop.xlane.xlu0 %2669
        %v2671 = vmax.f32 %v1754, %v1843
        %2672 = vmax.xlane.f32.xlu0 %v2671
        %v2673 = vpop.xlane.xlu0 %2672
        %v2674 = vmax.f32 %v1757, %v1846
        %2675 = vmax.xlane.f32.xlu0 %v2674
        %v2676 = vpop.xlane.xlu0 %2675
        %v2677 = vmax.f32 %v1759, %v1848
        %2678 = vmax.xlane.f32.xlu0 %v2677
        %v2679 = vpop.xlane.xlu0 %2678
        %v2680 = vmax.f32 %v1762, %v1851
        %2681 = vmax.xlane.f32.xlu0 %v2680
        %v2682 = vpop.xlane.xlu0 %2681
        %v2683 = vmax.f32 %v1764, %v1853
        %2684 = vmax.xlane.f32.xlu0 %v2683
        %v2685 = vpop.xlane.xlu0 %2684
        %v2686 = vmax.f32 %v1767, %v1856
        %2687 = vmax.xlane.f32.xlu0 %v2686
        %v2688 = vpop.xlane.xlu0 %2687
        %v2689 = vmax.f32 %v1769, %v1858
        %2690 = vmax.xlane.f32.xlu0 %v2689
        %v2691 = vpop.xlane.xlu0 %2690
        %v2692 = vmax.f32 %v1772, %v1861
        %2693 = vmax.xlane.f32.xlu0 %v2692
        %v2694 = vpop.xlane.xlu0 %2693
        %v2695 = vmax.f32 %v1774, %v1863
        %2696 = vmax.xlane.f32.xlu0 %v2695
        %v2697 = vpop.xlane.xlu0 %2696
        %v2698 = vmax.f32 %v1777, %v1866
        %2699 = vmax.xlane.f32.xlu0 %v2698
        %v2700 = vpop.xlane.xlu0 %2699
        %v2701 = vmax.f32 %v1779, %v1868
        %2702 = vmax.xlane.f32.xlu0 %v2701
        %v2703 = vpop.xlane.xlu0 %2702
        %v2704 = vmax.f32 %v1782, %v1871
        %2705 = vmax.xlane.f32.xlu0 %v2704
        %v2706 = vpop.xlane.xlu0 %2705
        %v2707 = vmax.f32 %v1784, %v1873
        %2708 = vmax.xlane.f32.xlu0 %v2707
        %v2709 = vpop.xlane.xlu0 %2708
        %v2710 = vmax.f32 %v1787, %v1876
        %2711 = vmax.xlane.f32.xlu0 %v2710
        %v2712 = vpop.xlane.xlu0 %2711
        %v2713 = vmax.f32 %v1789, %v1878
        %2714 = vmax.xlane.f32.xlu0 %v2713
        %v2715 = vpop.xlane.xlu0 %2714
        %v2716 = vmax.f32 %v1792, %v1881
        %2717 = vmax.xlane.f32.xlu0 %v2716
        %v2718 = vpop.xlane.xlu0 %2717
        %v2719 = vmax.f32 %v1794, %v1883
        %2720 = vmax.xlane.f32.xlu0 %v2719
        %v2721 = vpop.xlane.xlu0 %2720
        %v2722 = vmax.f32 %v1797, %v1886
        %2723 = vmax.xlane.f32.xlu0 %v2722
        %v2724 = vpop.xlane.xlu0 %2723
        %v2725 = vmax.f32 %v1799, %v1888
        %2726 = vmax.xlane.f32.xlu0 %v2725
        %v2727 = vpop.xlane.xlu0 %2726
        %v2728 = vmax.f32 %v1802, %v1891
        %2729 = vmax.xlane.f32.xlu0 %v2728
        %v2730 = vpop.xlane.xlu0 %2729
        %v2731 = vmax.f32 %v1804, %v1893
        %2732 = vmax.xlane.f32.xlu0 %v2731
        %v2733 = vpop.xlane.xlu0 %2732
        %v2734 = vmax.f32 %v1807, %v1896
        %2735 = vmax.xlane.f32.xlu0 %v2734
        %v2736 = vpop.xlane.xlu0 %2735
        %v2737 = vmax.f32 %v1809, %v1898
        %2738 = vmax.xlane.f32.xlu0 %v2737
        %v2739 = vpop.xlane.xlu0 %2738
        %v2740 = vmax.f32 %v1812, %v1901
        %2741 = vmax.xlane.f32.xlu0 %v2740
        %v2742 = vpop.xlane.xlu0 %2741
        %v2743 = vmax.f32 %v1814, %v1903
        %2744 = vmax.xlane.f32.xlu0 %v2743
        %v2745 = vpop.xlane.xlu0 %2744
        %v2746 = vmax.f32 %v1817, %v1906
        %2747 = vmax.xlane.f32.xlu0 %v2746
        %v2748 = vpop.xlane.xlu0 %2747
        %v2749 = vmax.f32 %v1819, %v1908
        %2750 = vmax.xlane.f32.xlu0 %v2749
        %v2751 = vpop.xlane.xlu0 %2750
        %v2752 = vmax.f32 %v1822, %v1911
        %2753 = vmax.xlane.f32.xlu0 %v2752
        %v2754 = vpop.xlane.xlu0 %2753
        %v2755 = vmax.f32 %v1824, %v1913
        %2756 = vmax.xlane.f32.xlu0 %v2755
        %v2757 = vpop.xlane.xlu0 %2756
        %v2758 = vmax.f32 %v1827, %v1916
        %2759 = vmax.xlane.f32.xlu0 %v2758
        %v2760 = vpop.xlane.xlu0 %2759
        %v2761 = vmax.f32 %v1829, %v1918
        %2762 = vmax.xlane.f32.xlu0 %v2761
        %v2763 = vpop.xlane.xlu0 %2762
        %v2764 = vmax.f32 %v2078, %v2167
        %2765 = vmax.xlane.f32.xlu0 %v2764
        %v2766 = vpop.xlane.xlu0 %2765
        %v2767 = vmax.f32 %v2080, %v2169
        %2768 = vmax.xlane.f32.xlu0 %v2767
        %v2769 = vpop.xlane.xlu0 %2768
        %v2770 = vmax.f32 %v2083, %v2172
        %2771 = vmax.xlane.f32.xlu0 %v2770
        %v2772 = vpop.xlane.xlu0 %2771
        %v2773 = vmax.f32 %v2085, %v2174
        %2774 = vmax.xlane.f32.xlu0 %v2773
        %v2775 = vpop.xlane.xlu0 %2774
        %v2776 = vmax.f32 %v2088, %v2177
        %2777 = vmax.xlane.f32.xlu0 %v2776
        %v2778 = vpop.xlane.xlu0 %2777
        %v2779 = vmax.f32 %v2090, %v2179
        %2780 = vmax.xlane.f32.xlu0 %v2779
        %v2781 = vpop.xlane.xlu0 %2780
        %v2782 = vmax.f32 %v2093, %v2182
        %2783 = vmax.xlane.f32.xlu0 %v2782
        %v2784 = vpop.xlane.xlu0 %2783
        %v2785 = vmax.f32 %v2095, %v2184
        %2786 = vmax.xlane.f32.xlu0 %v2785
        %v2787 = vpop.xlane.xlu0 %2786
        %v2788 = vmax.f32 %v2098, %v2187
        %2789 = vmax.xlane.f32.xlu0 %v2788
        %v2790 = vpop.xlane.xlu0 %2789
        %v2791 = vmax.f32 %v2100, %v2189
        %2792 = vmax.xlane.f32.xlu0 %v2791
        %v2793 = vpop.xlane.xlu0 %2792
        %v2794 = vmax.f32 %v2103, %v2192
        %2795 = vmax.xlane.f32.xlu0 %v2794
        %v2796 = vpop.xlane.xlu0 %2795
        %v2797 = vmax.f32 %v2105, %v2194
        %2798 = vmax.xlane.f32.xlu0 %v2797
        %v2799 = vpop.xlane.xlu0 %2798
        %v2800 = vmax.f32 %v2108, %v2197
        %2801 = vmax.xlane.f32.xlu0 %v2800
        %v2802 = vpop.xlane.xlu0 %2801
        %v2803 = vmax.f32 %v2110, %v2199
        %2804 = vmax.xlane.f32.xlu0 %v2803
        %v2805 = vpop.xlane.xlu0 %2804
        %v2806 = vmax.f32 %v2113, %v2202
        %2807 = vmax.xlane.f32.xlu0 %v2806
        %v2808 = vpop.xlane.xlu0 %2807
        %v2809 = vmax.f32 %v2115, %v2204
        %2810 = vmax.xlane.f32.xlu0 %v2809
        %v2811 = vpop.xlane.xlu0 %2810
        %v2812 = vmax.f32 %v2118, %v2207
        %2813 = vmax.xlane.f32.xlu0 %v2812
        %v2814 = vpop.xlane.xlu0 %2813
        %v2815 = vmax.f32 %v2120, %v2209
        %2816 = vmax.xlane.f32.xlu0 %v2815
        %v2817 = vpop.xlane.xlu0 %2816
        %v2818 = vmax.f32 %v2123, %v2212
        %2819 = vmax.xlane.f32.xlu0 %v2818
        %v2820 = vpop.xlane.xlu0 %2819
        %v2821 = vmax.f32 %v2125, %v2214
        %2822 = vmax.xlane.f32.xlu0 %v2821
        %v2823 = vpop.xlane.xlu0 %2822
        %v2824 = vmax.f32 %v2128, %v2217
        %2825 = vmax.xlane.f32.xlu0 %v2824
        %v2826 = vpop.xlane.xlu0 %2825
        %v2827 = vmax.f32 %v2130, %v2219
        %2828 = vmax.xlane.f32.xlu0 %v2827
        %v2829 = vpop.xlane.xlu0 %2828
        %v2830 = vmax.f32 %v2133, %v2222
        %2831 = vmax.xlane.f32.xlu0 %v2830
        %v2832 = vpop.xlane.xlu0 %2831
        %v2833 = vmax.f32 %v2135, %v2224
        %2834 = vmax.xlane.f32.xlu0 %v2833
        %v2835 = vpop.xlane.xlu0 %2834
        %v2836 = vmax.f32 %v2138, %v2227
        %2837 = vmax.xlane.f32.xlu0 %v2836
        %v2838 = vpop.xlane.xlu0 %2837
        %v2839 = vmax.f32 %v2140, %v2229
        %2840 = vmax.xlane.f32.xlu0 %v2839
        %v2841 = vpop.xlane.xlu0 %2840
        %v2842 = vmax.f32 %v2143, %v2232
        %2843 = vmax.xlane.f32.xlu0 %v2842
        %v2844 = vpop.xlane.xlu0 %2843
        %v2845 = vmax.f32 %v2145, %v2234
        %2846 = vmax.xlane.f32.xlu0 %v2845
        %v2847 = vpop.xlane.xlu0 %2846
        %v2848 = vmax.f32 %v2148, %v2237
        %2849 = vmax.xlane.f32.xlu0 %v2848
        %v2850 = vpop.xlane.xlu0 %2849
        %v2851 = vmax.f32 %v2150, %v2239
        %2852 = vmax.xlane.f32.xlu0 %v2851
        %v2853 = vpop.xlane.xlu0 %2852
        %v2854 = vmax.f32 %v2153, %v2242
        %2855 = vmax.xlane.f32.xlu0 %v2854
        %v2856 = vpop.xlane.xlu0 %2855
        %v2857 = vmax.f32 %v2155, %v2244
        %2858 = vmax.xlane.f32.xlu0 %v2857
        %v2859 = vpop.xlane.xlu0 %2858
        %v2860 = vmax.f32 %v2404, %v2493
        %2861 = vmax.xlane.f32.xlu0 %v2860
        %v2862 = vpop.xlane.xlu0 %2861
        %v2863 = vmax.f32 %v2406, %v2495
        %2864 = vmax.xlane.f32.xlu0 %v2863
        %v2865 = vpop.xlane.xlu0 %2864
        %v2866 = vmax.f32 %v2409, %v2498
        %2867 = vmax.xlane.f32.xlu0 %v2866
        %v2868 = vpop.xlane.xlu0 %2867
        %v2869 = vmax.f32 %v2411, %v2500
        %2870 = vmax.xlane.f32.xlu0 %v2869
        %v2871 = vpop.xlane.xlu0 %2870
        %v2872 = vmax.f32 %v2414, %v2503
        %2873 = vmax.xlane.f32.xlu0 %v2872
        %v2874 = vpop.xlane.xlu0 %2873
        %v2875 = vmax.f32 %v2416, %v2505
        %2876 = vmax.xlane.f32.xlu0 %v2875
        %v2877 = vpop.xlane.xlu0 %2876
        %v2878 = vmax.f32 %v2419, %v2508
        %2879 = vmax.xlane.f32.xlu0 %v2878
        %v2880 = vpop.xlane.xlu0 %2879
        %v2881 = vmax.f32 %v2421, %v2510
        %2882 = vmax.xlane.f32.xlu0 %v2881
        %v2883 = vpop.xlane.xlu0 %2882
        %v2884 = vmax.f32 %v2424, %v2513
        %2885 = vmax.xlane.f32.xlu0 %v2884
        %v2886 = vpop.xlane.xlu0 %2885
        %v2887 = vmax.f32 %v2426, %v2515
        %2888 = vmax.xlane.f32.xlu0 %v2887
        %v2889 = vpop.xlane.xlu0 %2888
        %v2890 = vmax.f32 %v2429, %v2518
        %2891 = vmax.xlane.f32.xlu0 %v2890
        %v2892 = vpop.xlane.xlu0 %2891
        %v2893 = vmax.f32 %v2431, %v2520
        %2894 = vmax.xlane.f32.xlu0 %v2893
        %v2895 = vpop.xlane.xlu0 %2894
        %v2896 = vmax.f32 %v2434, %v2523
        %2897 = vmax.xlane.f32.xlu0 %v2896
        %v2898 = vpop.xlane.xlu0 %2897
        %v2899 = vmax.f32 %v2436, %v2525
        %2900 = vmax.xlane.f32.xlu0 %v2899
        %v2901 = vpop.xlane.xlu0 %2900
        %v2902 = vmax.f32 %v2439, %v2528
        %2903 = vmax.xlane.f32.xlu0 %v2902
        %v2904 = vpop.xlane.xlu0 %2903
        %v2905 = vmax.f32 %v2441, %v2530
        %2906 = vmax.xlane.f32.xlu0 %v2905
        %v2907 = vpop.xlane.xlu0 %2906
        %v2908 = vmax.f32 %v2444, %v2533
        %2909 = vmax.xlane.f32.xlu0 %v2908
        %v2910 = vpop.xlane.xlu0 %2909
        %v2911 = vmax.f32 %v2446, %v2535
        %2912 = vmax.xlane.f32.xlu0 %v2911
        %v2913 = vpop.xlane.xlu0 %2912
        %v2914 = vmax.f32 %v2449, %v2538
        %2915 = vmax.xlane.f32.xlu0 %v2914
        %v2916 = vpop.xlane.xlu0 %2915
        %v2917 = vmax.f32 %v2451, %v2540
        %2918 = vmax.xlane.f32.xlu0 %v2917
        %v2919 = vpop.xlane.xlu0 %2918
        %v2920 = vmax.f32 %v2454, %v2543
        %2921 = vmax.xlane.f32.xlu0 %v2920
        %v2922 = vpop.xlane.xlu0 %2921
        %v2923 = vmax.f32 %v2456, %v2545
        %2924 = vmax.xlane.f32.xlu0 %v2923
        %v2925 = vpop.xlane.xlu0 %2924
        %v2926 = vmax.f32 %v2459, %v2548
        %2927 = vmax.xlane.f32.xlu0 %v2926
        %v2928 = vpop.xlane.xlu0 %2927
        %v2929 = vmax.f32 %v2461, %v2550
        %2930 = vmax.xlane.f32.xlu0 %v2929
        %v2931 = vpop.xlane.xlu0 %2930
        %v2932 = vmax.f32 %v2464, %v2553
        %2933 = vmax.xlane.f32.xlu0 %v2932
        %v2934 = vpop.xlane.xlu0 %2933
        %v2935 = vmax.f32 %v2466, %v2555
        %2936 = vmax.xlane.f32.xlu0 %v2935
        %v2937 = vpop.xlane.xlu0 %2936
        %v2938 = vmax.f32 %v2469, %v2558
        %2939 = vmax.xlane.f32.xlu0 %v2938
        %v2940 = vpop.xlane.xlu0 %2939
        %v2941 = vmax.f32 %v2471, %v2560
        %2942 = vmax.xlane.f32.xlu0 %v2941
        %v2943 = vpop.xlane.xlu0 %2942
        %v2944 = vmax.f32 %v2474, %v2563
        %2945 = vmax.xlane.f32.xlu0 %v2944
        %v2946 = vpop.xlane.xlu0 %2945
        %v2947 = vmax.f32 %v2476, %v2565
        %2948 = vmax.xlane.f32.xlu0 %v2947
        %v2949 = vpop.xlane.xlu0 %2948
        %v2950 = vmax.f32 %v2479, %v2568
        %2951 = vmax.xlane.f32.xlu0 %v2950
        %v2952 = vpop.xlane.xlu0 %2951
        %v2953 = vmax.f32 %v2481, %v2570
        %2954 = vmax.xlane.f32.xlu0 %v2953
        %v2955 = vpop.xlane.xlu0 %2954
        %v2956 = vsub.f32 %v1426, %v2574
        %v2957 = vsub.f32 %v1515, %v2574
        %v2958 = vsub.f32 %v1428, %v2577
        %v2959 = vsub.f32 %v1517, %v2577
        %v2960 = vsub.f32 %v1431, %v2580
        %v2961 = vsub.f32 %v1520, %v2580
        %v2962 = vsub.f32 %v1433, %v2583
        %v2963 = vsub.f32 %v1522, %v2583
        %v2964 = vsub.f32 %v1436, %v2586
        %v2965 = vsub.f32 %v1525, %v2586
        %v2966 = vsub.f32 %v1438, %v2589
        %v2967 = vsub.f32 %v1527, %v2589
        %v2968 = vsub.f32 %v1441, %v2592
        %v2969 = vsub.f32 %v1530, %v2592
        %v2970 = vsub.f32 %v1443, %v2595
        %v2971 = vsub.f32 %v1532, %v2595
        %v2972 = vsub.f32 %v1446, %v2598
        %v2973 = vsub.f32 %v1535, %v2598
        %v2974 = vsub.f32 %v1448, %v2601
        %v2975 = vsub.f32 %v1537, %v2601
        %v2976 = vsub.f32 %v1451, %v2604
        %v2977 = vsub.f32 %v1540, %v2604
        %v2978 = vsub.f32 %v1453, %v2607
        %v2979 = vsub.f32 %v1542, %v2607
        %v2980 = vsub.f32 %v1456, %v2610
        %v2981 = vsub.f32 %v1545, %v2610
        %v2982 = vsub.f32 %v1458, %v2613
        %v2983 = vsub.f32 %v1547, %v2613
        %v2984 = vsub.f32 %v1461, %v2616
        %v2985 = vsub.f32 %v1550, %v2616
        %v2986 = vsub.f32 %v1463, %v2619
        %v2987 = vsub.f32 %v1552, %v2619
        %v2988 = vsub.f32 %v1466, %v2622
        %v2989 = vsub.f32 %v1555, %v2622
        %v2990 = vsub.f32 %v1468, %v2625
        %v2991 = vsub.f32 %v1557, %v2625
        %v2992 = vsub.f32 %v1471, %v2628
        %v2993 = vsub.f32 %v1560, %v2628
        %v2994 = vsub.f32 %v1473, %v2631
        %v2995 = vsub.f32 %v1562, %v2631
        %v2996 = vsub.f32 %v1476, %v2634
        %v2997 = vsub.f32 %v1565, %v2634
        %v2998 = vsub.f32 %v1478, %v2637
        %v2999 = vsub.f32 %v1567, %v2637
        %v3000 = vsub.f32 %v1481, %v2640
        %v3001 = vsub.f32 %v1570, %v2640
        %v3002 = vsub.f32 %v1483, %v2643
        %v3003 = vsub.f32 %v1572, %v2643
        %v3004 = vsub.f32 %v1486, %v2646
        %v3005 = vsub.f32 %v1575, %v2646
        %v3006 = vsub.f32 %v1488, %v2649
        %v3007 = vsub.f32 %v1577, %v2649
        %v3008 = vsub.f32 %v1491, %v2652
        %v3009 = vsub.f32 %v1580, %v2652
        %v3010 = vsub.f32 %v1493, %v2655
        %v3011 = vsub.f32 %v1582, %v2655
        %v3012 = vsub.f32 %v1496, %v2658
        %v3013 = vsub.f32 %v1585, %v2658
        %v3014 = vsub.f32 %v1498, %v2661
        %v3015 = vsub.f32 %v1587, %v2661
        %v3016 = vsub.f32 %v1501, %v2664
        %v3017 = vsub.f32 %v1590, %v2664
        %v3018 = vsub.f32 %v1503, %v2667
        %v3019 = vsub.f32 %v1592, %v2667
        %v3020 = vsub.f32 %v1752, %v2670
        %v3021 = vsub.f32 %v1841, %v2670
        %v3022 = vsub.f32 %v1754, %v2673
        %v3023 = vsub.f32 %v1843, %v2673
        %v3024 = vsub.f32 %v1757, %v2676
        %v3025 = vsub.f32 %v1846, %v2676
        %v3026 = vsub.f32 %v1759, %v2679
        %v3027 = vsub.f32 %v1848, %v2679
        %v3028 = vsub.f32 %v1762, %v2682
        %v3029 = vsub.f32 %v1851, %v2682
        %v3030 = vsub.f32 %v1764, %v2685
        %v3031 = vsub.f32 %v1853, %v2685
        %v3032 = vsub.f32 %v1767, %v2688
        %v3033 = vsub.f32 %v1856, %v2688
        %v3034 = vsub.f32 %v1769, %v2691
        %v3035 = vsub.f32 %v1858, %v2691
        %v3036 = vsub.f32 %v1772, %v2694
        %v3037 = vsub.f32 %v1861, %v2694
        %v3038 = vsub.f32 %v1774, %v2697
        %v3039 = vsub.f32 %v1863, %v2697
        %v3040 = vsub.f32 %v1777, %v2700
        %v3041 = vsub.f32 %v1866, %v2700
        %v3042 = vsub.f32 %v1779, %v2703
        %v3043 = vsub.f32 %v1868, %v2703
        %v3044 = vsub.f32 %v1782, %v2706
        %v3045 = vsub.f32 %v1871, %v2706
        %v3046 = vsub.f32 %v1784, %v2709
        %v3047 = vsub.f32 %v1873, %v2709
        %v3048 = vsub.f32 %v1787, %v2712
        %v3049 = vsub.f32 %v1876, %v2712
        %v3050 = vsub.f32 %v1789, %v2715
        %v3051 = vsub.f32 %v1878, %v2715
        %v3052 = vsub.f32 %v1792, %v2718
        %v3053 = vsub.f32 %v1881, %v2718
        %v3054 = vsub.f32 %v1794, %v2721
        %v3055 = vsub.f32 %v1883, %v2721
        %v3056 = vsub.f32 %v1797, %v2724
        %v3057 = vsub.f32 %v1886, %v2724
        %v3058 = vsub.f32 %v1799, %v2727
        %v3059 = vsub.f32 %v1888, %v2727
        %v3060 = vsub.f32 %v1802, %v2730
        %v3061 = vsub.f32 %v1891, %v2730
        %v3062 = vsub.f32 %v1804, %v2733
        %v3063 = vsub.f32 %v1893, %v2733
        %v3064 = vsub.f32 %v1807, %v2736
        %v3065 = vsub.f32 %v1896, %v2736
        %v3066 = vsub.f32 %v1809, %v2739
        %v3067 = vsub.f32 %v1898, %v2739
        %v3068 = vsub.f32 %v1812, %v2742
        %v3069 = vsub.f32 %v1901, %v2742
        %v3070 = vsub.f32 %v1814, %v2745
        %v3071 = vsub.f32 %v1903, %v2745
        %v3072 = vsub.f32 %v1817, %v2748
        %v3073 = vsub.f32 %v1906, %v2748
        %v3074 = vsub.f32 %v1819, %v2751
        %v3075 = vsub.f32 %v1908, %v2751
        %v3076 = vsub.f32 %v1822, %v2754
        %v3077 = vsub.f32 %v1911, %v2754
        %v3078 = vsub.f32 %v1824, %v2757
        %v3079 = vsub.f32 %v1913, %v2757
        %v3080 = vsub.f32 %v1827, %v2760
        %v3081 = vsub.f32 %v1916, %v2760
        %v3082 = vsub.f32 %v1829, %v2763
        %v3083 = vsub.f32 %v1918, %v2763
        %v3084 = vsub.f32 %v2078, %v2766
        %v3085 = vsub.f32 %v2167, %v2766
        %v3086 = vsub.f32 %v2080, %v2769
        %v3087 = vsub.f32 %v2169, %v2769
        %v3088 = vsub.f32 %v2083, %v2772
        %v3089 = vsub.f32 %v2172, %v2772
        %v3090 = vsub.f32 %v2085, %v2775
        %v3091 = vsub.f32 %v2174, %v2775
        %v3092 = vsub.f32 %v2088, %v2778
        %v3093 = vsub.f32 %v2177, %v2778
        %v3094 = vsub.f32 %v2090, %v2781
        %v3095 = vsub.f32 %v2179, %v2781
        %v3096 = vsub.f32 %v2093, %v2784
        %v3097 = vsub.f32 %v2182, %v2784
        %v3098 = vsub.f32 %v2095, %v2787
        %v3099 = vsub.f32 %v2184, %v2787
        %v3100 = vsub.f32 %v2098, %v2790
        %v3101 = vsub.f32 %v2187, %v2790
        %v3102 = vsub.f32 %v2100, %v2793
        %v3103 = vsub.f32 %v2189, %v2793
        %v3104 = vsub.f32 %v2103, %v2796
        %v3105 = vsub.f32 %v2192, %v2796
        %v3106 = vsub.f32 %v2105, %v2799
        %v3107 = vsub.f32 %v2194, %v2799
        %v3108 = vsub.f32 %v2108, %v2802
        %v3109 = vsub.f32 %v2197, %v2802
        %v3110 = vsub.f32 %v2110, %v2805
        %v3111 = vsub.f32 %v2199, %v2805
        %v3112 = vsub.f32 %v2113, %v2808
        %v3113 = vsub.f32 %v2202, %v2808
        %v3114 = vsub.f32 %v2115, %v2811
        %v3115 = vsub.f32 %v2204, %v2811
        %v3116 = vsub.f32 %v2118, %v2814
        %v3117 = vsub.f32 %v2207, %v2814
        %v3118 = vsub.f32 %v2120, %v2817
        %v3119 = vsub.f32 %v2209, %v2817
        %v3120 = vsub.f32 %v2123, %v2820
        %v3121 = vsub.f32 %v2212, %v2820
        %v3122 = vsub.f32 %v2125, %v2823
        %v3123 = vsub.f32 %v2214, %v2823
        %v3124 = vsub.f32 %v2128, %v2826
        %v3125 = vsub.f32 %v2217, %v2826
        %v3126 = vsub.f32 %v2130, %v2829
        %v3127 = vsub.f32 %v2219, %v2829
        %v3128 = vsub.f32 %v2133, %v2832
        %v3129 = vsub.f32 %v2222, %v2832
        %v3130 = vsub.f32 %v2135, %v2835
        %v3131 = vsub.f32 %v2224, %v2835
        %v3132 = vsub.f32 %v2138, %v2838
        %v3133 = vsub.f32 %v2227, %v2838
        %v3134 = vsub.f32 %v2140, %v2841
        %v3135 = vsub.f32 %v2229, %v2841
        %v3136 = vsub.f32 %v2143, %v2844
        %v3137 = vsub.f32 %v2232, %v2844
        %v3138 = vsub.f32 %v2145, %v2847
        %v3139 = vsub.f32 %v2234, %v2847
        %v3140 = vsub.f32 %v2148, %v2850
        %v3141 = vsub.f32 %v2237, %v2850
        %v3142 = vsub.f32 %v2150, %v2853
        %v3143 = vsub.f32 %v2239, %v2853
        %v3144 = vsub.f32 %v2153, %v2856
        %v3145 = vsub.f32 %v2242, %v2856
        %v3146 = vsub.f32 %v2155, %v2859
        %v3147 = vsub.f32 %v2244, %v2859
        %v3148 = vsub.f32 %v2404, %v2862
        %v3149 = vsub.f32 %v2493, %v2862
        %v3150 = vsub.f32 %v2406, %v2865
        %v3151 = vsub.f32 %v2495, %v2865
        %v3152 = vsub.f32 %v2409, %v2868
        %v3153 = vsub.f32 %v2498, %v2868
        %v3154 = vsub.f32 %v2411, %v2871
        %v3155 = vsub.f32 %v2500, %v2871
        %v3156 = vsub.f32 %v2414, %v2874
        %v3157 = vsub.f32 %v2503, %v2874
        %v3158 = vsub.f32 %v2416, %v2877
        %v3159 = vsub.f32 %v2505, %v2877
        %v3160 = vsub.f32 %v2419, %v2880
        %v3161 = vsub.f32 %v2508, %v2880
        %v3162 = vsub.f32 %v2421, %v2883
        %v3163 = vsub.f32 %v2510, %v2883
        %v3164 = vsub.f32 %v2424, %v2886
        %v3165 = vsub.f32 %v2513, %v2886
        %v3166 = vsub.f32 %v2426, %v2889
        %v3167 = vsub.f32 %v2515, %v2889
        %v3168 = vsub.f32 %v2429, %v2892
        %v3169 = vsub.f32 %v2518, %v2892
        %v3170 = vsub.f32 %v2431, %v2895
        %v3171 = vsub.f32 %v2520, %v2895
        %v3172 = vsub.f32 %v2434, %v2898
        %v3173 = vsub.f32 %v2523, %v2898
        %v3174 = vsub.f32 %v2436, %v2901
        %v3175 = vsub.f32 %v2525, %v2901
        %v3176 = vsub.f32 %v2439, %v2904
        %v3177 = vsub.f32 %v2528, %v2904
        %v3178 = vsub.f32 %v2441, %v2907
        %v3179 = vsub.f32 %v2530, %v2907
        %v3180 = vsub.f32 %v2444, %v2910
        %v3181 = vsub.f32 %v2533, %v2910
        %v3182 = vsub.f32 %v2446, %v2913
        %v3183 = vsub.f32 %v2535, %v2913
        %v3184 = vsub.f32 %v2449, %v2916
        %v3185 = vsub.f32 %v2538, %v2916
        %v3186 = vsub.f32 %v2451, %v2919
        %v3187 = vsub.f32 %v2540, %v2919
        %v3188 = vsub.f32 %v2454, %v2922
        %v3189 = vsub.f32 %v2543, %v2922
        %v3190 = vsub.f32 %v2456, %v2925
        %v3191 = vsub.f32 %v2545, %v2925
        %v3192 = vsub.f32 %v2459, %v2928
        %v3193 = vsub.f32 %v2548, %v2928
        %v3194 = vsub.f32 %v2461, %v2931
        %v3195 = vsub.f32 %v2550, %v2931
        %v3196 = vsub.f32 %v2464, %v2934
        %v3197 = vsub.f32 %v2553, %v2934
        %v3198 = vsub.f32 %v2466, %v2937
        %v3199 = vsub.f32 %v2555, %v2937
        %v3200 = vsub.f32 %v2469, %v2940
        %v3201 = vsub.f32 %v2558, %v2940
        %v3202 = vsub.f32 %v2471, %v2943
        %v3203 = vsub.f32 %v2560, %v2943
        %v3204 = vsub.f32 %v2474, %v2946
        %v3205 = vsub.f32 %v2563, %v2946
        %v3206 = vsub.f32 %v2476, %v2949
        %v3207 = vsub.f32 %v2565, %v2949
        %v3208 = vsub.f32 %v2479, %v2952
        %v3209 = vsub.f32 %v2568, %v2952
        %v3210 = vsub.f32 %v2481, %v2955
        %v3211 = vsub.f32 %v2570, %v2955
        %v3212 = vmul.f32 %v2956, 1.442695
        %v3213 = vpow.pop %v3212
        %v3214 = vmul.f32 %v2957, 1.442695
        %v3215 = vpow.pop %v3214
        %v3216 = vmul.f32 %v2958, 1.442695
        %v3217 = vpow.pop %v3216
        %v3218 = vmul.f32 %v2959, 1.442695
        %v3219 = vpow.pop %v3218
        %v3220 = vmul.f32 %v2960, 1.442695
        %v3221 = vpow.pop %v3220
        %v3222 = vmul.f32 %v2961, 1.442695
        %v3223 = vpow.pop %v3222
        %v3224 = vmul.f32 %v2962, 1.442695
        %v3225 = vpow.pop %v3224
        %v3226 = vmul.f32 %v2963, 1.442695
        %v3227 = vpow.pop %v3226
        %v3228 = vmul.f32 %v2964, 1.442695
        %v3229 = vpow.pop %v3228
        %v3230 = vmul.f32 %v2965, 1.442695
        %v3231 = vpow.pop %v3230
        %v3232 = vmul.f32 %v2966, 1.442695
        %v3233 = vpow.pop %v3232
        %v3234 = vmul.f32 %v2967, 1.442695
        %v3235 = vpow.pop %v3234
        %v3236 = vmul.f32 %v2968, 1.442695
        %v3237 = vpow.pop %v3236
        %v3238 = vmul.f32 %v2969, 1.442695
        %v3239 = vpow.pop %v3238
        %v3240 = vmul.f32 %v2970, 1.442695
        %v3241 = vpow.pop %v3240
        %v3242 = vmul.f32 %v2971, 1.442695
        %v3243 = vpow.pop %v3242
        %v3244 = vmul.f32 %v2972, 1.442695
        %v3245 = vpow.pop %v3244
        %v3246 = vmul.f32 %v2973, 1.442695
        %v3247 = vpow.pop %v3246
        %v3248 = vmul.f32 %v2974, 1.442695
        %v3249 = vpow.pop %v3248
        %v3250 = vmul.f32 %v2975, 1.442695
        %v3251 = vpow.pop %v3250
        %v3252 = vmul.f32 %v2976, 1.442695
        %v3253 = vpow.pop %v3252
        %v3254 = vmul.f32 %v2977, 1.442695
        %v3255 = vpow.pop %v3254
        %v3256 = vmul.f32 %v2978, 1.442695
        %v3257 = vpow.pop %v3256
        %v3258 = vmul.f32 %v2979, 1.442695
        %v3259 = vpow.pop %v3258
        %v3260 = vmul.f32 %v2980, 1.442695
        %v3261 = vpow.pop %v3260
        %v3262 = vmul.f32 %v2981, 1.442695
        %v3263 = vpow.pop %v3262
        %v3264 = vmul.f32 %v2982, 1.442695
        %v3265 = vpow.pop %v3264
        %v3266 = vmul.f32 %v2983, 1.442695
        %v3267 = vpow.pop %v3266
        %v3268 = vmul.f32 %v2984, 1.442695
        %v3269 = vpow.pop %v3268
        %v3270 = vmul.f32 %v2985, 1.442695
        %v3271 = vpow.pop %v3270
        %v3272 = vmul.f32 %v2986, 1.442695
        %v3273 = vpow.pop %v3272
        %v3274 = vmul.f32 %v2987, 1.442695
        %v3275 = vpow.pop %v3274
        %v3276 = vmul.f32 %v2988, 1.442695
        %v3277 = vpow.pop %v3276
        %v3278 = vmul.f32 %v2989, 1.442695
        %v3279 = vpow.pop %v3278
        %v3280 = vmul.f32 %v2990, 1.442695
        %v3281 = vpow.pop %v3280
        %v3282 = vmul.f32 %v2991, 1.442695
        %v3283 = vpow.pop %v3282
        %v3284 = vmul.f32 %v2992, 1.442695
        %v3285 = vpow.pop %v3284
        %v3286 = vmul.f32 %v2993, 1.442695
        %v3287 = vpow.pop %v3286
        %v3288 = vmul.f32 %v2994, 1.442695
        %v3289 = vpow.pop %v3288
        %v3290 = vmul.f32 %v2995, 1.442695
        %v3291 = vpow.pop %v3290
        %v3292 = vmul.f32 %v2996, 1.442695
        %v3293 = vpow.pop %v3292
        %v3294 = vmul.f32 %v2997, 1.442695
        %v3295 = vpow.pop %v3294
        %v3296 = vmul.f32 %v2998, 1.442695
        %v3297 = vpow.pop %v3296
        %v3298 = vmul.f32 %v2999, 1.442695
        %v3299 = vpow.pop %v3298
        %v3300 = vmul.f32 %v3000, 1.442695
        %v3301 = vpow.pop %v3300
        %v3302 = vmul.f32 %v3001, 1.442695
        %v3303 = vpow.pop %v3302
        %v3304 = vmul.f32 %v3002, 1.442695
        %v3305 = vpow.pop %v3304
        %v3306 = vmul.f32 %v3003, 1.442695
        %v3307 = vpow.pop %v3306
        %v3308 = vmul.f32 %v3004, 1.442695
        %v3309 = vpow.pop %v3308
        %v3310 = vmul.f32 %v3005, 1.442695
        %v3311 = vpow.pop %v3310
        %v3312 = vmul.f32 %v3006, 1.442695
        %v3313 = vpow.pop %v3312
        %v3314 = vmul.f32 %v3007, 1.442695
        %v3315 = vpow.pop %v3314
        %v3316 = vmul.f32 %v3008, 1.442695
        %v3317 = vpow.pop %v3316
        %v3318 = vmul.f32 %v3009, 1.442695
        %v3319 = vpow.pop %v3318
        %v3320 = vmul.f32 %v3010, 1.442695
        %v3321 = vpow.pop %v3320
        %v3322 = vmul.f32 %v3011, 1.442695
        %v3323 = vpow.pop %v3322
        %v3324 = vmul.f32 %v3012, 1.442695
        %v3325 = vpow.pop %v3324
        %v3326 = vmul.f32 %v3013, 1.442695
        %v3327 = vpow.pop %v3326
        %v3328 = vmul.f32 %v3014, 1.442695
        %v3329 = vpow.pop %v3328
        %v3330 = vmul.f32 %v3015, 1.442695
        %v3331 = vpow.pop %v3330
        %v3332 = vmul.f32 %v3016, 1.442695
        %v3333 = vpow.pop %v3332
        %v3334 = vmul.f32 %v3017, 1.442695
        %v3335 = vpow.pop %v3334
        %v3336 = vmul.f32 %v3018, 1.442695
        %v3337 = vpow.pop %v3336
        %v3338 = vmul.f32 %v3019, 1.442695
        %v3339 = vpow.pop %v3338
        %v3340 = vmul.f32 %v3020, 1.442695
        %v3341 = vpow.pop %v3340
        %v3342 = vmul.f32 %v3021, 1.442695
        %v3343 = vpow.pop %v3342
        %v3344 = vmul.f32 %v3022, 1.442695
        %v3345 = vpow.pop %v3344
        %v3346 = vmul.f32 %v3023, 1.442695
        %v3347 = vpow.pop %v3346
        %v3348 = vmul.f32 %v3024, 1.442695
        %v3349 = vpow.pop %v3348
        %v3350 = vmul.f32 %v3025, 1.442695
        %v3351 = vpow.pop %v3350
        %v3352 = vmul.f32 %v3026, 1.442695
        %v3353 = vpow.pop %v3352
        %v3354 = vmul.f32 %v3027, 1.442695
        %v3355 = vpow.pop %v3354
        %v3356 = vmul.f32 %v3028, 1.442695
        %v3357 = vpow.pop %v3356
        %v3358 = vmul.f32 %v3029, 1.442695
        %v3359 = vpow.pop %v3358
        %v3360 = vmul.f32 %v3030, 1.442695
        %v3361 = vpow.pop %v3360
        %v3362 = vmul.f32 %v3031, 1.442695
        %v3363 = vpow.pop %v3362
        %v3364 = vmul.f32 %v3032, 1.442695
        %v3365 = vpow.pop %v3364
        %v3366 = vmul.f32 %v3033, 1.442695
        %v3367 = vpow.pop %v3366
        %v3368 = vmul.f32 %v3034, 1.442695
        %v3369 = vpow.pop %v3368
        %v3370 = vmul.f32 %v3035, 1.442695
        %v3371 = vpow.pop %v3370
        %v3372 = vmul.f32 %v3036, 1.442695
        %v3373 = vpow.pop %v3372
        %v3374 = vmul.f32 %v3037, 1.442695
        %v3375 = vpow.pop %v3374
        %v3376 = vmul.f32 %v3038, 1.442695
        %v3377 = vpow.pop %v3376
        %v3378 = vmul.f32 %v3039, 1.442695
        %v3379 = vpow.pop %v3378
        %v3380 = vmul.f32 %v3040, 1.442695
        %v3381 = vpow.pop %v3380
        %v3382 = vmul.f32 %v3041, 1.442695
        %v3383 = vpow.pop %v3382
        %v3384 = vmul.f32 %v3042, 1.442695
        %v3385 = vpow.pop %v3384
        %v3386 = vmul.f32 %v3043, 1.442695
        %v3387 = vpow.pop %v3386
        %v3388 = vmul.f32 %v3044, 1.442695
        %v3389 = vpow.pop %v3388
        %v3390 = vmul.f32 %v3045, 1.442695
        %v3391 = vpow.pop %v3390
        %v3392 = vmul.f32 %v3046, 1.442695
        %v3393 = vpow.pop %v3392
        %v3394 = vmul.f32 %v3047, 1.442695
        %v3395 = vpow.pop %v3394
        %v3396 = vmul.f32 %v3048, 1.442695
        %v3397 = vpow.pop %v3396
        %v3398 = vmul.f32 %v3049, 1.442695
        %v3399 = vpow.pop %v3398
        %v3400 = vmul.f32 %v3050, 1.442695
        %v3401 = vpow.pop %v3400
        %v3402 = vmul.f32 %v3051, 1.442695
        %v3403 = vpow.pop %v3402
        %v3404 = vmul.f32 %v3052, 1.442695
        %v3405 = vpow.pop %v3404
        %v3406 = vmul.f32 %v3053, 1.442695
        %v3407 = vpow.pop %v3406
        %v3408 = vmul.f32 %v3054, 1.442695
        %v3409 = vpow.pop %v3408
        %v3410 = vmul.f32 %v3055, 1.442695
        %v3411 = vpow.pop %v3410
        %v3412 = vmul.f32 %v3056, 1.442695
        %v3413 = vpow.pop %v3412
        %v3414 = vmul.f32 %v3057, 1.442695
        %v3415 = vpow.pop %v3414
        %v3416 = vmul.f32 %v3058, 1.442695
        %v3417 = vpow.pop %v3416
        %v3418 = vmul.f32 %v3059, 1.442695
        %v3419 = vpow.pop %v3418
        %v3420 = vmul.f32 %v3060, 1.442695
        %v3421 = vpow.pop %v3420
        %v3422 = vmul.f32 %v3061, 1.442695
        %v3423 = vpow.pop %v3422
        %v3424 = vmul.f32 %v3062, 1.442695
        %v3425 = vpow.pop %v3424
        %v3426 = vmul.f32 %v3063, 1.442695
        %v3427 = vpow.pop %v3426
        %v3428 = vmul.f32 %v3064, 1.442695
        %v3429 = vpow.pop %v3428
        %v3430 = vmul.f32 %v3065, 1.442695
        %v3431 = vpow.pop %v3430
        %v3432 = vmul.f32 %v3066, 1.442695
        %v3433 = vpow.pop %v3432
        %v3434 = vmul.f32 %v3067, 1.442695
        %v3435 = vpow.pop %v3434
        %v3436 = vmul.f32 %v3068, 1.442695
        %v3437 = vpow.pop %v3436
        %v3438 = vmul.f32 %v3069, 1.442695
        %v3439 = vpow.pop %v3438
        %v3440 = vmul.f32 %v3070, 1.442695
        %v3441 = vpow.pop %v3440
        %v3442 = vmul.f32 %v3071, 1.442695
        %v3443 = vpow.pop %v3442
        %v3444 = vmul.f32 %v3072, 1.442695
        %v3445 = vpow.pop %v3444
        %v3446 = vmul.f32 %v3073, 1.442695
        %v3447 = vpow.pop %v3446
        %v3448 = vmul.f32 %v3074, 1.442695
        %v3449 = vpow.pop %v3448
        %v3450 = vmul.f32 %v3075, 1.442695
        %v3451 = vpow.pop %v3450
        %v3452 = vmul.f32 %v3076, 1.442695
        %v3453 = vpow.pop %v3452
        %v3454 = vmul.f32 %v3077, 1.442695
        %v3455 = vpow.pop %v3454
        %v3456 = vmul.f32 %v3078, 1.442695
        %v3457 = vpow.pop %v3456
        %v3458 = vmul.f32 %v3079, 1.442695
        %v3459 = vpow.pop %v3458
        %v3460 = vmul.f32 %v3080, 1.442695
        %v3461 = vpow.pop %v3460
        %v3462 = vmul.f32 %v3081, 1.442695
        %v3463 = vpow.pop %v3462
        %v3464 = vmul.f32 %v3082, 1.442695
        %v3465 = vpow.pop %v3464
        %v3466 = vmul.f32 %v3083, 1.442695
        %v3467 = vpow.pop %v3466
        %v3468 = vmul.f32 %v3084, 1.442695
        %v3469 = vpow.pop %v3468
        %v3470 = vmul.f32 %v3085, 1.442695
        %v3471 = vpow.pop %v3470
        %v3472 = vmul.f32 %v3086, 1.442695
        %v3473 = vpow.pop %v3472
        %v3474 = vmul.f32 %v3087, 1.442695
        %v3475 = vpow.pop %v3474
        %v3476 = vmul.f32 %v3088, 1.442695
        %v3477 = vpow.pop %v3476
        %v3478 = vmul.f32 %v3089, 1.442695
        %v3479 = vpow.pop %v3478
        %v3480 = vmul.f32 %v3090, 1.442695
        %v3481 = vpow.pop %v3480
        %v3482 = vmul.f32 %v3091, 1.442695
        %v3483 = vpow.pop %v3482
        %v3484 = vmul.f32 %v3092, 1.442695
        %v3485 = vpow.pop %v3484
        %v3486 = vmul.f32 %v3093, 1.442695
        %v3487 = vpow.pop %v3486
        %v3488 = vmul.f32 %v3094, 1.442695
        %v3489 = vpow.pop %v3488
        %v3490 = vmul.f32 %v3095, 1.442695
        %v3491 = vpow.pop %v3490
        %v3492 = vmul.f32 %v3096, 1.442695
        %v3493 = vpow.pop %v3492
        %v3494 = vmul.f32 %v3097, 1.442695
        %v3495 = vpow.pop %v3494
        %v3496 = vmul.f32 %v3098, 1.442695
        %v3497 = vpow.pop %v3496
        %v3498 = vmul.f32 %v3099, 1.442695
        %v3499 = vpow.pop %v3498
        %v3500 = vmul.f32 %v3100, 1.442695
        %v3501 = vpow.pop %v3500
        %v3502 = vmul.f32 %v3101, 1.442695
        %v3503 = vpow.pop %v3502
        %v3504 = vmul.f32 %v3102, 1.442695
        %v3505 = vpow.pop %v3504
        %v3506 = vmul.f32 %v3103, 1.442695
        %v3507 = vpow.pop %v3506
        %v3508 = vmul.f32 %v3104, 1.442695
        %v3509 = vpow.pop %v3508
        %v3510 = vmul.f32 %v3105, 1.442695
        %v3511 = vpow.pop %v3510
        %v3512 = vmul.f32 %v3106, 1.442695
        %v3513 = vpow.pop %v3512
        %v3514 = vmul.f32 %v3107, 1.442695
        %v3515 = vpow.pop %v3514
        %v3516 = vmul.f32 %v3108, 1.442695
        %v3517 = vpow.pop %v3516
        %v3518 = vmul.f32 %v3109, 1.442695
        %v3519 = vpow.pop %v3518
        %v3520 = vmul.f32 %v3110, 1.442695
        %v3521 = vpow.pop %v3520
        %v3522 = vmul.f32 %v3111, 1.442695
        %v3523 = vpow.pop %v3522
        %v3524 = vmul.f32 %v3112, 1.442695
        %v3525 = vpow.pop %v3524
        %v3526 = vmul.f32 %v3113, 1.442695
        %v3527 = vpow.pop %v3526
        %v3528 = vmul.f32 %v3114, 1.442695
        %v3529 = vpow.pop %v3528
        %v3530 = vmul.f32 %v3115, 1.442695
        %v3531 = vpow.pop %v3530
        %v3532 = vmul.f32 %v3116, 1.442695
        %v3533 = vpow.pop %v3532
        %v3534 = vmul.f32 %v3117, 1.442695
        %v3535 = vpow.pop %v3534
        %v3536 = vmul.f32 %v3118, 1.442695
        %v3537 = vpow.pop %v3536
        %v3538 = vmul.f32 %v3119, 1.442695
        %v3539 = vpow.pop %v3538
        %v3540 = vmul.f32 %v3120, 1.442695
        %v3541 = vpow.pop %v3540
        %v3542 = vmul.f32 %v3121, 1.442695
        %v3543 = vpow.pop %v3542
        %v3544 = vmul.f32 %v3122, 1.442695
        %v3545 = vpow.pop %v3544
        %v3546 = vmul.f32 %v3123, 1.442695
        %v3547 = vpow.pop %v3546
        %v3548 = vmul.f32 %v3124, 1.442695
        %v3549 = vpow.pop %v3548
        %v3550 = vmul.f32 %v3125, 1.442695
        %v3551 = vpow.pop %v3550
        %v3552 = vmul.f32 %v3126, 1.442695
        %v3553 = vpow.pop %v3552
        %v3554 = vmul.f32 %v3127, 1.442695
        %v3555 = vpow.pop %v3554
        %v3556 = vmul.f32 %v3128, 1.442695
        %v3557 = vpow.pop %v3556
        %v3558 = vmul.f32 %v3129, 1.442695
        %v3559 = vpow.pop %v3558
        %v3560 = vmul.f32 %v3130, 1.442695
        %v3561 = vpow.pop %v3560
        %v3562 = vmul.f32 %v3131, 1.442695
        %v3563 = vpow.pop %v3562
        %v3564 = vmul.f32 %v3132, 1.442695
        %v3565 = vpow.pop %v3564
        %v3566 = vmul.f32 %v3133, 1.442695
        %v3567 = vpow.pop %v3566
        %v3568 = vmul.f32 %v3134, 1.442695
        %v3569 = vpow.pop %v3568
        %v3570 = vmul.f32 %v3135, 1.442695
        %v3571 = vpow.pop %v3570
        %v3572 = vmul.f32 %v3136, 1.442695
        %v3573 = vpow.pop %v3572
        %v3574 = vmul.f32 %v3137, 1.442695
        %v3575 = vpow.pop %v3574
        %v3576 = vmul.f32 %v3138, 1.442695
        %v3577 = vpow.pop %v3576
        %v3578 = vmul.f32 %v3139, 1.442695
        %v3579 = vpow.pop %v3578
        %v3580 = vmul.f32 %v3140, 1.442695
        %v3581 = vpow.pop %v3580
        %v3582 = vmul.f32 %v3141, 1.442695
        %v3583 = vpow.pop %v3582
        %v3584 = vmul.f32 %v3142, 1.442695
        %v3585 = vpow.pop %v3584
        %v3586 = vmul.f32 %v3143, 1.442695
        %v3587 = vpow.pop %v3586
        %v3588 = vmul.f32 %v3144, 1.442695
        %v3589 = vpow.pop %v3588
        %v3590 = vmul.f32 %v3145, 1.442695
        %v3591 = vpow.pop %v3590
        %v3592 = vmul.f32 %v3146, 1.442695
        %v3593 = vpow.pop %v3592
        %v3594 = vmul.f32 %v3147, 1.442695
        %v3595 = vpow.pop %v3594
        %v3596 = vmul.f32 %v3148, 1.442695
        %v3597 = vpow.pop %v3596
        %v3598 = vmul.f32 %v3149, 1.442695
        %v3599 = vpow.pop %v3598
        %v3600 = vmul.f32 %v3150, 1.442695
        %v3601 = vpow.pop %v3600
        %v3602 = vmul.f32 %v3151, 1.442695
        %v3603 = vpow.pop %v3602
        %v3604 = vmul.f32 %v3152, 1.442695
        %v3605 = vpow.pop %v3604
        %v3606 = vmul.f32 %v3153, 1.442695
        %v3607 = vpow.pop %v3606
        %v3608 = vmul.f32 %v3154, 1.442695
        %v3609 = vpow.pop %v3608
        %v3610 = vmul.f32 %v3155, 1.442695
        %v3611 = vpow.pop %v3610
        %v3612 = vmul.f32 %v3156, 1.442695
        %v3613 = vpow.pop %v3612
        %v3614 = vmul.f32 %v3157, 1.442695
        %v3615 = vpow.pop %v3614
        %v3616 = vmul.f32 %v3158, 1.442695
        %v3617 = vpow.pop %v3616
        %v3618 = vmul.f32 %v3159, 1.442695
        %v3619 = vpow.pop %v3618
        %v3620 = vmul.f32 %v3160, 1.442695
        %v3621 = vpow.pop %v3620
        %v3622 = vmul.f32 %v3161, 1.442695
        %v3623 = vpow.pop %v3622
        %v3624 = vmul.f32 %v3162, 1.442695
        %v3625 = vpow.pop %v3624
        %v3626 = vmul.f32 %v3163, 1.442695
        %v3627 = vpow.pop %v3626
        %v3628 = vmul.f32 %v3164, 1.442695
        %v3629 = vpow.pop %v3628
        %v3630 = vmul.f32 %v3165, 1.442695
        %v3631 = vpow.pop %v3630
        %v3632 = vmul.f32 %v3166, 1.442695
        %v3633 = vpow.pop %v3632
        %v3634 = vmul.f32 %v3167, 1.442695
        %v3635 = vpow.pop %v3634
        %v3636 = vmul.f32 %v3168, 1.442695
        %v3637 = vpow.pop %v3636
        %v3638 = vmul.f32 %v3169, 1.442695
        %v3639 = vpow.pop %v3638
        %v3640 = vmul.f32 %v3170, 1.442695
        %v3641 = vpow.pop %v3640
        %v3642 = vmul.f32 %v3171, 1.442695
        %v3643 = vpow.pop %v3642
        %v3644 = vmul.f32 %v3172, 1.442695
        %v3645 = vpow.pop %v3644
        %v3646 = vmul.f32 %v3173, 1.442695
        %v3647 = vpow.pop %v3646
        %v3648 = vmul.f32 %v3174, 1.442695
        %v3649 = vpow.pop %v3648
        %v3650 = vmul.f32 %v3175, 1.442695
        %v3651 = vpow.pop %v3650
        %v3652 = vmul.f32 %v3176, 1.442695
        %v3653 = vpow.pop %v3652
        %v3654 = vmul.f32 %v3177, 1.442695
        %v3655 = vpow.pop %v3654
        %v3656 = vmul.f32 %v3178, 1.442695
        %v3657 = vpow.pop %v3656
        %v3658 = vmul.f32 %v3179, 1.442695
        %v3659 = vpow.pop %v3658
        %v3660 = vmul.f32 %v3180, 1.442695
        %v3661 = vpow.pop %v3660
        %v3662 = vmul.f32 %v3181, 1.442695
        %v3663 = vpow.pop %v3662
        %v3664 = vmul.f32 %v3182, 1.442695
        %v3665 = vpow.pop %v3664
        %v3666 = vmul.f32 %v3183, 1.442695
        %v3667 = vpow.pop %v3666
        %v3668 = vmul.f32 %v3184, 1.442695
        %v3669 = vpow.pop %v3668
        %v3670 = vmul.f32 %v3185, 1.442695
        %v3671 = vpow.pop %v3670
        %v3672 = vmul.f32 %v3186, 1.442695
        %v3673 = vpow.pop %v3672
        %v3674 = vmul.f32 %v3187, 1.442695
        %v3675 = vpow.pop %v3674
        %v3676 = vmul.f32 %v3188, 1.442695
        %v3677 = vpow.pop %v3676
        %v3678 = vmul.f32 %v3189, 1.442695
        %v3679 = vpow.pop %v3678
        %v3680 = vmul.f32 %v3190, 1.442695
        %v3681 = vpow.pop %v3680
        %v3682 = vmul.f32 %v3191, 1.442695
        %v3683 = vpow.pop %v3682
        %v3684 = vmul.f32 %v3192, 1.442695
        %v3685 = vpow.pop %v3684
        %v3686 = vmul.f32 %v3193, 1.442695
        %v3687 = vpow.pop %v3686
        %v3688 = vmul.f32 %v3194, 1.442695
        %v3689 = vpow.pop %v3688
        %v3690 = vmul.f32 %v3195, 1.442695
        %v3691 = vpow.pop %v3690
        %v3692 = vmul.f32 %v3196, 1.442695
        %v3693 = vpow.pop %v3692
        %v3694 = vmul.f32 %v3197, 1.442695
        %v3695 = vpow.pop %v3694
        %v3696 = vmul.f32 %v3198, 1.442695
        %v3697 = vpow.pop %v3696
        %v3698 = vmul.f32 %v3199, 1.442695
        %v3699 = vpow.pop %v3698
        %v3700 = vmul.f32 %v3200, 1.442695
        %v3701 = vpow.pop %v3700
        %v3702 = vmul.f32 %v3201, 1.442695
        %v3703 = vpow.pop %v3702
        %v3704 = vmul.f32 %v3202, 1.442695
        %v3705 = vpow.pop %v3704
        %v3706 = vmul.f32 %v3203, 1.442695
        %v3707 = vpow.pop %v3706
        %v3708 = vmul.f32 %v3204, 1.442695
        %v3709 = vpow.pop %v3708
        %v3710 = vmul.f32 %v3205, 1.442695
        %v3711 = vpow.pop %v3710
        %v3712 = vmul.f32 %v3206, 1.442695
        %v3713 = vpow.pop %v3712
        %v3714 = vmul.f32 %v3207, 1.442695
        %v3715 = vpow.pop %v3714
        %v3716 = vmul.f32 %v3208, 1.442695
        %v3717 = vpow.pop %v3716
        %v3718 = vmul.f32 %v3209, 1.442695
        %v3719 = vpow.pop %v3718
        %v3720 = vmul.f32 %v3210, 1.442695
        %v3721 = vpow.pop %v3720
        %v3722 = vmul.f32 %v3211, 1.442695
        %v3723 = vpow.pop %v3722
        %v3724 = vadd.f32 %v3213, %v3215
        %3725 = vadd.xlane.f32.xlu0 %v3724
        %v3726 = vpop.xlane.xlu0 %3725
        %v3727 = vadd.f32 %v3217, %v3219
        %3728 = vadd.xlane.f32.xlu0 %v3727
        %v3729 = vpop.xlane.xlu0 %3728
        %v3730 = vadd.f32 %v3221, %v3223
        %3731 = vadd.xlane.f32.xlu0 %v3730
        %v3732 = vpop.xlane.xlu0 %3731
        %v3733 = vadd.f32 %v3225, %v3227
        %3734 = vadd.xlane.f32.xlu0 %v3733
        %v3735 = vpop.xlane.xlu0 %3734
        %v3736 = vadd.f32 %v3229, %v3231
        %3737 = vadd.xlane.f32.xlu0 %v3736
        %v3738 = vpop.xlane.xlu0 %3737
        %v3739 = vadd.f32 %v3233, %v3235
        %3740 = vadd.xlane.f32.xlu0 %v3739
        %v3741 = vpop.xlane.xlu0 %3740
        %v3742 = vadd.f32 %v3237, %v3239
        %3743 = vadd.xlane.f32.xlu0 %v3742
        %v3744 = vpop.xlane.xlu0 %3743
        %v3745 = vadd.f32 %v3241, %v3243
        %3746 = vadd.xlane.f32.xlu0 %v3745
        %v3747 = vpop.xlane.xlu0 %3746
        %v3748 = vadd.f32 %v3245, %v3247
        %3749 = vadd.xlane.f32.xlu0 %v3748
        %v3750 = vpop.xlane.xlu0 %3749
        %v3751 = vadd.f32 %v3249, %v3251
        %3752 = vadd.xlane.f32.xlu0 %v3751
        %v3753 = vpop.xlane.xlu0 %3752
        %v3754 = vadd.f32 %v3253, %v3255
        %3755 = vadd.xlane.f32.xlu0 %v3754
        %v3756 = vpop.xlane.xlu0 %3755
        %v3757 = vadd.f32 %v3257, %v3259
        %3758 = vadd.xlane.f32.xlu0 %v3757
        %v3759 = vpop.xlane.xlu0 %3758
        %v3760 = vadd.f32 %v3261, %v3263
        %3761 = vadd.xlane.f32.xlu0 %v3760
        %v3762 = vpop.xlane.xlu0 %3761
        %v3763 = vadd.f32 %v3265, %v3267
        %3764 = vadd.xlane.f32.xlu0 %v3763
        %v3765 = vpop.xlane.xlu0 %3764
        %v3766 = vadd.f32 %v3269, %v3271
        %3767 = vadd.xlane.f32.xlu0 %v3766
        %v3768 = vpop.xlane.xlu0 %3767
        %v3769 = vadd.f32 %v3273, %v3275
        %3770 = vadd.xlane.f32.xlu0 %v3769
        %v3771 = vpop.xlane.xlu0 %3770
        %v3772 = vadd.f32 %v3277, %v3279
        %3773 = vadd.xlane.f32.xlu0 %v3772
        %v3774 = vpop.xlane.xlu0 %3773
        %v3775 = vadd.f32 %v3281, %v3283
        %3776 = vadd.xlane.f32.xlu0 %v3775
        %v3777 = vpop.xlane.xlu0 %3776
        %v3778 = vadd.f32 %v3285, %v3287
        %3779 = vadd.xlane.f32.xlu0 %v3778
        %v3780 = vpop.xlane.xlu0 %3779
        %v3781 = vadd.f32 %v3289, %v3291
        %3782 = vadd.xlane.f32.xlu0 %v3781
        %v3783 = vpop.xlane.xlu0 %3782
        %v3784 = vadd.f32 %v3293, %v3295
        %3785 = vadd.xlane.f32.xlu0 %v3784
        %v3786 = vpop.xlane.xlu0 %3785
        %v3787 = vadd.f32 %v3297, %v3299
        %3788 = vadd.xlane.f32.xlu0 %v3787
        %v3789 = vpop.xlane.xlu0 %3788
        %v3790 = vadd.f32 %v3301, %v3303
        %3791 = vadd.xlane.f32.xlu0 %v3790
        %v3792 = vpop.xlane.xlu0 %3791
        %v3793 = vadd.f32 %v3305, %v3307
        %3794 = vadd.xlane.f32.xlu0 %v3793
        %v3795 = vpop.xlane.xlu0 %3794
        %v3796 = vadd.f32 %v3309, %v3311
        %3797 = vadd.xlane.f32.xlu0 %v3796
        %v3798 = vpop.xlane.xlu0 %3797
        %v3799 = vadd.f32 %v3313, %v3315
        %3800 = vadd.xlane.f32.xlu0 %v3799
        %v3801 = vpop.xlane.xlu0 %3800
        %v3802 = vadd.f32 %v3317, %v3319
        %3803 = vadd.xlane.f32.xlu0 %v3802
        %v3804 = vpop.xlane.xlu0 %3803
        %v3805 = vadd.f32 %v3321, %v3323
        %3806 = vadd.xlane.f32.xlu0 %v3805
        %v3807 = vpop.xlane.xlu0 %3806
        %v3808 = vadd.f32 %v3325, %v3327
        %3809 = vadd.xlane.f32.xlu0 %v3808
        %v3810 = vpop.xlane.xlu0 %3809
        %v3811 = vadd.f32 %v3329, %v3331
        %3812 = vadd.xlane.f32.xlu0 %v3811
        %v3813 = vpop.xlane.xlu0 %3812
        %v3814 = vadd.f32 %v3333, %v3335
        %3815 = vadd.xlane.f32.xlu0 %v3814
        %v3816 = vpop.xlane.xlu0 %3815
        %v3817 = vadd.f32 %v3337, %v3339
        %3818 = vadd.xlane.f32.xlu0 %v3817
        %v3819 = vpop.xlane.xlu0 %3818
        %v3820 = vadd.f32 %v3341, %v3343
        %3821 = vadd.xlane.f32.xlu0 %v3820
        %v3822 = vpop.xlane.xlu0 %3821
        %v3823 = vadd.f32 %v3345, %v3347
        %3824 = vadd.xlane.f32.xlu0 %v3823
        %v3825 = vpop.xlane.xlu0 %3824
        %v3826 = vadd.f32 %v3349, %v3351
        %3827 = vadd.xlane.f32.xlu0 %v3826
        %v3828 = vpop.xlane.xlu0 %3827
        %v3829 = vadd.f32 %v3353, %v3355
        %3830 = vadd.xlane.f32.xlu0 %v3829
        %v3831 = vpop.xlane.xlu0 %3830
        %v3832 = vadd.f32 %v3357, %v3359
        %3833 = vadd.xlane.f32.xlu0 %v3832
        %v3834 = vpop.xlane.xlu0 %3833
        %v3835 = vadd.f32 %v3361, %v3363
        %3836 = vadd.xlane.f32.xlu0 %v3835
        %v3837 = vpop.xlane.xlu0 %3836
        %v3838 = vadd.f32 %v3365, %v3367
        %3839 = vadd.xlane.f32.xlu0 %v3838
        %v3840 = vpop.xlane.xlu0 %3839
        %v3841 = vadd.f32 %v3369, %v3371
        %3842 = vadd.xlane.f32.xlu0 %v3841
        %v3843 = vpop.xlane.xlu0 %3842
        %v3844 = vadd.f32 %v3373, %v3375
        %3845 = vadd.xlane.f32.xlu0 %v3844
        %v3846 = vpop.xlane.xlu0 %3845
        %v3847 = vadd.f32 %v3377, %v3379
        %3848 = vadd.xlane.f32.xlu0 %v3847
        %v3849 = vpop.xlane.xlu0 %3848
        %v3850 = vadd.f32 %v3381, %v3383
        %3851 = vadd.xlane.f32.xlu0 %v3850
        %v3852 = vpop.xlane.xlu0 %3851
        %v3853 = vadd.f32 %v3385, %v3387
        %3854 = vadd.xlane.f32.xlu0 %v3853
        %v3855 = vpop.xlane.xlu0 %3854
        %v3856 = vadd.f32 %v3389, %v3391
        %3857 = vadd.xlane.f32.xlu0 %v3856
        %v3858 = vpop.xlane.xlu0 %3857
        %v3859 = vadd.f32 %v3393, %v3395
        %3860 = vadd.xlane.f32.xlu0 %v3859
        %v3861 = vpop.xlane.xlu0 %3860
        %v3862 = vadd.f32 %v3397, %v3399
        %3863 = vadd.xlane.f32.xlu0 %v3862
        %v3864 = vpop.xlane.xlu0 %3863
        %v3865 = vadd.f32 %v3401, %v3403
        %3866 = vadd.xlane.f32.xlu0 %v3865
        %v3867 = vpop.xlane.xlu0 %3866
        %v3868 = vadd.f32 %v3405, %v3407
        %3869 = vadd.xlane.f32.xlu0 %v3868
        %v3870 = vpop.xlane.xlu0 %3869
        %v3871 = vadd.f32 %v3409, %v3411
        %3872 = vadd.xlane.f32.xlu0 %v3871
        %v3873 = vpop.xlane.xlu0 %3872
        %v3874 = vadd.f32 %v3413, %v3415
        %3875 = vadd.xlane.f32.xlu0 %v3874
        %v3876 = vpop.xlane.xlu0 %3875
        %v3877 = vadd.f32 %v3417, %v3419
        %3878 = vadd.xlane.f32.xlu0 %v3877
        %v3879 = vpop.xlane.xlu0 %3878
        %v3880 = vadd.f32 %v3421, %v3423
        %3881 = vadd.xlane.f32.xlu0 %v3880
        %v3882 = vpop.xlane.xlu0 %3881
        %v3883 = vadd.f32 %v3425, %v3427
        %3884 = vadd.xlane.f32.xlu0 %v3883
        %v3885 = vpop.xlane.xlu0 %3884
        %v3886 = vadd.f32 %v3429, %v3431
        %3887 = vadd.xlane.f32.xlu0 %v3886
        %v3888 = vpop.xlane.xlu0 %3887
        %v3889 = vadd.f32 %v3433, %v3435
        %3890 = vadd.xlane.f32.xlu0 %v3889
        %v3891 = vpop.xlane.xlu0 %3890
        %v3892 = vadd.f32 %v3437, %v3439
        %3893 = vadd.xlane.f32.xlu0 %v3892
        %v3894 = vpop.xlane.xlu0 %3893
        %v3895 = vadd.f32 %v3441, %v3443
        %3896 = vadd.xlane.f32.xlu0 %v3895
        %v3897 = vpop.xlane.xlu0 %3896
        %v3898 = vadd.f32 %v3445, %v3447
        %3899 = vadd.xlane.f32.xlu0 %v3898
        %v3900 = vpop.xlane.xlu0 %3899
        %v3901 = vadd.f32 %v3449, %v3451
        %3902 = vadd.xlane.f32.xlu0 %v3901
        %v3903 = vpop.xlane.xlu0 %3902
        %v3904 = vadd.f32 %v3453, %v3455
        %3905 = vadd.xlane.f32.xlu0 %v3904
        %v3906 = vpop.xlane.xlu0 %3905
        %v3907 = vadd.f32 %v3457, %v3459
        %3908 = vadd.xlane.f32.xlu0 %v3907
        %v3909 = vpop.xlane.xlu0 %3908
        %v3910 = vadd.f32 %v3461, %v3463
        %3911 = vadd.xlane.f32.xlu0 %v3910
        %v3912 = vpop.xlane.xlu0 %3911
        %v3913 = vadd.f32 %v3465, %v3467
        %3914 = vadd.xlane.f32.xlu0 %v3913
        %v3915 = vpop.xlane.xlu0 %3914
        %v3916 = vadd.f32 %v3469, %v3471
        %3917 = vadd.xlane.f32.xlu0 %v3916
        %v3918 = vpop.xlane.xlu0 %3917
        %v3919 = vadd.f32 %v3473, %v3475
        %3920 = vadd.xlane.f32.xlu0 %v3919
        %v3921 = vpop.xlane.xlu0 %3920
        %v3922 = vadd.f32 %v3477, %v3479
        %3923 = vadd.xlane.f32.xlu0 %v3922
        %v3924 = vpop.xlane.xlu0 %3923
        %v3925 = vadd.f32 %v3481, %v3483
        %3926 = vadd.xlane.f32.xlu0 %v3925
        %v3927 = vpop.xlane.xlu0 %3926
        %v3928 = vadd.f32 %v3485, %v3487
        %3929 = vadd.xlane.f32.xlu0 %v3928
        %v3930 = vpop.xlane.xlu0 %3929
        %v3931 = vadd.f32 %v3489, %v3491
        %3932 = vadd.xlane.f32.xlu0 %v3931
        %v3933 = vpop.xlane.xlu0 %3932
        %v3934 = vadd.f32 %v3493, %v3495
        %3935 = vadd.xlane.f32.xlu0 %v3934
        %v3936 = vpop.xlane.xlu0 %3935
        %v3937 = vadd.f32 %v3497, %v3499
        %3938 = vadd.xlane.f32.xlu0 %v3937
        %v3939 = vpop.xlane.xlu0 %3938
        %v3940 = vadd.f32 %v3501, %v3503
        %3941 = vadd.xlane.f32.xlu0 %v3940
        %v3942 = vpop.xlane.xlu0 %3941
        %v3943 = vadd.f32 %v3505, %v3507
        %3944 = vadd.xlane.f32.xlu0 %v3943
        %v3945 = vpop.xlane.xlu0 %3944
        %v3946 = vadd.f32 %v3509, %v3511
        %3947 = vadd.xlane.f32.xlu0 %v3946
        %v3948 = vpop.xlane.xlu0 %3947
        %v3949 = vadd.f32 %v3513, %v3515
        %3950 = vadd.xlane.f32.xlu0 %v3949
        %v3951 = vpop.xlane.xlu0 %3950
        %v3952 = vadd.f32 %v3517, %v3519
        %3953 = vadd.xlane.f32.xlu0 %v3952
        %v3954 = vpop.xlane.xlu0 %3953
        %v3955 = vadd.f32 %v3521, %v3523
        %3956 = vadd.xlane.f32.xlu0 %v3955
        %v3957 = vpop.xlane.xlu0 %3956
        %v3958 = vadd.f32 %v3525, %v3527
        %3959 = vadd.xlane.f32.xlu0 %v3958
        %v3960 = vpop.xlane.xlu0 %3959
        %v3961 = vadd.f32 %v3529, %v3531
        %3962 = vadd.xlane.f32.xlu0 %v3961
        %v3963 = vpop.xlane.xlu0 %3962
        %v3964 = vadd.f32 %v3533, %v3535
        %3965 = vadd.xlane.f32.xlu0 %v3964
        %v3966 = vpop.xlane.xlu0 %3965
        %v3967 = vadd.f32 %v3537, %v3539
        %3968 = vadd.xlane.f32.xlu0 %v3967
        %v3969 = vpop.xlane.xlu0 %3968
        %v3970 = vadd.f32 %v3541, %v3543
        %3971 = vadd.xlane.f32.xlu0 %v3970
        %v3972 = vpop.xlane.xlu0 %3971
        %v3973 = vadd.f32 %v3545, %v3547
        %3974 = vadd.xlane.f32.xlu0 %v3973
        %v3975 = vpop.xlane.xlu0 %3974
        %v3976 = vadd.f32 %v3549, %v3551
        %3977 = vadd.xlane.f32.xlu0 %v3976
        %v3978 = vpop.xlane.xlu0 %3977
        %v3979 = vadd.f32 %v3553, %v3555
        %3980 = vadd.xlane.f32.xlu0 %v3979
        %v3981 = vpop.xlane.xlu0 %3980
        %v3982 = vadd.f32 %v3557, %v3559
        %3983 = vadd.xlane.f32.xlu0 %v3982
        %v3984 = vpop.xlane.xlu0 %3983
        %v3985 = vadd.f32 %v3561, %v3563
        %3986 = vadd.xlane.f32.xlu0 %v3985
        %v3987 = vpop.xlane.xlu0 %3986
        %v3988 = vadd.f32 %v3565, %v3567
        %3989 = vadd.xlane.f32.xlu0 %v3988
        %v3990 = vpop.xlane.xlu0 %3989
        %v3991 = vadd.f32 %v3569, %v3571
        %3992 = vadd.xlane.f32.xlu0 %v3991
        %v3993 = vpop.xlane.xlu0 %3992
        %v3994 = vadd.f32 %v3573, %v3575
        %3995 = vadd.xlane.f32.xlu0 %v3994
        %v3996 = vpop.xlane.xlu0 %3995
        %v3997 = vadd.f32 %v3577, %v3579
        %3998 = vadd.xlane.f32.xlu0 %v3997
        %v3999 = vpop.xlane.xlu0 %3998
        %v4000 = vadd.f32 %v3581, %v3583
        %4001 = vadd.xlane.f32.xlu0 %v4000
        %v4002 = vpop.xlane.xlu0 %4001
        %v4003 = vadd.f32 %v3585, %v3587
        %4004 = vadd.xlane.f32.xlu0 %v4003
        %v4005 = vpop.xlane.xlu0 %4004
        %v4006 = vadd.f32 %v3589, %v3591
        %4007 = vadd.xlane.f32.xlu0 %v4006
        %v4008 = vpop.xlane.xlu0 %4007
        %v4009 = vadd.f32 %v3593, %v3595
        %4010 = vadd.xlane.f32.xlu0 %v4009
        %v4011 = vpop.xlane.xlu0 %4010
        %v4012 = vadd.f32 %v3597, %v3599
        %4013 = vadd.xlane.f32.xlu0 %v4012
        %v4014 = vpop.xlane.xlu0 %4013
        %v4015 = vadd.f32 %v3601, %v3603
        %4016 = vadd.xlane.f32.xlu0 %v4015
        %v4017 = vpop.xlane.xlu0 %4016
        %v4018 = vadd.f32 %v3605, %v3607
        %4019 = vadd.xlane.f32.xlu0 %v4018
        %v4020 = vpop.xlane.xlu0 %4019
        %v4021 = vadd.f32 %v3609, %v3611
        %4022 = vadd.xlane.f32.xlu0 %v4021
        %v4023 = vpop.xlane.xlu0 %4022
        %v4024 = vadd.f32 %v3613, %v3615
        %4025 = vadd.xlane.f32.xlu0 %v4024
        %v4026 = vpop.xlane.xlu0 %4025
        %v4027 = vadd.f32 %v3617, %v3619
        %4028 = vadd.xlane.f32.xlu0 %v4027
        %v4029 = vpop.xlane.xlu0 %4028
        %v4030 = vadd.f32 %v3621, %v3623
        %4031 = vadd.xlane.f32.xlu0 %v4030
        %v4032 = vpop.xlane.xlu0 %4031
        %v4033 = vadd.f32 %v3625, %v3627
        %4034 = vadd.xlane.f32.xlu0 %v4033
        %v4035 = vpop.xlane.xlu0 %4034
        %v4036 = vadd.f32 %v3629, %v3631
        %4037 = vadd.xlane.f32.xlu0 %v4036
        %v4038 = vpop.xlane.xlu0 %4037
        %v4039 = vadd.f32 %v3633, %v3635
        %4040 = vadd.xlane.f32.xlu0 %v4039
        %v4041 = vpop.xlane.xlu0 %4040
        %v4042 = vadd.f32 %v3637, %v3639
        %4043 = vadd.xlane.f32.xlu0 %v4042
        %v4044 = vpop.xlane.xlu0 %4043
        %v4045 = vadd.f32 %v3641, %v3643
        %4046 = vadd.xlane.f32.xlu0 %v4045
        %v4047 = vpop.xlane.xlu0 %4046
        %v4048 = vadd.f32 %v3645, %v3647
        %4049 = vadd.xlane.f32.xlu0 %v4048
        %v4050 = vpop.xlane.xlu0 %4049
        %v4051 = vadd.f32 %v3649, %v3651
        %4052 = vadd.xlane.f32.xlu0 %v4051
        %v4053 = vpop.xlane.xlu0 %4052
        %v4054 = vadd.f32 %v3653, %v3655
        %4055 = vadd.xlane.f32.xlu0 %v4054
        %v4056 = vpop.xlane.xlu0 %4055
        %v4057 = vadd.f32 %v3657, %v3659
        %4058 = vadd.xlane.f32.xlu0 %v4057
        %v4059 = vpop.xlane.xlu0 %4058
        %v4060 = vadd.f32 %v3661, %v3663
        %4061 = vadd.xlane.f32.xlu0 %v4060
        %v4062 = vpop.xlane.xlu0 %4061
        %v4063 = vadd.f32 %v3665, %v3667
        %4064 = vadd.xlane.f32.xlu0 %v4063
        %v4065 = vpop.xlane.xlu0 %4064
        %v4066 = vadd.f32 %v3669, %v3671
        %4067 = vadd.xlane.f32.xlu0 %v4066
        %v4068 = vpop.xlane.xlu0 %4067
        %v4069 = vadd.f32 %v3673, %v3675
        %4070 = vadd.xlane.f32.xlu0 %v4069
        %v4071 = vpop.xlane.xlu0 %4070
        %v4072 = vadd.f32 %v3677, %v3679
        %4073 = vadd.xlane.f32.xlu0 %v4072
        %v4074 = vpop.xlane.xlu0 %4073
        %v4075 = vadd.f32 %v3681, %v3683
        %4076 = vadd.xlane.f32.xlu0 %v4075
        %v4077 = vpop.xlane.xlu0 %4076
        %v4078 = vadd.f32 %v3685, %v3687
        %4079 = vadd.xlane.f32.xlu0 %v4078
        %v4080 = vpop.xlane.xlu0 %4079
        %v4081 = vadd.f32 %v3689, %v3691
        %4082 = vadd.xlane.f32.xlu0 %v4081
        %v4083 = vpop.xlane.xlu0 %4082
        %v4084 = vadd.f32 %v3693, %v3695
        %4085 = vadd.xlane.f32.xlu0 %v4084
        %v4086 = vpop.xlane.xlu0 %4085
        %v4087 = vadd.f32 %v3697, %v3699
        %4088 = vadd.xlane.f32.xlu0 %v4087
        %v4089 = vpop.xlane.xlu0 %4088
        %v4090 = vadd.f32 %v3701, %v3703
        %4091 = vadd.xlane.f32.xlu0 %v4090
        %v4092 = vpop.xlane.xlu0 %4091
        %v4093 = vadd.f32 %v3705, %v3707
        %4094 = vadd.xlane.f32.xlu0 %v4093
        %v4095 = vpop.xlane.xlu0 %4094
        %v4096 = vadd.f32 %v3709, %v3711
        %4097 = vadd.xlane.f32.xlu0 %v4096
        %v4098 = vpop.xlane.xlu0 %4097
        %v4099 = vadd.f32 %v3713, %v3715
        %4100 = vadd.xlane.f32.xlu0 %v4099
        %v4101 = vpop.xlane.xlu0 %4100
        %v4102 = vadd.f32 %v3717, %v3719
        %4103 = vadd.xlane.f32.xlu0 %v4102
        %v4104 = vpop.xlane.xlu0 %4103
        %v4105 = vadd.f32 %v3721, %v3723
        %4106 = vadd.xlane.f32.xlu0 %v4105
        %v4107 = vpop.xlane.xlu0 %4106
        %v4108 = vpack.c.bf16 %v3215, %v3213
        %v4109 = vpack.c.bf16 %v3219, %v3217
        %v4110 = vpack.c.bf16 %v3223, %v3221
        %v4111 = vpack.c.bf16 %v3227, %v3225
        %v4112 = vpack.c.bf16 %v3231, %v3229
        %v4113 = vpack.c.bf16 %v3235, %v3233
        %v4114 = vpack.c.bf16 %v3239, %v3237
        %v4115 = vpack.c.bf16 %v3243, %v3241
        %v4116 = vpack.c.bf16 %v3247, %v3245
        %v4117 = vpack.c.bf16 %v3251, %v3249
        %v4118 = vpack.c.bf16 %v3255, %v3253
        %v4119 = vpack.c.bf16 %v3259, %v3257
        %v4120 = vpack.c.bf16 %v3263, %v3261
        %v4121 = vpack.c.bf16 %v3267, %v3265
        %v4122 = vpack.c.bf16 %v3271, %v3269
        %v4123 = vpack.c.bf16 %v3275, %v3273
        %v4124 = vpack.c.bf16 %v3279, %v3277
        %v4125 = vpack.c.bf16 %v3283, %v3281
        %v4126 = vpack.c.bf16 %v3287, %v3285
        %v4127 = vpack.c.bf16 %v3291, %v3289
        %v4128 = vpack.c.bf16 %v3295, %v3293
        %v4129 = vpack.c.bf16 %v3299, %v3297
        %v4130 = vpack.c.bf16 %v3303, %v3301
        %v4131 = vpack.c.bf16 %v3307, %v3305
        %v4132 = vpack.c.bf16 %v3311, %v3309
        %v4133 = vpack.c.bf16 %v3315, %v3313
        %v4134 = vpack.c.bf16 %v3319, %v3317
        %v4135 = vpack.c.bf16 %v3323, %v3321
        %v4136 = vpack.c.bf16 %v3327, %v3325
        %v4137 = vpack.c.bf16 %v3331, %v3329
        %v4138 = vpack.c.bf16 %v3335, %v3333
        %v4139 = vpack.c.bf16 %v3339, %v3337
        %v4140 = vpack.c.bf16 %v3343, %v3341
        %v4141 = vpack.c.bf16 %v3347, %v3345
        %v4142 = vpack.c.bf16 %v3351, %v3349
        %v4143 = vpack.c.bf16 %v3355, %v3353
        %v4144 = vpack.c.bf16 %v3359, %v3357
        %v4145 = vpack.c.bf16 %v3363, %v3361
        %v4146 = vpack.c.bf16 %v3367, %v3365
        %v4147 = vpack.c.bf16 %v3371, %v3369
        %v4148 = vpack.c.bf16 %v3375, %v3373
        %v4149 = vpack.c.bf16 %v3379, %v3377
        %v4150 = vpack.c.bf16 %v3383, %v3381
        %v4151 = vpack.c.bf16 %v3387, %v3385
        %v4152 = vpack.c.bf16 %v3391, %v3389
        %v4153 = vpack.c.bf16 %v3395, %v3393
        %v4154 = vpack.c.bf16 %v3399, %v3397
        %v4155 = vpack.c.bf16 %v3403, %v3401
        %v4156 = vpack.c.bf16 %v3407, %v3405
        %v4157 = vpack.c.bf16 %v3411, %v3409
        %v4158 = vpack.c.bf16 %v3415, %v3413
        %v4159 = vpack.c.bf16 %v3419, %v3417
        %v4160 = vpack.c.bf16 %v3423, %v3421
        %v4161 = vpack.c.bf16 %v3427, %v3425
        %v4162 = vpack.c.bf16 %v3431, %v3429
        %v4163 = vpack.c.bf16 %v3435, %v3433
        %v4164 = vpack.c.bf16 %v3439, %v3437
        %v4165 = vpack.c.bf16 %v3443, %v3441
        %v4166 = vpack.c.bf16 %v3447, %v3445
        %v4167 = vpack.c.bf16 %v3451, %v3449
        %v4168 = vpack.c.bf16 %v3455, %v3453
        %v4169 = vpack.c.bf16 %v3459, %v3457
        %v4170 = vpack.c.bf16 %v3463, %v3461
        %v4171 = vpack.c.bf16 %v3467, %v3465
        %v4172 = vpack.c.bf16 %v3471, %v3469
        %v4173 = vpack.c.bf16 %v3475, %v3473
        %v4174 = vpack.c.bf16 %v3479, %v3477
        %v4175 = vpack.c.bf16 %v3483, %v3481
        %v4176 = vpack.c.bf16 %v3487, %v3485
        %v4177 = vpack.c.bf16 %v3491, %v3489
        %v4178 = vpack.c.bf16 %v3495, %v3493
        %v4179 = vpack.c.bf16 %v3499, %v3497
        %v4180 = vpack.c.bf16 %v3503, %v3501
        %v4181 = vpack.c.bf16 %v3507, %v3505
        %v4182 = vpack.c.bf16 %v3511, %v3509
        %v4183 = vpack.c.bf16 %v3515, %v3513
        %v4184 = vpack.c.bf16 %v3519, %v3517
        %v4185 = vpack.c.bf16 %v3523, %v3521
        %v4186 = vpack.c.bf16 %v3527, %v3525
        %v4187 = vpack.c.bf16 %v3531, %v3529
        %v4188 = vpack.c.bf16 %v3535, %v3533
        %v4189 = vpack.c.bf16 %v3539, %v3537
        %v4190 = vpack.c.bf16 %v3543, %v3541
        %v4191 = vpack.c.bf16 %v3547, %v3545
        %v4192 = vpack.c.bf16 %v3551, %v3549
        %v4193 = vpack.c.bf16 %v3555, %v3553
        %v4194 = vpack.c.bf16 %v3559, %v3557
        %v4195 = vpack.c.bf16 %v3563, %v3561
        %v4196 = vpack.c.bf16 %v3567, %v3565
        %v4197 = vpack.c.bf16 %v3571, %v3569
        %v4198 = vpack.c.bf16 %v3575, %v3573
        %v4199 = vpack.c.bf16 %v3579, %v3577
        %v4200 = vpack.c.bf16 %v3583, %v3581
        %v4201 = vpack.c.bf16 %v3587, %v3585
        %v4202 = vpack.c.bf16 %v3591, %v3589
        %v4203 = vpack.c.bf16 %v3595, %v3593
        %v4204 = vpack.c.bf16 %v3599, %v3597
        %v4205 = vpack.c.bf16 %v3603, %v3601
        %v4206 = vpack.c.bf16 %v3607, %v3605
        %v4207 = vpack.c.bf16 %v3611, %v3609
        %v4208 = vpack.c.bf16 %v3615, %v3613
        %v4209 = vpack.c.bf16 %v3619, %v3617
        %v4210 = vpack.c.bf16 %v3623, %v3621
        %v4211 = vpack.c.bf16 %v3627, %v3625
        %v4212 = vpack.c.bf16 %v3631, %v3629
        %v4213 = vpack.c.bf16 %v3635, %v3633
        %v4214 = vpack.c.bf16 %v3639, %v3637
        %v4215 = vpack.c.bf16 %v3643, %v3641
        %v4216 = vpack.c.bf16 %v3647, %v3645
        %v4217 = vpack.c.bf16 %v3651, %v3649
        %v4218 = vpack.c.bf16 %v3655, %v3653
        %v4219 = vpack.c.bf16 %v3659, %v3657
        %v4220 = vpack.c.bf16 %v3663, %v3661
        %v4221 = vpack.c.bf16 %v3667, %v3665
        %v4222 = vpack.c.bf16 %v3671, %v3669
        %v4223 = vpack.c.bf16 %v3675, %v3673
        %v4224 = vpack.c.bf16 %v3679, %v3677
        %v4225 = vpack.c.bf16 %v3683, %v3681
        %v4226 = vpack.c.bf16 %v3687, %v3685
        %v4227 = vpack.c.bf16 %v3691, %v3689
        %v4228 = vpack.c.bf16 %v3695, %v3693
        %v4229 = vpack.c.bf16 %v3699, %v3697
        %v4230 = vpack.c.bf16 %v3703, %v3701
        %v4231 = vpack.c.bf16 %v3707, %v3705
        %v4232 = vpack.c.bf16 %v3711, %v3709
        %v4233 = vpack.c.bf16 %v3715, %v3713
        %v4234 = vpack.c.bf16 %v3719, %v3717
        %v4235 = vpack.c.bf16 %v3723, %v3721
        %v4240 = vunpack.c.l.b16 %v673
        %v4241 = vunpack.c.h.b16 %v673
        %v4242 = vunpack.c.l.b16 %v674
        %v4243 = vunpack.c.h.b16 %v674
        %v4244 = vunpack.c.l.b16 %v675
        %v4245 = vunpack.c.h.b16 %v675
        %v4246 = vunpack.c.l.b16 %v676
        %v4247 = vunpack.c.h.b16 %v676
        %v4248 = vpack.c.b16 %v4242, %v4240
        %v4249 = vpack.c.b16 %v4243, %v4241
        %v4250 = vpack.c.b16 %v4246, %v4244
        %v4251 = vpack.c.b16 %v4247, %v4245
        %v4288 = vunpack.c.l.b16 %v4108
        %v4289 = vunpack.c.h.b16 %v4108
        %v4290 = vunpack.c.l.b16 %v4109
        %v4291 = vunpack.c.h.b16 %v4109
        %v4292 = vunpack.c.l.b16 %v4110
        %v4293 = vunpack.c.h.b16 %v4110
        %v4294 = vunpack.c.l.b16 %v4111
        %v4295 = vunpack.c.h.b16 %v4111
        %v4296 = vunpack.c.l.b16 %v4112
        %v4297 = vunpack.c.h.b16 %v4112
        %v4298 = vunpack.c.l.b16 %v4113
        %v4299 = vunpack.c.h.b16 %v4113
        %v4300 = vunpack.c.l.b16 %v4114
        %v4301 = vunpack.c.h.b16 %v4114
        %v4302 = vunpack.c.l.b16 %v4115
        %v4303 = vunpack.c.h.b16 %v4115
        %v4304 = vunpack.c.l.b16 %v4116
        %v4305 = vunpack.c.h.b16 %v4116
        %v4306 = vunpack.c.l.b16 %v4117
        %v4307 = vunpack.c.h.b16 %v4117
        %v4308 = vunpack.c.l.b16 %v4118
        %v4309 = vunpack.c.h.b16 %v4118
        %v4310 = vunpack.c.l.b16 %v4119
        %v4311 = vunpack.c.h.b16 %v4119
        %v4312 = vunpack.c.l.b16 %v4120
        %v4313 = vunpack.c.h.b16 %v4120
        %v4314 = vunpack.c.l.b16 %v4121
        %v4315 = vunpack.c.h.b16 %v4121
        %v4316 = vunpack.c.l.b16 %v4122
        %v4317 = vunpack.c.h.b16 %v4122
        %v4318 = vunpack.c.l.b16 %v4123
        %v4319 = vunpack.c.h.b16 %v4123
        %v4320 = vunpack.c.l.b16 %v4124
        %v4321 = vunpack.c.h.b16 %v4124
        %v4322 = vunpack.c.l.b16 %v4125
        %v4323 = vunpack.c.h.b16 %v4125
        %v4324 = vunpack.c.l.b16 %v4126
        %v4325 = vunpack.c.h.b16 %v4126
        %v4326 = vunpack.c.l.b16 %v4127
        %v4327 = vunpack.c.h.b16 %v4127
        %v4328 = vunpack.c.l.b16 %v4128
        %v4329 = vunpack.c.h.b16 %v4128
        %v4330 = vunpack.c.l.b16 %v4129
        %v4331 = vunpack.c.h.b16 %v4129
        %v4332 = vunpack.c.l.b16 %v4130
        %v4333 = vunpack.c.h.b16 %v4130
        %v4334 = vunpack.c.l.b16 %v4131
        %v4335 = vunpack.c.h.b16 %v4131
        %v4336 = vunpack.c.l.b16 %v4132
        %v4337 = vunpack.c.h.b16 %v4132
        %v4338 = vunpack.c.l.b16 %v4133
        %v4339 = vunpack.c.h.b16 %v4133
        %v4340 = vunpack.c.l.b16 %v4134
        %v4341 = vunpack.c.h.b16 %v4134
        %v4342 = vunpack.c.l.b16 %v4135
        %v4343 = vunpack.c.h.b16 %v4135
        %v4344 = vunpack.c.l.b16 %v4136
        %v4345 = vunpack.c.h.b16 %v4136
        %v4346 = vunpack.c.l.b16 %v4137
        %v4347 = vunpack.c.h.b16 %v4137
        %v4348 = vunpack.c.l.b16 %v4138
        %v4349 = vunpack.c.h.b16 %v4138
        %v4350 = vunpack.c.l.b16 %v4139
        %v4351 = vunpack.c.h.b16 %v4139
        %v4352 = vpack.c.b16 %v4290, %v4288
        %v4353 = vpack.c.b16 %v4291, %v4289
        %v4354 = vpack.c.b16 %v4294, %v4292
        %v4355 = vpack.c.b16 %v4295, %v4293
        %v4356 = vpack.c.b16 %v4298, %v4296
        %v4357 = vpack.c.b16 %v4299, %v4297
        %v4358 = vpack.c.b16 %v4302, %v4300
        %v4359 = vpack.c.b16 %v4303, %v4301
        %v4360 = vpack.c.b16 %v4306, %v4304
        %v4361 = vpack.c.b16 %v4307, %v4305
        %v4362 = vpack.c.b16 %v4310, %v4308
        %v4363 = vpack.c.b16 %v4311, %v4309
        %v4364 = vpack.c.b16 %v4314, %v4312
        %v4365 = vpack.c.b16 %v4315, %v4313
        %v4366 = vpack.c.b16 %v4318, %v4316
        %v4367 = vpack.c.b16 %v4319, %v4317
        %v4368 = vpack.c.b16 %v4322, %v4320
        %v4369 = vpack.c.b16 %v4323, %v4321
        %v4370 = vpack.c.b16 %v4326, %v4324
        %v4371 = vpack.c.b16 %v4327, %v4325
        %v4372 = vpack.c.b16 %v4330, %v4328
        %v4373 = vpack.c.b16 %v4331, %v4329
        %v4374 = vpack.c.b16 %v4334, %v4332
        %v4375 = vpack.c.b16 %v4335, %v4333
        %v4376 = vpack.c.b16 %v4338, %v4336
        %v4377 = vpack.c.b16 %v4339, %v4337
        %v4378 = vpack.c.b16 %v4342, %v4340
        %v4379 = vpack.c.b16 %v4343, %v4341
        %v4380 = vpack.c.b16 %v4346, %v4344
        %v4381 = vpack.c.b16 %v4347, %v4345
        %v4382 = vpack.c.b16 %v4350, %v4348
        %v4383 = vpack.c.b16 %v4351, %v4349
        %4416 = vmatpush.bf16.xpose.msra.mxu0 %v4366
        %4417 = vmatpush.bf16.xpose.msra.mxu0 %v4364
        %4418 = vmatpush.bf16.xpose.msra.mxu0 %v4362
        %4419 = vmatpush.bf16.xpose.msra.mxu0 %v4360
        %4420 = vmatpush.bf16.xpose.msra.mxu0 %v4358
        %4421 = vmatpush.bf16.xpose.msra.mxu0 %v4356
        %4422 = vmatpush.bf16.xpose.msra.mxu0 %v4354
        %4423 = vmatpush.bf16.xpose.msra.mxu0 %v4352
        %4424 = vmatmul.bf16.gmra.mxu0 %v4248
        %v4425 = vpop.f32.mrf.mxu0
        %v4426 = vadd.f32 0.0, %v4425
        %v4427 = vpop.f32.mrf.mxu0
        %v4428 = vadd.f32 0.0, %v4427
        %4429 = vmatmul.bf16.gmra.mxu0 %v4250
        %v4430 = vpop.f32.mrf.mxu0
        %v4431 = vadd.f32 0.0, %v4430
        %v4432 = vpop.f32.mrf.mxu0
        %v4433 = vadd.f32 0.0, %v4432
        %4434 = vdwg.mxu0
        %4435 = vmatpush.bf16.xpose.msra.mxu0 %v4367
        %4436 = vmatpush.bf16.xpose.msra.mxu0 %v4365
        %4437 = vmatpush.bf16.xpose.msra.mxu0 %v4363
        %4438 = vmatpush.bf16.xpose.msra.mxu0 %v4361
        %4439 = vmatpush.bf16.xpose.msra.mxu0 %v4359
        %4440 = vmatpush.bf16.xpose.msra.mxu0 %v4357
        %4441 = vmatpush.bf16.xpose.msra.mxu0 %v4355
        %4442 = vmatpush.bf16.xpose.msra.mxu0 %v4353
        %4443 = vmatmul.bf16.gmra.mxu0 %v4249
        %v4444 = vpop.f32.mrf.mxu0
        %v4445 = vadd.f32 %v4426, %v4444
        %v4446 = vpop.f32.mrf.mxu0
        %v4447 = vadd.f32 %v4428, %v4446
        %4448 = vmatmul.bf16.gmra.mxu0 %v4251
        %v4449 = vpop.f32.mrf.mxu0
        %v4450 = vadd.f32 %v4431, %v4449
        %v4451 = vpop.f32.mrf.mxu0
        %v4452 = vadd.f32 %v4433, %v4451
        %4453 = vdwg.mxu0
        %4454 = vmatpush.bf16.xpose.msra.mxu0 %v4382
        %4455 = vmatpush.bf16.xpose.msra.mxu0 %v4380
        %4456 = vmatpush.bf16.xpose.msra.mxu0 %v4378
        %4457 = vmatpush.bf16.xpose.msra.mxu0 %v4376
        %4458 = vmatpush.bf16.xpose.msra.mxu0 %v4374
        %4459 = vmatpush.bf16.xpose.msra.mxu0 %v4372
        %4460 = vmatpush.bf16.xpose.msra.mxu0 %v4370
        %4461 = vmatpush.bf16.xpose.msra.mxu0 %v4368
        %4462 = vmatmul.bf16.gmra.mxu0 %v4248
        %v4463 = vpop.f32.mrf.mxu0
        %v4464 = vadd.f32 0.0, %v4463
        %v4465 = vpop.f32.mrf.mxu0
        %v4466 = vadd.f32 0.0, %v4465
        %4467 = vmatmul.bf16.gmra.mxu0 %v4250
        %v4468 = vpop.f32.mrf.mxu0
        %v4469 = vadd.f32 0.0, %v4468
        %v4470 = vpop.f32.mrf.mxu0
        %v4471 = vadd.f32 0.0, %v4470
        %4472 = vdwg.mxu0
        %4473 = vmatpush.bf16.xpose.msra.mxu0 %v4383
        %4474 = vmatpush.bf16.xpose.msra.mxu0 %v4381
        %4475 = vmatpush.bf16.xpose.msra.mxu0 %v4379
        %4476 = vmatpush.bf16.xpose.msra.mxu0 %v4377
        %4477 = vmatpush.bf16.xpose.msra.mxu0 %v4375
        %4478 = vmatpush.bf16.xpose.msra.mxu0 %v4373
        %4479 = vmatpush.bf16.xpose.msra.mxu0 %v4371
        %4480 = vmatpush.bf16.xpose.msra.mxu0 %v4369
        %4481 = vmatmul.bf16.gmra.mxu0 %v4249
        %v4482 = vpop.f32.mrf.mxu0
        %v4483 = vadd.f32 %v4464, %v4482
        %v4484 = vpop.f32.mrf.mxu0
        %v4485 = vadd.f32 %v4466, %v4484
        %4486 = vmatmul.bf16.gmra.mxu0 %v4251
        %v4487 = vpop.f32.mrf.mxu0
        %v4488 = vadd.f32 %v4469, %v4487
        %v4489 = vpop.f32.mrf.mxu0
        %v4490 = vadd.f32 %v4471, %v4489
        %4491 = vdwg.mxu0
        %v4496 = vunpack.c.l.b16 %v677
        %v4497 = vunpack.c.h.b16 %v677
        %v4498 = vunpack.c.l.b16 %v678
        %v4499 = vunpack.c.h.b16 %v678
        %v4500 = vunpack.c.l.b16 %v679
        %v4501 = vunpack.c.h.b16 %v679
        %v4502 = vunpack.c.l.b16 %v680
        %v4503 = vunpack.c.h.b16 %v680
        %v4504 = vpack.c.b16 %v4498, %v4496
        %v4505 = vpack.c.b16 %v4499, %v4497
        %v4506 = vpack.c.b16 %v4502, %v4500
        %v4507 = vpack.c.b16 %v4503, %v4501
        %v4544 = vunpack.c.l.b16 %v4140
        %v4545 = vunpack.c.h.b16 %v4140
        %v4546 = vunpack.c.l.b16 %v4141
        %v4547 = vunpack.c.h.b16 %v4141
        %v4548 = vunpack.c.l.b16 %v4142
        %v4549 = vunpack.c.h.b16 %v4142
        %v4550 = vunpack.c.l.b16 %v4143
        %v4551 = vunpack.c.h.b16 %v4143
        %v4552 = vunpack.c.l.b16 %v4144
        %v4553 = vunpack.c.h.b16 %v4144
        %v4554 = vunpack.c.l.b16 %v4145
        %v4555 = vunpack.c.h.b16 %v4145
        %v4556 = vunpack.c.l.b16 %v4146
        %v4557 = vunpack.c.h.b16 %v4146
        %v4558 = vunpack.c.l.b16 %v4147
        %v4559 = vunpack.c.h.b16 %v4147
        %v4560 = vunpack.c.l.b16 %v4148
        %v4561 = vunpack.c.h.b16 %v4148
        %v4562 = vunpack.c.l.b16 %v4149
        %v4563 = vunpack.c.h.b16 %v4149
        %v4564 = vunpack.c.l.b16 %v4150
        %v4565 = vunpack.c.h.b16 %v4150
        %v4566 = vunpack.c.l.b16 %v4151
        %v4567 = vunpack.c.h.b16 %v4151
        %v4568 = vunpack.c.l.b16 %v4152
        %v4569 = vunpack.c.h.b16 %v4152
        %v4570 = vunpack.c.l.b16 %v4153
        %v4571 = vunpack.c.h.b16 %v4153
        %v4572 = vunpack.c.l.b16 %v4154
        %v4573 = vunpack.c.h.b16 %v4154
        %v4574 = vunpack.c.l.b16 %v4155
        %v4575 = vunpack.c.h.b16 %v4155
        %v4576 = vunpack.c.l.b16 %v4156
        %v4577 = vunpack.c.h.b16 %v4156
        %v4578 = vunpack.c.l.b16 %v4157
        %v4579 = vunpack.c.h.b16 %v4157
        %v4580 = vunpack.c.l.b16 %v4158
        %v4581 = vunpack.c.h.b16 %v4158
        %v4582 = vunpack.c.l.b16 %v4159
        %v4583 = vunpack.c.h.b16 %v4159
        %v4584 = vunpack.c.l.b16 %v4160
        %v4585 = vunpack.c.h.b16 %v4160
        %v4586 = vunpack.c.l.b16 %v4161
        %v4587 = vunpack.c.h.b16 %v4161
        %v4588 = vunpack.c.l.b16 %v4162
        %v4589 = vunpack.c.h.b16 %v4162
        %v4590 = vunpack.c.l.b16 %v4163
        %v4591 = vunpack.c.h.b16 %v4163
        %v4592 = vunpack.c.l.b16 %v4164
        %v4593 = vunpack.c.h.b16 %v4164
        %v4594 = vunpack.c.l.b16 %v4165
        %v4595 = vunpack.c.h.b16 %v4165
        %v4596 = vunpack.c.l.b16 %v4166
        %v4597 = vunpack.c.h.b16 %v4166
        %v4598 = vunpack.c.l.b16 %v4167
        %v4599 = vunpack.c.h.b16 %v4167
        %v4600 = vunpack.c.l.b16 %v4168
        %v4601 = vunpack.c.h.b16 %v4168
        %v4602 = vunpack.c.l.b16 %v4169
        %v4603 = vunpack.c.h.b16 %v4169
        %v4604 = vunpack.c.l.b16 %v4170
        %v4605 = vunpack.c.h.b16 %v4170
        %v4606 = vunpack.c.l.b16 %v4171
        %v4607 = vunpack.c.h.b16 %v4171
        %v4608 = vpack.c.b16 %v4546, %v4544
        %v4609 = vpack.c.b16 %v4547, %v4545
        %v4610 = vpack.c.b16 %v4550, %v4548
        %v4611 = vpack.c.b16 %v4551, %v4549
        %v4612 = vpack.c.b16 %v4554, %v4552
        %v4613 = vpack.c.b16 %v4555, %v4553
        %v4614 = vpack.c.b16 %v4558, %v4556
        %v4615 = vpack.c.b16 %v4559, %v4557
        %v4616 = vpack.c.b16 %v4562, %v4560
        %v4617 = vpack.c.b16 %v4563, %v4561
        %v4618 = vpack.c.b16 %v4566, %v4564
        %v4619 = vpack.c.b16 %v4567, %v4565
        %v4620 = vpack.c.b16 %v4570, %v4568
        %v4621 = vpack.c.b16 %v4571, %v4569
        %v4622 = vpack.c.b16 %v4574, %v4572
        %v4623 = vpack.c.b16 %v4575, %v4573
        %v4624 = vpack.c.b16 %v4578, %v4576
        %v4625 = vpack.c.b16 %v4579, %v4577
        %v4626 = vpack.c.b16 %v4582, %v4580
        %v4627 = vpack.c.b16 %v4583, %v4581
        %v4628 = vpack.c.b16 %v4586, %v4584
        %v4629 = vpack.c.b16 %v4587, %v4585
        %v4630 = vpack.c.b16 %v4590, %v4588
        %v4631 = vpack.c.b16 %v4591, %v4589
        %v4632 = vpack.c.b16 %v4594, %v4592
        %v4633 = vpack.c.b16 %v4595, %v4593
        %v4634 = vpack.c.b16 %v4598, %v4596
        %v4635 = vpack.c.b16 %v4599, %v4597
        %v4636 = vpack.c.b16 %v4602, %v4600
        %v4637 = vpack.c.b16 %v4603, %v4601
        %v4638 = vpack.c.b16 %v4606, %v4604
        %v4639 = vpack.c.b16 %v4607, %v4605
        %4672 = vmatpush.bf16.xpose.msra.mxu0 %v4622
        %4673 = vmatpush.bf16.xpose.msra.mxu0 %v4620
        %4674 = vmatpush.bf16.xpose.msra.mxu0 %v4618
        %4675 = vmatpush.bf16.xpose.msra.mxu0 %v4616
        %4676 = vmatpush.bf16.xpose.msra.mxu0 %v4614
        %4677 = vmatpush.bf16.xpose.msra.mxu0 %v4612
        %4678 = vmatpush.bf16.xpose.msra.mxu0 %v4610
        %4679 = vmatpush.bf16.xpose.msra.mxu0 %v4608
        %4680 = vmatmul.bf16.gmra.mxu0 %v4504
        %v4681 = vpop.f32.mrf.mxu0
        %v4682 = vadd.f32 0.0, %v4681
        %v4683 = vpop.f32.mrf.mxu0
        %v4684 = vadd.f32 0.0, %v4683
        %4685 = vmatmul.bf16.gmra.mxu0 %v4506
        %v4686 = vpop.f32.mrf.mxu0
        %v4687 = vadd.f32 0.0, %v4686
        %v4688 = vpop.f32.mrf.mxu0
        %v4689 = vadd.f32 0.0, %v4688
        %4690 = vdwg.mxu0
        %4691 = vmatpush.bf16.xpose.msra.mxu0 %v4623
        %4692 = vmatpush.bf16.xpose.msra.mxu0 %v4621
        %4693 = vmatpush.bf16.xpose.msra.mxu0 %v4619
        %4694 = vmatpush.bf16.xpose.msra.mxu0 %v4617
        %4695 = vmatpush.bf16.xpose.msra.mxu0 %v4615
        %4696 = vmatpush.bf16.xpose.msra.mxu0 %v4613
        %4697 = vmatpush.bf16.xpose.msra.mxu0 %v4611
        %4698 = vmatpush.bf16.xpose.msra.mxu0 %v4609
        %4699 = vmatmul.bf16.gmra.mxu0 %v4505
        %v4700 = vpop.f32.mrf.mxu0
        %v4701 = vadd.f32 %v4682, %v4700
        %v4702 = vpop.f32.mrf.mxu0
        %v4703 = vadd.f32 %v4684, %v4702
        %4704 = vmatmul.bf16.gmra.mxu0 %v4507
        %v4705 = vpop.f32.mrf.mxu0
        %v4706 = vadd.f32 %v4687, %v4705
        %v4707 = vpop.f32.mrf.mxu0
        %v4708 = vadd.f32 %v4689, %v4707
        %4709 = vdwg.mxu0
        %4710 = vmatpush.bf16.xpose.msra.mxu0 %v4638
        %4711 = vmatpush.bf16.xpose.msra.mxu0 %v4636
        %4712 = vmatpush.bf16.xpose.msra.mxu0 %v4634
        %4713 = vmatpush.bf16.xpose.msra.mxu0 %v4632
        %4714 = vmatpush.bf16.xpose.msra.mxu0 %v4630
        %4715 = vmatpush.bf16.xpose.msra.mxu0 %v4628
        %4716 = vmatpush.bf16.xpose.msra.mxu0 %v4626
        %4717 = vmatpush.bf16.xpose.msra.mxu0 %v4624
        %4718 = vmatmul.bf16.gmra.mxu0 %v4504
        %v4719 = vpop.f32.mrf.mxu0
        %v4720 = vadd.f32 0.0, %v4719
        %v4721 = vpop.f32.mrf.mxu0
        %v4722 = vadd.f32 0.0, %v4721
        %4723 = vmatmul.bf16.gmra.mxu0 %v4506
        %v4724 = vpop.f32.mrf.mxu0
        %v4725 = vadd.f32 0.0, %v4724
        %v4726 = vpop.f32.mrf.mxu0
        %v4727 = vadd.f32 0.0, %v4726
        %4728 = vdwg.mxu0
        %4729 = vmatpush.bf16.xpose.msra.mxu0 %v4639
        %4730 = vmatpush.bf16.xpose.msra.mxu0 %v4637
        %4731 = vmatpush.bf16.xpose.msra.mxu0 %v4635
        %4732 = vmatpush.bf16.xpose.msra.mxu0 %v4633
        %4733 = vmatpush.bf16.xpose.msra.mxu0 %v4631
        %4734 = vmatpush.bf16.xpose.msra.mxu0 %v4629
        %4735 = vmatpush.bf16.xpose.msra.mxu0 %v4627
        %4736 = vmatpush.bf16.xpose.msra.mxu0 %v4625
        %4737 = vmatmul.bf16.gmra.mxu0 %v4505
        %v4738 = vpop.f32.mrf.mxu0
        %v4739 = vadd.f32 %v4720, %v4738
        %v4740 = vpop.f32.mrf.mxu0
        %v4741 = vadd.f32 %v4722, %v4740
        %4742 = vmatmul.bf16.gmra.mxu0 %v4507
        %v4743 = vpop.f32.mrf.mxu0
        %v4744 = vadd.f32 %v4725, %v4743
        %v4745 = vpop.f32.mrf.mxu0
        %v4746 = vadd.f32 %v4727, %v4745
        %4747 = vdwg.mxu0
        %v4752 = vunpack.c.l.b16 %v681
        %v4753 = vunpack.c.h.b16 %v681
        %v4754 = vunpack.c.l.b16 %v682
        %v4755 = vunpack.c.h.b16 %v682
        %v4756 = vunpack.c.l.b16 %v683
        %v4757 = vunpack.c.h.b16 %v683
        %v4758 = vunpack.c.l.b16 %v684
        %v4759 = vunpack.c.h.b16 %v684
        %v4760 = vpack.c.b16 %v4754, %v4752
        %v4761 = vpack.c.b16 %v4755, %v4753
        %v4762 = vpack.c.b16 %v4758, %v4756
        %v4763 = vpack.c.b16 %v4759, %v4757
        %v4800 = vunpack.c.l.b16 %v4172
        %v4801 = vunpack.c.h.b16 %v4172
        %v4802 = vunpack.c.l.b16 %v4173
        %v4803 = vunpack.c.h.b16 %v4173
        %v4804 = vunpack.c.l.b16 %v4174
        %v4805 = vunpack.c.h.b16 %v4174
        %v4806 = vunpack.c.l.b16 %v4175
        %v4807 = vunpack.c.h.b16 %v4175
        %v4808 = vunpack.c.l.b16 %v4176
        %v4809 = vunpack.c.h.b16 %v4176
        %v4810 = vunpack.c.l.b16 %v4177
        %v4811 = vunpack.c.h.b16 %v4177
        %v4812 = vunpack.c.l.b16 %v4178
        %v4813 = vunpack.c.h.b16 %v4178
        %v4814 = vunpack.c.l.b16 %v4179
        %v4815 = vunpack.c.h.b16 %v4179
        %v4816 = vunpack.c.l.b16 %v4180
        %v4817 = vunpack.c.h.b16 %v4180
        %v4818 = vunpack.c.l.b16 %v4181
        %v4819 = vunpack.c.h.b16 %v4181
        %v4820 = vunpack.c.l.b16 %v4182
        %v4821 = vunpack.c.h.b16 %v4182
        %v4822 = vunpack.c.l.b16 %v4183
        %v4823 = vunpack.c.h.b16 %v4183
        %v4824 = vunpack.c.l.b16 %v4184
        %v4825 = vunpack.c.h.b16 %v4184
        %v4826 = vunpack.c.l.b16 %v4185
        %v4827 = vunpack.c.h.b16 %v4185
        %v4828 = vunpack.c.l.b16 %v4186
        %v4829 = vunpack.c.h.b16 %v4186
        %v4830 = vunpack.c.l.b16 %v4187
        %v4831 = vunpack.c.h.b16 %v4187
        %v4832 = vunpack.c.l.b16 %v4188
        %v4833 = vunpack.c.h.b16 %v4188
        %v4834 = vunpack.c.l.b16 %v4189
        %v4835 = vunpack.c.h.b16 %v4189
        %v4836 = vunpack.c.l.b16 %v4190
        %v4837 = vunpack.c.h.b16 %v4190
        %v4838 = vunpack.c.l.b16 %v4191
        %v4839 = vunpack.c.h.b16 %v4191
        %v4840 = vunpack.c.l.b16 %v4192
        %v4841 = vunpack.c.h.b16 %v4192
        %v4842 = vunpack.c.l.b16 %v4193
        %v4843 = vunpack.c.h.b16 %v4193
        %v4844 = vunpack.c.l.b16 %v4194
        %v4845 = vunpack.c.h.b16 %v4194
        %v4846 = vunpack.c.l.b16 %v4195
        %v4847 = vunpack.c.h.b16 %v4195
        %v4848 = vunpack.c.l.b16 %v4196
        %v4849 = vunpack.c.h.b16 %v4196
        %v4850 = vunpack.c.l.b16 %v4197
        %v4851 = vunpack.c.h.b16 %v4197
        %v4852 = vunpack.c.l.b16 %v4198
        %v4853 = vunpack.c.h.b16 %v4198
        %v4854 = vunpack.c.l.b16 %v4199
        %v4855 = vunpack.c.h.b16 %v4199
        %v4856 = vunpack.c.l.b16 %v4200
        %v4857 = vunpack.c.h.b16 %v4200
        %v4858 = vunpack.c.l.b16 %v4201
        %v4859 = vunpack.c.h.b16 %v4201
        %v4860 = vunpack.c.l.b16 %v4202
        %v4861 = vunpack.c.h.b16 %v4202
        %v4862 = vunpack.c.l.b16 %v4203
        %v4863 = vunpack.c.h.b16 %v4203
        %v4864 = vpack.c.b16 %v4802, %v4800
        %v4865 = vpack.c.b16 %v4803, %v4801
        %v4866 = vpack.c.b16 %v4806, %v4804
        %v4867 = vpack.c.b16 %v4807, %v4805
        %v4868 = vpack.c.b16 %v4810, %v4808
        %v4869 = vpack.c.b16 %v4811, %v4809
        %v4870 = vpack.c.b16 %v4814, %v4812
        %v4871 = vpack.c.b16 %v4815, %v4813
        %v4872 = vpack.c.b16 %v4818, %v4816
        %v4873 = vpack.c.b16 %v4819, %v4817
        %v4874 = vpack.c.b16 %v4822, %v4820
        %v4875 = vpack.c.b16 %v4823, %v4821
        %v4876 = vpack.c.b16 %v4826, %v4824
        %v4877 = vpack.c.b16 %v4827, %v4825
        %v4878 = vpack.c.b16 %v4830, %v4828
        %v4879 = vpack.c.b16 %v4831, %v4829
        %v4880 = vpack.c.b16 %v4834, %v4832
        %v4881 = vpack.c.b16 %v4835, %v4833
        %v4882 = vpack.c.b16 %v4838, %v4836
        %v4883 = vpack.c.b16 %v4839, %v4837
        %v4884 = vpack.c.b16 %v4842, %v4840
        %v4885 = vpack.c.b16 %v4843, %v4841
        %v4886 = vpack.c.b16 %v4846, %v4844
        %v4887 = vpack.c.b16 %v4847, %v4845
        %v4888 = vpack.c.b16 %v4850, %v4848
        %v4889 = vpack.c.b16 %v4851, %v4849
        %v4890 = vpack.c.b16 %v4854, %v4852
        %v4891 = vpack.c.b16 %v4855, %v4853
        %v4892 = vpack.c.b16 %v4858, %v4856
        %v4893 = vpack.c.b16 %v4859, %v4857
        %v4894 = vpack.c.b16 %v4862, %v4860
        %v4895 = vpack.c.b16 %v4863, %v4861
        %4928 = vmatpush.bf16.xpose.msra.mxu0 %v4878
        %4929 = vmatpush.bf16.xpose.msra.mxu0 %v4876
        %4930 = vmatpush.bf16.xpose.msra.mxu0 %v4874
        %4931 = vmatpush.bf16.xpose.msra.mxu0 %v4872
        %4932 = vmatpush.bf16.xpose.msra.mxu0 %v4870
        %4933 = vmatpush.bf16.xpose.msra.mxu0 %v4868
        %4934 = vmatpush.bf16.xpose.msra.mxu0 %v4866
        %4935 = vmatpush.bf16.xpose.msra.mxu0 %v4864
        %4936 = vmatmul.bf16.gmra.mxu0 %v4760
        %v4937 = vpop.f32.mrf.mxu0
        %v4938 = vadd.f32 0.0, %v4937
        %v4939 = vpop.f32.mrf.mxu0
        %v4940 = vadd.f32 0.0, %v4939
        %4941 = vmatmul.bf16.gmra.mxu0 %v4762
        %v4942 = vpop.f32.mrf.mxu0
        %v4943 = vadd.f32 0.0, %v4942
        %v4944 = vpop.f32.mrf.mxu0
        %v4945 = vadd.f32 0.0, %v4944
        %4946 = vdwg.mxu0
        %4947 = vmatpush.bf16.xpose.msra.mxu0 %v4879
        %4948 = vmatpush.bf16.xpose.msra.mxu0 %v4877
        %4949 = vmatpush.bf16.xpose.msra.mxu0 %v4875
        %4950 = vmatpush.bf16.xpose.msra.mxu0 %v4873
        %4951 = vmatpush.bf16.xpose.msra.mxu0 %v4871
        %4952 = vmatpush.bf16.xpose.msra.mxu0 %v4869
        %4953 = vmatpush.bf16.xpose.msra.mxu0 %v4867
        %4954 = vmatpush.bf16.xpose.msra.mxu0 %v4865
        %4955 = vmatmul.bf16.gmra.mxu0 %v4761
        %v4956 = vpop.f32.mrf.mxu0
        %v4957 = vadd.f32 %v4938, %v4956
        %v4958 = vpop.f32.mrf.mxu0
        %v4959 = vadd.f32 %v4940, %v4958
        %4960 = vmatmul.bf16.gmra.mxu0 %v4763
        %v4961 = vpop.f32.mrf.mxu0
        %v4962 = vadd.f32 %v4943, %v4961
        %v4963 = vpop.f32.mrf.mxu0
        %v4964 = vadd.f32 %v4945, %v4963
        %4965 = vdwg.mxu0
        %4966 = vmatpush.bf16.xpose.msra.mxu0 %v4894
        %4967 = vmatpush.bf16.xpose.msra.mxu0 %v4892
        %4968 = vmatpush.bf16.xpose.msra.mxu0 %v4890
        %4969 = vmatpush.bf16.xpose.msra.mxu0 %v4888
        %4970 = vmatpush.bf16.xpose.msra.mxu0 %v4886
        %4971 = vmatpush.bf16.xpose.msra.mxu0 %v4884
        %4972 = vmatpush.bf16.xpose.msra.mxu0 %v4882
        %4973 = vmatpush.bf16.xpose.msra.mxu0 %v4880
        %4974 = vmatmul.bf16.gmra.mxu0 %v4760
        %v4975 = vpop.f32.mrf.mxu0
        %v4976 = vadd.f32 0.0, %v4975
        %v4977 = vpop.f32.mrf.mxu0
        %v4978 = vadd.f32 0.0, %v4977
        %4979 = vmatmul.bf16.gmra.mxu0 %v4762
        %v4980 = vpop.f32.mrf.mxu0
        %v4981 = vadd.f32 0.0, %v4980
        %v4982 = vpop.f32.mrf.mxu0
        %v4983 = vadd.f32 0.0, %v4982
        %4984 = vdwg.mxu0
        %4985 = vmatpush.bf16.xpose.msra.mxu0 %v4895
        %4986 = vmatpush.bf16.xpose.msra.mxu0 %v4893
        %4987 = vmatpush.bf16.xpose.msra.mxu0 %v4891
        %4988 = vmatpush.bf16.xpose.msra.mxu0 %v4889
        %4989 = vmatpush.bf16.xpose.msra.mxu0 %v4887
        %4990 = vmatpush.bf16.xpose.msra.mxu0 %v4885
        %4991 = vmatpush.bf16.xpose.msra.mxu0 %v4883
        %4992 = vmatpush.bf16.xpose.msra.mxu0 %v4881
        %4993 = vmatmul.bf16.gmra.mxu0 %v4761
        %v4994 = vpop.f32.mrf.mxu0
        %v4995 = vadd.f32 %v4976, %v4994
        %v4996 = vpop.f32.mrf.mxu0
        %v4997 = vadd.f32 %v4978, %v4996
        %4998 = vmatmul.bf16.gmra.mxu0 %v4763
        %v4999 = vpop.f32.mrf.mxu0
        %v5000 = vadd.f32 %v4981, %v4999
        %v5001 = vpop.f32.mrf.mxu0
        %v5002 = vadd.f32 %v4983, %v5001
        %5003 = vdwg.mxu0
        %v5008 = vunpack.c.l.b16 %v685
        %v5009 = vunpack.c.h.b16 %v685
        %v5010 = vunpack.c.l.b16 %v686
        %v5011 = vunpack.c.h.b16 %v686
        %v5012 = vunpack.c.l.b16 %v687
        %v5013 = vunpack.c.h.b16 %v687
        %v5014 = vunpack.c.l.b16 %v688
        %v5015 = vunpack.c.h.b16 %v688
        %v5016 = vpack.c.b16 %v5010, %v5008
        %v5017 = vpack.c.b16 %v5011, %v5009
        %v5018 = vpack.c.b16 %v5014, %v5012
        %v5019 = vpack.c.b16 %v5015, %v5013
        %v5056 = vunpack.c.l.b16 %v4204
        %v5057 = vunpack.c.h.b16 %v4204
        %v5058 = vunpack.c.l.b16 %v4205
        %v5059 = vunpack.c.h.b16 %v4205
        %v5060 = vunpack.c.l.b16 %v4206
        %v5061 = vunpack.c.h.b16 %v4206
        %v5062 = vunpack.c.l.b16 %v4207
        %v5063 = vunpack.c.h.b16 %v4207
        %v5064 = vunpack.c.l.b16 %v4208
        %v5065 = vunpack.c.h.b16 %v4208
        %v5066 = vunpack.c.l.b16 %v4209
        %v5067 = vunpack.c.h.b16 %v4209
        %v5068 = vunpack.c.l.b16 %v4210
        %v5069 = vunpack.c.h.b16 %v4210
        %v5070 = vunpack.c.l.b16 %v4211
        %v5071 = vunpack.c.h.b16 %v4211
        %v5072 = vunpack.c.l.b16 %v4212
        %v5073 = vunpack.c.h.b16 %v4212
        %v5074 = vunpack.c.l.b16 %v4213
        %v5075 = vunpack.c.h.b16 %v4213
        %v5076 = vunpack.c.l.b16 %v4214
        %v5077 = vunpack.c.h.b16 %v4214
        %v5078 = vunpack.c.l.b16 %v4215
        %v5079 = vunpack.c.h.b16 %v4215
        %v5080 = vunpack.c.l.b16 %v4216
        %v5081 = vunpack.c.h.b16 %v4216
        %v5082 = vunpack.c.l.b16 %v4217
        %v5083 = vunpack.c.h.b16 %v4217
        %v5084 = vunpack.c.l.b16 %v4218
        %v5085 = vunpack.c.h.b16 %v4218
        %v5086 = vunpack.c.l.b16 %v4219
        %v5087 = vunpack.c.h.b16 %v4219
        %v5088 = vunpack.c.l.b16 %v4220
        %v5089 = vunpack.c.h.b16 %v4220
        %v5090 = vunpack.c.l.b16 %v4221
        %v5091 = vunpack.c.h.b16 %v4221
        %v5092 = vunpack.c.l.b16 %v4222
        %v5093 = vunpack.c.h.b16 %v4222
        %v5094 = vunpack.c.l.b16 %v4223
        %v5095 = vunpack.c.h.b16 %v4223
        %v5096 = vunpack.c.l.b16 %v4224
        %v5097 = vunpack.c.h.b16 %v4224
        %v5098 = vunpack.c.l.b16 %v4225
        %v5099 = vunpack.c.h.b16 %v4225
        %v5100 = vunpack.c.l.b16 %v4226
        %v5101 = vunpack.c.h.b16 %v4226
        %v5102 = vunpack.c.l.b16 %v4227
        %v5103 = vunpack.c.h.b16 %v4227
        %v5104 = vunpack.c.l.b16 %v4228
        %v5105 = vunpack.c.h.b16 %v4228
        %v5106 = vunpack.c.l.b16 %v4229
        %v5107 = vunpack.c.h.b16 %v4229
        %v5108 = vunpack.c.l.b16 %v4230
        %v5109 = vunpack.c.h.b16 %v4230
        %v5110 = vunpack.c.l.b16 %v4231
        %v5111 = vunpack.c.h.b16 %v4231
        %v5112 = vunpack.c.l.b16 %v4232
        %v5113 = vunpack.c.h.b16 %v4232
        %v5114 = vunpack.c.l.b16 %v4233
        %v5115 = vunpack.c.h.b16 %v4233
        %v5116 = vunpack.c.l.b16 %v4234
        %v5117 = vunpack.c.h.b16 %v4234
        %v5118 = vunpack.c.l.b16 %v4235
        %v5119 = vunpack.c.h.b16 %v4235
        %v5120 = vpack.c.b16 %v5058, %v5056
        %v5121 = vpack.c.b16 %v5059, %v5057
        %v5122 = vpack.c.b16 %v5062, %v5060
        %v5123 = vpack.c.b16 %v5063, %v5061
        %v5124 = vpack.c.b16 %v5066, %v5064
        %v5125 = vpack.c.b16 %v5067, %v5065
        %v5126 = vpack.c.b16 %v5070, %v5068
        %v5127 = vpack.c.b16 %v5071, %v5069
        %v5128 = vpack.c.b16 %v5074, %v5072
        %v5129 = vpack.c.b16 %v5075, %v5073
        %v5130 = vpack.c.b16 %v5078, %v5076
        %v5131 = vpack.c.b16 %v5079, %v5077
        %v5132 = vpack.c.b16 %v5082, %v5080
        %v5133 = vpack.c.b16 %v5083, %v5081
        %v5134 = vpack.c.b16 %v5086, %v5084
        %v5135 = vpack.c.b16 %v5087, %v5085
        %v5136 = vpack.c.b16 %v5090, %v5088
        %v5137 = vpack.c.b16 %v5091, %v5089
        %v5138 = vpack.c.b16 %v5094, %v5092
        %v5139 = vpack.c.b16 %v5095, %v5093
        %v5140 = vpack.c.b16 %v5098, %v5096
        %v5141 = vpack.c.b16 %v5099, %v5097
        %v5142 = vpack.c.b16 %v5102, %v5100
        %v5143 = vpack.c.b16 %v5103, %v5101
        %v5144 = vpack.c.b16 %v5106, %v5104
        %v5145 = vpack.c.b16 %v5107, %v5105
        %v5146 = vpack.c.b16 %v5110, %v5108
        %v5147 = vpack.c.b16 %v5111, %v5109
        %v5148 = vpack.c.b16 %v5114, %v5112
        %v5149 = vpack.c.b16 %v5115, %v5113
        %v5150 = vpack.c.b16 %v5118, %v5116
        %v5151 = vpack.c.b16 %v5119, %v5117
        %5184 = vmatpush.bf16.xpose.msra.mxu0 %v5134
        %5185 = vmatpush.bf16.xpose.msra.mxu0 %v5132
        %5186 = vmatpush.bf16.xpose.msra.mxu0 %v5130
        %5187 = vmatpush.bf16.xpose.msra.mxu0 %v5128
        %5188 = vmatpush.bf16.xpose.msra.mxu0 %v5126
        %5189 = vmatpush.bf16.xpose.msra.mxu0 %v5124
        %5190 = vmatpush.bf16.xpose.msra.mxu0 %v5122
        %5191 = vmatpush.bf16.xpose.msra.mxu0 %v5120
        %5192 = vmatmul.bf16.gmra.mxu0 %v5016
        %v5193 = vpop.f32.mrf.mxu0
        %v5194 = vadd.f32 0.0, %v5193
        %v5195 = vpop.f32.mrf.mxu0
        %v5196 = vadd.f32 0.0, %v5195
        %5197 = vmatmul.bf16.gmra.mxu0 %v5018
        %v5198 = vpop.f32.mrf.mxu0
        %v5199 = vadd.f32 0.0, %v5198
        %v5200 = vpop.f32.mrf.mxu0
        %v5201 = vadd.f32 0.0, %v5200
        %5202 = vdwg.mxu0
        %5203 = vmatpush.bf16.xpose.msra.mxu0 %v5135
        %5204 = vmatpush.bf16.xpose.msra.mxu0 %v5133
        %5205 = vmatpush.bf16.xpose.msra.mxu0 %v5131
        %5206 = vmatpush.bf16.xpose.msra.mxu0 %v5129
        %5207 = vmatpush.bf16.xpose.msra.mxu0 %v5127
        %5208 = vmatpush.bf16.xpose.msra.mxu0 %v5125
        %5209 = vmatpush.bf16.xpose.msra.mxu0 %v5123
        %5210 = vmatpush.bf16.xpose.msra.mxu0 %v5121
        %5211 = vmatmul.bf16.gmra.mxu0 %v5017
        %v5212 = vpop.f32.mrf.mxu0
        %v5213 = vadd.f32 %v5194, %v5212
        %v5214 = vpop.f32.mrf.mxu0
        %v5215 = vadd.f32 %v5196, %v5214
        %5216 = vmatmul.bf16.gmra.mxu0 %v5019
        %v5217 = vpop.f32.mrf.mxu0
        %v5218 = vadd.f32 %v5199, %v5217
        %v5219 = vpop.f32.mrf.mxu0
        %v5220 = vadd.f32 %v5201, %v5219
        %5221 = vdwg.mxu0
        %5222 = vmatpush.bf16.xpose.msra.mxu0 %v5150
        %5223 = vmatpush.bf16.xpose.msra.mxu0 %v5148
        %5224 = vmatpush.bf16.xpose.msra.mxu0 %v5146
        %5225 = vmatpush.bf16.xpose.msra.mxu0 %v5144
        %5226 = vmatpush.bf16.xpose.msra.mxu0 %v5142
        %5227 = vmatpush.bf16.xpose.msra.mxu0 %v5140
        %5228 = vmatpush.bf16.xpose.msra.mxu0 %v5138
        %5229 = vmatpush.bf16.xpose.msra.mxu0 %v5136
        %5230 = vmatmul.bf16.gmra.mxu0 %v5016
        %v5231 = vpop.f32.mrf.mxu0
        %v5232 = vadd.f32 0.0, %v5231
        %v5233 = vpop.f32.mrf.mxu0
        %v5234 = vadd.f32 0.0, %v5233
        %5235 = vmatmul.bf16.gmra.mxu0 %v5018
        %v5236 = vpop.f32.mrf.mxu0
        %v5237 = vadd.f32 0.0, %v5236
        %v5238 = vpop.f32.mrf.mxu0
        %v5239 = vadd.f32 0.0, %v5238
        %5240 = vdwg.mxu0
        %5241 = vmatpush.bf16.xpose.msra.mxu0 %v5151
        %5242 = vmatpush.bf16.xpose.msra.mxu0 %v5149
        %5243 = vmatpush.bf16.xpose.msra.mxu0 %v5147
        %5244 = vmatpush.bf16.xpose.msra.mxu0 %v5145
        %5245 = vmatpush.bf16.xpose.msra.mxu0 %v5143
        %5246 = vmatpush.bf16.xpose.msra.mxu0 %v5141
        %5247 = vmatpush.bf16.xpose.msra.mxu0 %v5139
        %5248 = vmatpush.bf16.xpose.msra.mxu0 %v5137
        %5249 = vmatmul.bf16.gmra.mxu0 %v5017
        %v5250 = vpop.f32.mrf.mxu0
        %v5251 = vadd.f32 %v5232, %v5250
        %v5252 = vpop.f32.mrf.mxu0
        %v5253 = vadd.f32 %v5234, %v5252
        %5254 = vmatmul.bf16.gmra.mxu0 %v5019
        %v5255 = vpop.f32.mrf.mxu0
        %v5256 = vadd.f32 %v5237, %v5255
        %v5257 = vpop.f32.mrf.mxu0
        %v5258 = vadd.f32 %v5239, %v5257
        %5259 = vdwg.mxu0
        %v5260 = vrcp.pop %v3726
        %v5261 = vrcp.pop %v3729
        %v5262 = vrcp.pop %v3732
        %v5263 = vrcp.pop %v3735
        %v5264 = vrcp.pop %v3738
        %v5265 = vrcp.pop %v3741
        %v5266 = vrcp.pop %v3744
        %v5267 = vrcp.pop %v3747
        %v5268 = vrcp.pop %v3750
        %v5269 = vrcp.pop %v3753
        %v5270 = vrcp.pop %v3756
        %v5271 = vrcp.pop %v3759
        %v5272 = vrcp.pop %v3762
        %v5273 = vrcp.pop %v3765
        %v5274 = vrcp.pop %v3768
        %v5275 = vrcp.pop %v3771
        %v5276 = vrcp.pop %v3774
        %v5277 = vrcp.pop %v3777
        %v5278 = vrcp.pop %v3780
        %v5279 = vrcp.pop %v3783
        %v5280 = vrcp.pop %v3786
        %v5281 = vrcp.pop %v3789
        %v5282 = vrcp.pop %v3792
        %v5283 = vrcp.pop %v3795
        %v5284 = vrcp.pop %v3798
        %v5285 = vrcp.pop %v3801
        %v5286 = vrcp.pop %v3804
        %v5287 = vrcp.pop %v3807
        %v5288 = vrcp.pop %v3810
        %v5289 = vrcp.pop %v3813
        %v5290 = vrcp.pop %v3816
        %v5291 = vrcp.pop %v3819
        %v5292 = vrcp.pop %v3822
        %v5293 = vrcp.pop %v3825
        %v5294 = vrcp.pop %v3828
        %v5295 = vrcp.pop %v3831
        %v5296 = vrcp.pop %v3834
        %v5297 = vrcp.pop %v3837
        %v5298 = vrcp.pop %v3840
        %v5299 = vrcp.pop %v3843
        %v5300 = vrcp.pop %v3846
        %v5301 = vrcp.pop %v3849
        %v5302 = vrcp.pop %v3852
        %v5303 = vrcp.pop %v3855
        %v5304 = vrcp.pop %v3858
        %v5305 = vrcp.pop %v3861
        %v5306 = vrcp.pop %v3864
        %v5307 = vrcp.pop %v3867
        %v5308 = vrcp.pop %v3870
        %v5309 = vrcp.pop %v3873
        %v5310 = vrcp.pop %v3876
        %v5311 = vrcp.pop %v3879
        %v5312 = vrcp.pop %v3882
        %v5313 = vrcp.pop %v3885
        %v5314 = vrcp.pop %v3888
        %v5315 = vrcp.pop %v3891
        %v5316 = vrcp.pop %v3894
        %v5317 = vrcp.pop %v3897
        %v5318 = vrcp.pop %v3900
        %v5319 = vrcp.pop %v3903
        %v5320 = vrcp.pop %v3906
        %v5321 = vrcp.pop %v3909
        %v5322 = vrcp.pop %v3912
        %v5323 = vrcp.pop %v3915
        %v5324 = vrcp.pop %v3918
        %v5325 = vrcp.pop %v3921
        %v5326 = vrcp.pop %v3924
        %v5327 = vrcp.pop %v3927
        %v5328 = vrcp.pop %v3930
        %v5329 = vrcp.pop %v3933
        %v5330 = vrcp.pop %v3936
        %v5331 = vrcp.pop %v3939
        %v5332 = vrcp.pop %v3942
        %v5333 = vrcp.pop %v3945
        %v5334 = vrcp.pop %v3948
        %v5335 = vrcp.pop %v3951
        %v5336 = vrcp.pop %v3954
        %v5337 = vrcp.pop %v3957
        %v5338 = vrcp.pop %v3960
        %v5339 = vrcp.pop %v3963
        %v5340 = vrcp.pop %v3966
        %v5341 = vrcp.pop %v3969
        %v5342 = vrcp.pop %v3972
        %v5343 = vrcp.pop %v3975
        %v5344 = vrcp.pop %v3978
        %v5345 = vrcp.pop %v3981
        %v5346 = vrcp.pop %v3984
        %v5347 = vrcp.pop %v3987
        %v5348 = vrcp.pop %v3990
        %v5349 = vrcp.pop %v3993
        %v5350 = vrcp.pop %v3996
        %v5351 = vrcp.pop %v3999
        %v5352 = vrcp.pop %v4002
        %v5353 = vrcp.pop %v4005
        %v5354 = vrcp.pop %v4008
        %v5355 = vrcp.pop %v4011
        %v5356 = vrcp.pop %v4014
        %v5357 = vrcp.pop %v4017
        %v5358 = vrcp.pop %v4020
        %v5359 = vrcp.pop %v4023
        %v5360 = vrcp.pop %v4026
        %v5361 = vrcp.pop %v4029
        %v5362 = vrcp.pop %v4032
        %v5363 = vrcp.pop %v4035
        %v5364 = vrcp.pop %v4038
        %v5365 = vrcp.pop %v4041
        %v5366 = vrcp.pop %v4044
        %v5367 = vrcp.pop %v4047
        %v5368 = vrcp.pop %v4050
        %v5369 = vrcp.pop %v4053
        %v5370 = vrcp.pop %v4056
        %v5371 = vrcp.pop %v4059
        %v5372 = vrcp.pop %v4062
        %v5373 = vrcp.pop %v4065
        %v5374 = vrcp.pop %v4068
        %v5375 = vrcp.pop %v4071
        %v5376 = vrcp.pop %v4074
        %v5377 = vrcp.pop %v4077
        %v5378 = vrcp.pop %v4080
        %v5379 = vrcp.pop %v4083
        %v5380 = vrcp.pop %v4086
        %v5381 = vrcp.pop %v4089
        %v5382 = vrcp.pop %v4092
        %v5383 = vrcp.pop %v4095
        %v5384 = vrcp.pop %v4098
        %v5385 = vrcp.pop %v4101
        %v5386 = vrcp.pop %v4104
        %v5387 = vrcp.pop %v4107
        %v5516 = vlaneseq
        %v5517 = vand.u32 %v5516, 127
        %v5518 = vperm.slane %v5260, %v5517
        %v5519 = vadd.s32 %v5517, 4294967288
        %v5520 = vperm.slane %v5261, %v5519
        %vm5521 = vcmask 130112
        %v5522 = vsel %vm5521, %v5520, %v5518
        %v5523 = vadd.s32 %v5517, 4294967280
        %v5524 = vperm.slane %v5262, %v5523
        %vm5525 = vcmask 195712
        %v5526 = vsel %vm5525, %v5524, %v5522
        %v5527 = vadd.s32 %v5517, 4294967272
        %v5528 = vperm.slane %v5263, %v5527
        %vm5529 = vcmask 261312
        %v5530 = vsel %vm5529, %v5528, %v5526
        %v5531 = vadd.s32 %v5517, 4294967264
        %v5532 = vperm.slane %v5264, %v5531
        %vm5533 = vcmask 326912
        %v5534 = vsel %vm5533, %v5532, %v5530
        %v5535 = vadd.s32 %v5517, 4294967256
        %v5536 = vperm.slane %v5265, %v5535
        %vm5537 = vcmask 392512
        %v5538 = vsel %vm5537, %v5536, %v5534
        %v5539 = vadd.s32 %v5517, 4294967248
        %v5540 = vperm.slane %v5266, %v5539
        %vm5541 = vcmask 458112
        %v5542 = vsel %vm5541, %v5540, %v5538
        %v5543 = vadd.s32 %v5517, 4294967240
        %v5544 = vperm.slane %v5267, %v5543
        %vm5545 = vcmask 523712
        %v5546 = vsel %vm5545, %v5544, %v5542
        %v5547 = vadd.s32 %v5517, 4294967232
        %v5548 = vperm.slane %v5268, %v5547
        %vm5549 = vcmask 589312
        %v5550 = vsel %vm5549, %v5548, %v5546
        %v5551 = vadd.s32 %v5517, 4294967224
        %v5552 = vperm.slane %v5269, %v5551
        %vm5553 = vcmask 654912
        %v5554 = vsel %vm5553, %v5552, %v5550
        %v5555 = vadd.s32 %v5517, 4294967216
        %v5556 = vperm.slane %v5270, %v5555
        %vm5557 = vcmask 720512
        %v5558 = vsel %vm5557, %v5556, %v5554
        %v5559 = vadd.s32 %v5517, 4294967208
        %v5560 = vperm.slane %v5271, %v5559
        %vm5561 = vcmask 786112
        %v5562 = vsel %vm5561, %v5560, %v5558
        %v5563 = vadd.s32 %v5517, 4294967200
        %v5564 = vperm.slane %v5272, %v5563
        %vm5565 = vcmask 851712
        %v5566 = vsel %vm5565, %v5564, %v5562
        %v5567 = vadd.s32 %v5517, 4294967192
        %v5568 = vperm.slane %v5273, %v5567
        %vm5569 = vcmask 917312
        %v5570 = vsel %vm5569, %v5568, %v5566
        %v5571 = vadd.s32 %v5517, 4294967184
        %v5572 = vperm.slane %v5274, %v5571
        %vm5573 = vcmask 982912
        %v5574 = vsel %vm5573, %v5572, %v5570
        %v5575 = vadd.s32 %v5517, 4294967176
        %v5576 = vperm.slane %v5275, %v5575
        %vm5577 = vcmask 1048512
        %v5578 = vsel %vm5577, %v5576, %v5574
        %v5579 = vperm.slane %v5276, %v5517
        %v5580 = vperm.slane %v5277, %v5519
        %v5581 = vsel %vm5521, %v5580, %v5579
        %v5582 = vperm.slane %v5278, %v5523
        %v5583 = vsel %vm5525, %v5582, %v5581
        %v5584 = vperm.slane %v5279, %v5527
        %v5585 = vsel %vm5529, %v5584, %v5583
        %v5586 = vperm.slane %v5280, %v5531
        %v5587 = vsel %vm5533, %v5586, %v5585
        %v5588 = vperm.slane %v5281, %v5535
        %v5589 = vsel %vm5537, %v5588, %v5587
        %v5590 = vperm.slane %v5282, %v5539
        %v5591 = vsel %vm5541, %v5590, %v5589
        %v5592 = vperm.slane %v5283, %v5543
        %v5593 = vsel %vm5545, %v5592, %v5591
        %v5594 = vperm.slane %v5284, %v5547
        %v5595 = vsel %vm5549, %v5594, %v5593
        %v5596 = vperm.slane %v5285, %v5551
        %v5597 = vsel %vm5553, %v5596, %v5595
        %v5598 = vperm.slane %v5286, %v5555
        %v5599 = vsel %vm5557, %v5598, %v5597
        %v5600 = vperm.slane %v5287, %v5559
        %v5601 = vsel %vm5561, %v5600, %v5599
        %v5602 = vperm.slane %v5288, %v5563
        %v5603 = vsel %vm5565, %v5602, %v5601
        %v5604 = vperm.slane %v5289, %v5567
        %v5605 = vsel %vm5569, %v5604, %v5603
        %v5606 = vperm.slane %v5290, %v5571
        %v5607 = vsel %vm5573, %v5606, %v5605
        %v5608 = vperm.slane %v5291, %v5575
        %v5609 = vsel %vm5577, %v5608, %v5607
        %v5610 = vperm.slane %v5292, %v5517
        %v5611 = vperm.slane %v5293, %v5519
        %v5612 = vsel %vm5521, %v5611, %v5610
        %v5613 = vperm.slane %v5294, %v5523
        %v5614 = vsel %vm5525, %v5613, %v5612
        %v5615 = vperm.slane %v5295, %v5527
        %v5616 = vsel %vm5529, %v5615, %v5614
        %v5617 = vperm.slane %v5296, %v5531
        %v5618 = vsel %vm5533, %v5617, %v5616
        %v5619 = vperm.slane %v5297, %v5535
        %v5620 = vsel %vm5537, %v5619, %v5618
        %v5621 = vperm.slane %v5298, %v5539
        %v5622 = vsel %vm5541, %v5621, %v5620
        %v5623 = vperm.slane %v5299, %v5543
        %v5624 = vsel %vm5545, %v5623, %v5622
        %v5625 = vperm.slane %v5300, %v5547
        %v5626 = vsel %vm5549, %v5625, %v5624
        %v5627 = vperm.slane %v5301, %v5551
        %v5628 = vsel %vm5553, %v5627, %v5626
        %v5629 = vperm.slane %v5302, %v5555
        %v5630 = vsel %vm5557, %v5629, %v5628
        %v5631 = vperm.slane %v5303, %v5559
        %v5632 = vsel %vm5561, %v5631, %v5630
        %v5633 = vperm.slane %v5304, %v5563
        %v5634 = vsel %vm5565, %v5633, %v5632
        %v5635 = vperm.slane %v5305, %v5567
        %v5636 = vsel %vm5569, %v5635, %v5634
        %v5637 = vperm.slane %v5306, %v5571
        %v5638 = vsel %vm5573, %v5637, %v5636
        %v5639 = vperm.slane %v5307, %v5575
        %v5640 = vsel %vm5577, %v5639, %v5638
        %v5641 = vperm.slane %v5308, %v5517
        %v5642 = vperm.slane %v5309, %v5519
        %v5643 = vsel %vm5521, %v5642, %v5641
        %v5644 = vperm.slane %v5310, %v5523
        %v5645 = vsel %vm5525, %v5644, %v5643
        %v5646 = vperm.slane %v5311, %v5527
        %v5647 = vsel %vm5529, %v5646, %v5645
        %v5648 = vperm.slane %v5312, %v5531
        %v5649 = vsel %vm5533, %v5648, %v5647
        %v5650 = vperm.slane %v5313, %v5535
        %v5651 = vsel %vm5537, %v5650, %v5649
        %v5652 = vperm.slane %v5314, %v5539
        %v5653 = vsel %vm5541, %v5652, %v5651
        %v5654 = vperm.slane %v5315, %v5543
        %v5655 = vsel %vm5545, %v5654, %v5653
        %v5656 = vperm.slane %v5316, %v5547
        %v5657 = vsel %vm5549, %v5656, %v5655
        %v5658 = vperm.slane %v5317, %v5551
        %v5659 = vsel %vm5553, %v5658, %v5657
        %v5660 = vperm.slane %v5318, %v5555
        %v5661 = vsel %vm5557, %v5660, %v5659
        %v5662 = vperm.slane %v5319, %v5559
        %v5663 = vsel %vm5561, %v5662, %v5661
        %v5664 = vperm.slane %v5320, %v5563
        %v5665 = vsel %vm5565, %v5664, %v5663
        %v5666 = vperm.slane %v5321, %v5567
        %v5667 = vsel %vm5569, %v5666, %v5665
        %v5668 = vperm.slane %v5322, %v5571
        %v5669 = vsel %vm5573, %v5668, %v5667
        %v5670 = vperm.slane %v5323, %v5575
        %v5671 = vsel %vm5577, %v5670, %v5669
        %v5672 = vperm.slane %v5324, %v5517
        %v5673 = vperm.slane %v5325, %v5519
        %v5674 = vsel %vm5521, %v5673, %v5672
        %v5675 = vperm.slane %v5326, %v5523
        %v5676 = vsel %vm5525, %v5675, %v5674
        %v5677 = vperm.slane %v5327, %v5527
        %v5678 = vsel %vm5529, %v5677, %v5676
        %v5679 = vperm.slane %v5328, %v5531
        %v5680 = vsel %vm5533, %v5679, %v5678
        %v5681 = vperm.slane %v5329, %v5535
        %v5682 = vsel %vm5537, %v5681, %v5680
        %v5683 = vperm.slane %v5330, %v5539
        %v5684 = vsel %vm5541, %v5683, %v5682
        %v5685 = vperm.slane %v5331, %v5543
        %v5686 = vsel %vm5545, %v5685, %v5684
        %v5687 = vperm.slane %v5332, %v5547
        %v5688 = vsel %vm5549, %v5687, %v5686
        %v5689 = vperm.slane %v5333, %v5551
        %v5690 = vsel %vm5553, %v5689, %v5688
        %v5691 = vperm.slane %v5334, %v5555
        %v5692 = vsel %vm5557, %v5691, %v5690
        %v5693 = vperm.slane %v5335, %v5559
        %v5694 = vsel %vm5561, %v5693, %v5692
        %v5695 = vperm.slane %v5336, %v5563
        %v5696 = vsel %vm5565, %v5695, %v5694
        %v5697 = vperm.slane %v5337, %v5567
        %v5698 = vsel %vm5569, %v5697, %v5696
        %v5699 = vperm.slane %v5338, %v5571
        %v5700 = vsel %vm5573, %v5699, %v5698
        %v5701 = vperm.slane %v5339, %v5575
        %v5702 = vsel %vm5577, %v5701, %v5700
        %v5703 = vperm.slane %v5340, %v5517
        %v5704 = vperm.slane %v5341, %v5519
        %v5705 = vsel %vm5521, %v5704, %v5703
        %v5706 = vperm.slane %v5342, %v5523
        %v5707 = vsel %vm5525, %v5706, %v5705
        %v5708 = vperm.slane %v5343, %v5527
        %v5709 = vsel %vm5529, %v5708, %v5707
        %v5710 = vperm.slane %v5344, %v5531
        %v5711 = vsel %vm5533, %v5710, %v5709
        %v5712 = vperm.slane %v5345, %v5535
        %v5713 = vsel %vm5537, %v5712, %v5711
        %v5714 = vperm.slane %v5346, %v5539
        %v5715 = vsel %vm5541, %v5714, %v5713
        %v5716 = vperm.slane %v5347, %v5543
        %v5717 = vsel %vm5545, %v5716, %v5715
        %v5718 = vperm.slane %v5348, %v5547
        %v5719 = vsel %vm5549, %v5718, %v5717
        %v5720 = vperm.slane %v5349, %v5551
        %v5721 = vsel %vm5553, %v5720, %v5719
        %v5722 = vperm.slane %v5350, %v5555
        %v5723 = vsel %vm5557, %v5722, %v5721
        %v5724 = vperm.slane %v5351, %v5559
        %v5725 = vsel %vm5561, %v5724, %v5723
        %v5726 = vperm.slane %v5352, %v5563
        %v5727 = vsel %vm5565, %v5726, %v5725
        %v5728 = vperm.slane %v5353, %v5567
        %v5729 = vsel %vm5569, %v5728, %v5727
        %v5730 = vperm.slane %v5354, %v5571
        %v5731 = vsel %vm5573, %v5730, %v5729
        %v5732 = vperm.slane %v5355, %v5575
        %v5733 = vsel %vm5577, %v5732, %v5731
        %v5734 = vperm.slane %v5356, %v5517
        %v5735 = vperm.slane %v5357, %v5519
        %v5736 = vsel %vm5521, %v5735, %v5734
        %v5737 = vperm.slane %v5358, %v5523
        %v5738 = vsel %vm5525, %v5737, %v5736
        %v5739 = vperm.slane %v5359, %v5527
        %v5740 = vsel %vm5529, %v5739, %v5738
        %v5741 = vperm.slane %v5360, %v5531
        %v5742 = vsel %vm5533, %v5741, %v5740
        %v5743 = vperm.slane %v5361, %v5535
        %v5744 = vsel %vm5537, %v5743, %v5742
        %v5745 = vperm.slane %v5362, %v5539
        %v5746 = vsel %vm5541, %v5745, %v5744
        %v5747 = vperm.slane %v5363, %v5543
        %v5748 = vsel %vm5545, %v5747, %v5746
        %v5749 = vperm.slane %v5364, %v5547
        %v5750 = vsel %vm5549, %v5749, %v5748
        %v5751 = vperm.slane %v5365, %v5551
        %v5752 = vsel %vm5553, %v5751, %v5750
        %v5753 = vperm.slane %v5366, %v5555
        %v5754 = vsel %vm5557, %v5753, %v5752
        %v5755 = vperm.slane %v5367, %v5559
        %v5756 = vsel %vm5561, %v5755, %v5754
        %v5757 = vperm.slane %v5368, %v5563
        %v5758 = vsel %vm5565, %v5757, %v5756
        %v5759 = vperm.slane %v5369, %v5567
        %v5760 = vsel %vm5569, %v5759, %v5758
        %v5761 = vperm.slane %v5370, %v5571
        %v5762 = vsel %vm5573, %v5761, %v5760
        %v5763 = vperm.slane %v5371, %v5575
        %v5764 = vsel %vm5577, %v5763, %v5762
        %v5765 = vperm.slane %v5372, %v5517
        %v5766 = vperm.slane %v5373, %v5519
        %v5767 = vsel %vm5521, %v5766, %v5765
        %v5768 = vperm.slane %v5374, %v5523
        %v5769 = vsel %vm5525, %v5768, %v5767
        %v5770 = vperm.slane %v5375, %v5527
        %v5771 = vsel %vm5529, %v5770, %v5769
        %v5772 = vperm.slane %v5376, %v5531
        %v5773 = vsel %vm5533, %v5772, %v5771
        %v5774 = vperm.slane %v5377, %v5535
        %v5775 = vsel %vm5537, %v5774, %v5773
        %v5776 = vperm.slane %v5378, %v5539
        %v5777 = vsel %vm5541, %v5776, %v5775
        %v5778 = vperm.slane %v5379, %v5543
        %v5779 = vsel %vm5545, %v5778, %v5777
        %v5780 = vperm.slane %v5380, %v5547
        %v5781 = vsel %vm5549, %v5780, %v5779
        %v5782 = vperm.slane %v5381, %v5551
        %v5783 = vsel %vm5553, %v5782, %v5781
        %v5784 = vperm.slane %v5382, %v5555
        %v5785 = vsel %vm5557, %v5784, %v5783
        %v5786 = vperm.slane %v5383, %v5559
        %v5787 = vsel %vm5561, %v5786, %v5785
        %v5788 = vperm.slane %v5384, %v5563
        %v5789 = vsel %vm5565, %v5788, %v5787
        %v5790 = vperm.slane %v5385, %v5567
        %v5791 = vsel %vm5569, %v5790, %v5789
        %v5792 = vperm.slane %v5386, %v5571
        %v5793 = vsel %vm5573, %v5792, %v5791
        %v5794 = vperm.slane %v5387, %v5575
        %v5795 = vsel %vm5577, %v5794, %v5793
        %vm5796 = vcmask 1042434
        %v5797 = vsel %vm5796, %v5578, %v5578
        %vm5798 = vcmask 1043459
        %v5799 = vsel %vm5798, %v5578, %v5797
        %vm5800 = vcmask 1044484
        %v5801 = vsel %vm5800, %v5578, %v5799
        %vm5802 = vcmask 1045509
        %v5803 = vsel %vm5802, %v5578, %v5801
        %vm5804 = vcmask 1046534
        %v5805 = vsel %vm5804, %v5578, %v5803
        %vm5806 = vcmask 1047559
        %v5807 = vsel %vm5806, %v5578, %v5805
        %v5808 = vsel %vm5796, %v5609, %v5609
        %v5809 = vsel %vm5798, %v5609, %v5808
        %v5810 = vsel %vm5800, %v5609, %v5809
        %v5811 = vsel %vm5802, %v5609, %v5810
        %v5812 = vsel %vm5804, %v5609, %v5811
        %v5813 = vsel %vm5806, %v5609, %v5812
        %v5814 = vsel %vm5796, %v5640, %v5640
        %v5815 = vsel %vm5798, %v5640, %v5814
        %v5816 = vsel %vm5800, %v5640, %v5815
        %v5817 = vsel %vm5802, %v5640, %v5816
        %v5818 = vsel %vm5804, %v5640, %v5817
        %v5819 = vsel %vm5806, %v5640, %v5818
        %v5820 = vsel %vm5796, %v5671, %v5671
        %v5821 = vsel %vm5798, %v5671, %v5820
        %v5822 = vsel %vm5800, %v5671, %v5821
        %v5823 = vsel %vm5802, %v5671, %v5822
        %v5824 = vsel %vm5804, %v5671, %v5823
        %v5825 = vsel %vm5806, %v5671, %v5824
        %v5826 = vsel %vm5796, %v5702, %v5702
        %v5827 = vsel %vm5798, %v5702, %v5826
        %v5828 = vsel %vm5800, %v5702, %v5827
        %v5829 = vsel %vm5802, %v5702, %v5828
        %v5830 = vsel %vm5804, %v5702, %v5829
        %v5831 = vsel %vm5806, %v5702, %v5830
        %v5832 = vsel %vm5796, %v5733, %v5733
        %v5833 = vsel %vm5798, %v5733, %v5832
        %v5834 = vsel %vm5800, %v5733, %v5833
        %v5835 = vsel %vm5802, %v5733, %v5834
        %v5836 = vsel %vm5804, %v5733, %v5835
        %v5837 = vsel %vm5806, %v5733, %v5836
        %v5838 = vsel %vm5796, %v5764, %v5764
        %v5839 = vsel %vm5798, %v5764, %v5838
        %v5840 = vsel %vm5800, %v5764, %v5839
        %v5841 = vsel %vm5802, %v5764, %v5840
        %v5842 = vsel %vm5804, %v5764, %v5841
        %v5843 = vsel %vm5806, %v5764, %v5842
        %v5844 = vsel %vm5796, %v5795, %v5795
        %v5845 = vsel %vm5798, %v5795, %v5844
        %v5846 = vsel %vm5800, %v5795, %v5845
        %v5847 = vsel %vm5802, %v5795, %v5846
        %v5848 = vsel %vm5804, %v5795, %v5847
        %v5849 = vsel %vm5806, %v5795, %v5848
        %v5858 = vmul.f32 %v4445, %v5807
        %v5859 = vmul.f32 %v4483, %v5813
        %v5860 = vmul.f32 %v4447, %v5807
        %v5861 = vmul.f32 %v4485, %v5813
        %v5862 = vmul.f32 %v4450, %v5807
        %v5863 = vmul.f32 %v4488, %v5813
        %v5864 = vmul.f32 %v4452, %v5807
        %v5865 = vmul.f32 %v4490, %v5813
        %v5866 = vmul.f32 %v4701, %v5819
        %v5867 = vmul.f32 %v4739, %v5825
        %v5868 = vmul.f32 %v4703, %v5819
        %v5869 = vmul.f32 %v4741, %v5825
        %v5870 = vmul.f32 %v4706, %v5819
        %v5871 = vmul.f32 %v4744, %v5825
        %v5872 = vmul.f32 %v4708, %v5819
        %v5873 = vmul.f32 %v4746, %v5825
        %v5874 = vmul.f32 %v4957, %v5831
        %v5875 = vmul.f32 %v4995, %v5837
        %v5876 = vmul.f32 %v4959, %v5831
        %v5877 = vmul.f32 %v4997, %v5837
        %v5878 = vmul.f32 %v4962, %v5831
        %v5879 = vmul.f32 %v5000, %v5837
        %v5880 = vmul.f32 %v4964, %v5831
        %v5881 = vmul.f32 %v5002, %v5837
        %v5882 = vmul.f32 %v5213, %v5843
        %v5883 = vmul.f32 %v5251, %v5849
        %v5884 = vmul.f32 %v5215, %v5843
        %v5885 = vmul.f32 %v5253, %v5849
        %v5886 = vmul.f32 %v5218, %v5843
        %v5887 = vmul.f32 %v5256, %v5849
        %v5888 = vmul.f32 %v5220, %v5843
        %v5889 = vmul.f32 %v5258, %v5849
        %v5890 = vpack.c.bf16 %v5860, %v5858
        %v5891 = vpack.c.bf16 %v5861, %v5859
        %v5892 = vpack.c.bf16 %v5864, %v5862
        %v5893 = vpack.c.bf16 %v5865, %v5863
        %v5894 = vpack.c.bf16 %v5868, %v5866
        %v5895 = vpack.c.bf16 %v5869, %v5867
        %v5896 = vpack.c.bf16 %v5872, %v5870
        %v5897 = vpack.c.bf16 %v5873, %v5871
        %v5898 = vpack.c.bf16 %v5876, %v5874
        %v5899 = vpack.c.bf16 %v5877, %v5875
        %v5900 = vpack.c.bf16 %v5880, %v5878
        %v5901 = vpack.c.bf16 %v5881, %v5879
        %v5902 = vpack.c.bf16 %v5884, %v5882
        %v5903 = vpack.c.bf16 %v5885, %v5883
        %v5904 = vpack.c.bf16 %v5888, %v5886
        %v5905 = vpack.c.bf16 %v5889, %v5887
        %v5906 = vld [vmem:[%s3] sm:$0x3]
        %v5907 = vld [vmem:[%s4] sm:$0xf]
        %5909 = vset.pattern.permute.xlu0 0
        %5910 = vperm.xlu0 %5909, %v5907
        %v5911 = vpop.permute.xlu0 %5910
        %5913 = vmatpush.bf16.msra.mxu0 %v5904
        %5914 = vmatpush.bf16.msra.mxu0 %v5902
        %5915 = vmatpush.bf16.msra.mxu0 %v5900
        %5916 = vmatpush.bf16.msra.mxu0 %v5898
        %5917 = vmatpush.bf16.msra.mxu0 %v5896
        %5918 = vmatpush.bf16.msra.mxu0 %v5894
        %5919 = vmatpush.bf16.msra.mxu0 %v5892
        %5920 = vmatpush.bf16.msra.mxu0 %v5890
        %5921 = vmatmul.bf16.gmra.mxu0 %v5906
        %v5922 = vpop.f32.mrf.mxu0
        %v5923 = vadd.f32 %v5911, %v5922
        %v5924 = vpop.f32.mrf.mxu0
        %5925 = vdwg.mxu0
        %5926 = vmatpush.bf16.msra.mxu0 %v5905
        %5927 = vmatpush.bf16.msra.mxu0 %v5903
        %5928 = vmatpush.bf16.msra.mxu0 %v5901
        %5929 = vmatpush.bf16.msra.mxu0 %v5899
        %5930 = vmatpush.bf16.msra.mxu0 %v5897
        %5931 = vmatpush.bf16.msra.mxu0 %v5895
        %5932 = vmatpush.bf16.msra.mxu0 %v5893
        %5933 = vmatpush.bf16.msra.mxu0 %v5891
        %5934 = vmatmul.bf16.gmra.mxu0 %v5906
        %v5935 = vpop.f32.mrf.mxu0
        %v5936 = vadd.f32 %v5911, %v5935
        %v5937 = vpop.f32.mrf.mxu0
        %5938 = vdwg.mxu0
        %v5941 = vrot.slane %v5936, 4
        %vm5942 = vcmask 1043456
        %v5943 = vsel %vm5942, %v5923, %v5941
        %5945 = vst [vmem:[%s231] sm:$0xff] %v5943
        %s5946 = sand.u32 %s151, 1
        %s5947 = scalar_lea.sflag [#allocation4], %s5946
        %s5948 = sand.u32 %s151, 1
        %s5949 = smul.addr %s5948, 8
        %s5950 = scalar_lea.vmem [#allocation3], %s5949
        // Predicated region
        $region45: #{tpu_custom_call.1} parent=39 // pred_check
          %p5951 = pneg %p161
        $region46: #{tpu_custom_call.1} parent=39 // pred_check_branch
          %5953 = sbr.rel (%p5951) target = $region48
        $region47: #{tpu_custom_call.1} parent=39 // pred_region
          %s5954 = smul.u32 2, %s24
          %5956 = vsyncadd %s5947, 0
          %s5957 = smul.addr %s23, 2
          %s5958 = sadd.s32 %s5954, %s5957
          %s5959 = smul.addr %s5958, 4
          %s5960 = scalar_lea.hbm %s5, %s5959
          %s5962 = sshll.u32 %s5950, 4
          %s5963 = int_to_ptr.vmem [resolvable:$true] %s5962
          %s5964 = sshll.u32 %s5960, 4
          %s5965 = int_to_ptr.hbm [resolvable:$true] %s5964
          %5967 = dma.vmem_to_hbm [thread:$0]  %s5963, 128, %s5965, %s5947
        $region48: #{tpu_custom_call.1} parent=39 // pred_fallthru
          _
      $region40: #{tpu_custom_call.1} parent=5 // pred_fallthru
        _
      %p5968 = scmp.le.s32.totalorder 2, %s14
      // Predicated region
      $region49: #{tpu_custom_call.1} parent=5 // pred_check
        %p5969 = pneg %p5968
      $region50: #{tpu_custom_call.1} parent=5 // pred_check_branch
        %5971 = sbr.rel (%p5969) target = $region52
      $region51: #{tpu_custom_call.1} parent=5 // pred_region
        %s5972 = ssub.s32 %s14, 2
        // Predicated region
        $region53: #{tpu_custom_call.1} parent=51 // pred_check
          %p5973 = pneg %p167
        $region54: #{tpu_custom_call.1} parent=51 // pred_check_branch
          %5975 = sbr.rel (%p5973) target = $region56
        $region55: #{tpu_custom_call.1} parent=51 // pred_region
          %s5976 = sand.u32 %s152, 1
          %s5977 = scalar_lea.sflag [#allocation4], %s5976
          %s5978 = sand.u32 %s152, 1
          %s5979 = smul.addr %s5978, 8
          %s5980 = scalar_lea.vmem [#allocation3], %s5979
          %5982 = dma.done %s5977, 128
        $region56: #{tpu_custom_call.1} parent=51 // pred_fallthru
          _
      $region52: #{tpu_custom_call.1} parent=5 // pred_fallthru
        _
    $region6: #{tpu_custom_call.1} parent=1 // loop_footer
      %s18 = sadd.s32 1, %s14
    $region7: #{tpu_custom_call.1} parent=1 // loop_footer_branch
      %13 = sbr.rel target = $region3
    $region8: #{tpu_custom_call.1} parent=1 // loop_exit
      _
    %5983 = vsyncpa [#allocation4], 1
    %s5984 = scalar_lea.sflag [#allocation4], 1
    %5985 = vsyncpa %s5984, 1

</llo_original>
